<compile_context>
chip_gen: v5e
topology: v5e:2x2
jax: 0.10.0
libtpu: 0.0.40
codegen_flags: <defaults>
</compile_context>

<pallas_src>
import functools

import jax
import jax.numpy as jnp
from jax.experimental import pallas as pl
from jax.experimental.pallas import tpu as pltpu

ATT = 49          # attention projection width fixed by the module (Linear(hidden_dim, 49))
ATT_PAD = 64      # ATT zero-padded to a clean lane width


def _round_up(n, m):
    return ((n + m - 1) // m) * m


def adaatten_kernel(slab_ref, v_ref, w1_ref, w2_ref, wab_ref, out_ref, *,
                    H, AP, NW, NW_PAD, approx_recip):
    bt, T, SW = slab_ref.shape
    K = v_ref.shape[1]
    OUTW = out_ref.shape[2]
    cdt = slab_ref.dtype                         # matmul input dtype (f32 or bf16)

    # Fold the batch tile into the matmul M dimension.
    slab2 = slab_ref[...].reshape(bt * T, SW)    # [x | h_{t-1} | hid | mem | 0pad]

    # ---- ONE fused MXU dot for every slab-driven projection:
    #      cols = [h2att(h_t) | h2att2(h_t) | h2score(h_t) pad | x2s(x)+h2s(h_{t-1})]
    proj = jnp.dot(slab2, w1_ref[...], preferred_element_type=jnp.float32)
    ph = proj[:, :AP]                                        # h2att(h_t)      (bt*T, AP)
    ph2 = proj[:, AP:2 * AP]                                 # h2att2(h_t)     (bt*T, AP)
    psc = proj[:, 2 * AP:2 * AP + NW]                        # h2score(h_t)    (bt*T, NW)
    gate_pre = proj[:, 2 * AP + NW_PAD:2 * AP + NW_PAD + H]  # sentinel gate   (bt*T, H)

    # ---- Sentinel: s = sigmoid(x2s(x) + h2s(h_{t-1})) * tanh(mem)   (dropout = identity)
    mem2 = slab2[:, 3 * H:4 * H].astype(jnp.float32)
    s2 = jax.nn.sigmoid(gate_pre) * jnp.tanh(mem2)           # (bt*T, H) f32

    # ---- secondary projections: v2att / s2att / mlp weights live in one fused slab
    w2 = w2_ref[...]
    pv = jnp.dot(v_ref[...].reshape(bt * K, H), w2[:, :AP],
                 preferred_element_type=jnp.float32)          # (bt*K, AP)
    ps = jnp.dot(s2.astype(cdt), w2[:, AP:2 * AP],
                 preferred_element_type=jnp.float32)          # (bt*T, AP)

    wa = wab_ref[:, :AP].astype(jnp.float32)                  # (1, AP)  zero-padded tail
    bias = wab_ref[:, AP:AP + NW].astype(jnp.float32)         # (1, NW)  mlp_b + h2score_b

    pv3 = pv.reshape(bt, K, AP)
    ph3 = ph.reshape(bt, T, AP)
    content_v = ph3[:, :, None, :] + pv3[:, None, :, :]       # (bt, T, K, AP)
    # Padded AP columns are exactly zero in the weights AND in wa, so they contribute 0.
    zv = jnp.sum(jnp.tanh(content_v) * wa, axis=-1)           # (bt, T, K)
    zs = jnp.sum(jnp.tanh(ps + ph2) * wa, axis=-1,
                 keepdims=True).reshape(bt, T, 1)              # (bt, T, 1)

    # ---- analytic joint softmax over the (K visual + 1 sentinel) logits
    m = jnp.maximum(jnp.max(zv, axis=-1, keepdims=True), zs)
    ev = jnp.exp(zv - m)                                       # (bt, T, K)
    es = jnp.exp(zs - m)                                       # (bt, T, 1)
    denom = jnp.sum(ev, axis=-1, keepdims=True) + es
    if approx_recip:
        inv = pl.reciprocal(denom, approx=True)                # EUP approx path
    else:
        inv = 1.0 / denom
    alpha = ev * inv                                           # (bt, T, K)
    beta = es * inv                                            # (bt, T, 1)

    # ---- c_hat = beta * s + alpha @ V
    s3 = s2.reshape(bt, T, H)
    if K <= 16:
        # small contraction: unrolled VPU multiply-accumulate beats bt micro-matmuls
        v_f32 = v_ref[...].astype(jnp.float32)
        c_att = alpha[:, :, 0:1] * v_f32[:, 0:1, :]
        for k in range(1, K):
            c_att = c_att + alpha[:, :, k:k + 1] * v_f32[:, k:k + 1, :]
    else:
        c_att = jnp.einsum('btk,bkh->bth', alpha.astype(cdt), v_ref[...],
                           preferred_element_type=jnp.float32)
    c_hat = beta * s3 + c_att                                  # (bt, T, H) f32

    # ---- scores = mlp(c_hat) + h2score(hid) + fused bias
    scores2 = (jnp.dot(c_hat.reshape(bt * T, H).astype(cdt), w2[:, 2 * AP:2 * AP + NW],
                       preferred_element_type=jnp.float32)
               + psc + bias)                                   # (bt*T, NW)

    # ---- single lane-dense packed output: [scores | pad | alpha*(1-beta) | beta | pad]
    aw = alpha * (1.0 - beta)                                  # (bt, T, K)
    parts = [scores2.reshape(bt, T, NW)]
    if NW_PAD > NW:
        parts.append(jnp.zeros((bt, T, NW_PAD - NW), jnp.float32))
    parts.append(aw)
    parts.append(beta)
    tail = OUTW - NW_PAD - K - 1
    if tail > 0:
        parts.append(jnp.zeros((bt, T, tail), jnp.float32))
    out_ref[...] = jnp.concatenate(parts, axis=-1).astype(out_ref.dtype)


def adaatten_forward(x, hid, mem, V, params, *, use_bf16=False,
                     out_dtype=jnp.float32, approx_recip=True, batch_tile=None):
    """Fused AdaAttenBlock forward. Returns (scores, alpha*(1-beta), beta)."""
    B, T, H = hid.shape
    K = V.shape[1]
    Din = x.shape[-1]
    NW = params["mlp_w"].shape[0]
    assert Din == H, "module requires 2*emb_dim == hidden_dim"

    AP = ATT_PAD
    NW_PAD = _round_up(NW, 128)
    SLAB_W = Din + 3 * H                       # [x | h_{t-1} | hid | mem]
    SLAB_WP = _round_up(SLAB_W, 128)
    OUTW = NW_PAD + _round_up(K + 1, 128)      # packed output width

    cdt = jnp.bfloat16 if use_bf16 else jnp.float32

    # h_{t-1}: zero initial hidden state prepended (plain-JAX glue).
    h0 = jnp.zeros((B, 1, H), hid.dtype)
    hid_t_1 = jnp.concatenate([h0, hid[:, :-1, :]], axis=1) if T > 1 else h0

    # ---- pack the activations into one lane-dense slab
    slab = jnp.concatenate([x, hid_t_1, hid, mem], axis=-1)
    if SLAB_WP > SLAB_W:
        slab = jnp.pad(slab, ((0, 0), (0, 0), (0, SLAB_WP - SLAB_W)))
    slab = slab.astype(cdt)
    Vc = V.astype(cdt)

    def padc(w_t, width):                      # (H, c) -> (H, width) zero-padded columns
        return jnp.pad(w_t, ((0, 0), (0, width - w_t.shape[1])))

    # ---- W1: fused slab-driven weight (rows match the slab feature layout)
    #   cols: [h2att(AP) | h2att2(AP) | h2score(NW_PAD) | gate(H)]
    # NOTE: padded columns/rows MUST remain exactly zero — the analytic joint softmax
    # relies on tanh(0)*0 == 0 for the AP pad lanes.
    NOUT1 = 2 * AP + NW_PAD + H
    gate_off = 2 * AP + NW_PAD
    w1 = jnp.zeros((SLAB_WP, NOUT1), jnp.float32)
    w1 = w1.at[0:Din, gate_off:gate_off + H].set(params["x2s"].T)           # x rows
    w1 = w1.at[Din:Din + H, gate_off:gate_off + H].set(params["h2s"].T)     # h_{t-1} rows
    hr = slice(Din + H, Din + 2 * H)                                        # hid rows
    w1 = w1.at[hr, 0:AP].set(padc(params["h2att"].T, AP))
    w1 = w1.at[hr, AP:2 * AP].set(padc(params["h2att2"].T, AP))
    w1 = w1.at[hr, 2 * AP:2 * AP + NW].set(params["h2score_w"].T)
    w1 = w1.astype(cdt)

    # ---- W2: fused [v2att | s2att | mlp]^T  (H, 2*AP + NW)
    w2 = jnp.concatenate([padc(params["v2att"].T, AP),
                          padc(params["s2att"].T, AP),
                          params["mlp_w"].T], axis=1).astype(cdt)

    # ---- small constants: [attW padded to AP | mlp_b + h2score_b]
    wab = jnp.concatenate([padc(params["attW"], AP),
                           (params["mlp_b"] + params["h2score_b"]).reshape(1, NW)],
                          axis=1).astype(jnp.float32)

    # ---- VMEM-aware batch-tile selection (re-derived against v7x's 64 MiB VMEM)
    in_item = jnp.dtype(cdt).itemsize
    out_item = jnp.dtype(out_dtype).itemsize
    w_bytes = (w1.size + w2.size) * in_item + wab.size * 4

    def vmem_est(bt_):
        act = bt_ * T * SLAB_WP * in_item + bt_ * K * H * in_item
        out = bt_ * T * OUTW * out_item
        live = (bt_ * T * (K + 4) * AP * 4            # content_v slab + attention temps
                + bt_ * T * (NOUT1 + NW + 4 * H) * 4)  # proj / scores / sentinel temps
        return 2 * (act + out) + live + 2 * w_bytes    # inputs/outputs double-buffered

    if batch_tile is None:
        budget = 40 * 1024 * 1024
        batch_tile = 1
        for d in sorted((d for d in range(1, B + 1) if B % d == 0), reverse=True):
            if vmem_est(d) <= budget:
                batch_tile = d                  # biggest step that fits: grid=(1,) if possible
                break
        # Keep 2 parallel steps (v7x megacore) only when each still carries enough
        # tanh work to amortize the second core's per-step overhead.
        per_step_tanh = batch_tile * T * (K + 1) * AP
        if batch_tile == B and batch_tile % 2 == 0 and per_step_tanh >= (1 << 21):
            batch_tile //= 2
    bt = batch_tile
    assert B % bt == 0
    grid = (B // bt,)

    grid_spec = pltpu.PrefetchScalarGridSpec(
        num_scalar_prefetch=0,
        grid=grid,
        in_specs=[
            pl.BlockSpec((bt, T, SLAB_WP), lambda i: (i, 0, 0)),     # activation slab
            pl.BlockSpec((bt, K, H), lambda i: (i, 0, 0)),           # V
            pl.BlockSpec((SLAB_WP, NOUT1), lambda i: (0, 0)),        # W1 (constant block)
            pl.BlockSpec((H, 2 * AP + NW), lambda i: (0, 0)),        # W2 (constant block)
            pl.BlockSpec((1, AP + NW), lambda i: (0, 0)),            # [attW | bias]
        ],
        out_specs=pl.BlockSpec((bt, T, OUTW), lambda i: (i, 0, 0)),  # packed output
    )

    kernel = functools.partial(adaatten_kernel, H=H, AP=AP, NW=NW, NW_PAD=NW_PAD,
                               approx_recip=approx_recip)

    packed = pl.pallas_call(
        kernel,
        out_shape=jax.ShapeDtypeStruct((B, T, OUTW), out_dtype),
        grid_spec=grid_spec,
        compiler_params=pltpu.CompilerParams(
            dimension_semantics=("parallel",),
            vmem_limit_bytes=48 * 1024 * 1024),   # stays inside v7x's 64 MiB physical VMEM
    )(slab, Vc, w1, w2, wab)

    scores = packed[..., :NW]
    atten_weights = packed[..., NW_PAD:NW_PAD + K]       # alpha * (1 - beta)
    beta = packed[..., NW_PAD + K:NW_PAD + K + 1]
    return scores, atten_weights, beta


def adaatten_reference(x, hid, mem, V, params):
    """Pure-JAX reference mirroring the PyTorch forward (dropout = identity / eval)."""
    B, T, H = hid.shape
    h0 = jnp.zeros((B, 1, H), hid.dtype)
    hid_t_1 = jnp.concatenate([h0, hid[:, :-1, :]], axis=1) if T > 1 else h0

    gate = jax.nn.sigmoid(x @ params["x2s"].T + hid_t_1 @ params["h2s"].T)
    s = gate * jnp.tanh(mem)

    pv = V @ params["v2att"].T
    ph = hid @ params["h2att"].T
    ph2 = hid @ params["h2att2"].T
    ps = s @ params["s2att"].T
    wa = params["attW"][0]

    z_v = jnp.tanh(pv[:, None, :, :] + ph[:, :, None, :]) @ wa       # (B, T, K)
    z_s = (jnp.tanh(ps + ph2) @ wa)[..., None]                       # (B, T, 1)
    z = jnp.concatenate([z_v, z_s], axis=2)
    alpha_hat = jax.nn.softmax(z, axis=2)
    beta = alpha_hat[..., -1:]
    alpha = alpha_hat[..., :-1]
    c_hat = beta * s + jnp.einsum('btk,bkh->bth', alpha, V)

    scores = (c_hat @ params["mlp_w"].T + params["mlp_b"]
              + hid @ params["h2score_w"].T + params["h2score_b"])
    return scores, alpha * (1.0 - beta), beta


def xavier_uniform(key, shape):
    fan_out, fan_in = shape
    bound = (6.0 / (fan_in + fan_out)) ** 0.5
    return jax.random.uniform(key, shape, jnp.float32, -bound, bound)


def kaiming_uniform(key, shape):
    fan_out, fan_in = shape
    bound = (6.0 / fan_in) ** 0.5
    return jax.random.uniform(key, shape, jnp.float32, -bound, bound)


if __name__ == "__main__":
    # batch, seq, visual regions, hidden_dim, vocab; emb_dim = H // 2 (module constraint)
    B, T, K, H, NW = 4, 8, 8, 32, 128
    emb_dim = H // 2

    key = jax.random.PRNGKey(0)
    ks = jax.random.split(key, 14)

    x = jax.random.normal(ks[0], (B, T, 2 * emb_dim), jnp.float32)
    hid = jax.random.normal(ks[1], (B, T, H), jnp.float32)
    mem = jax.random.normal(ks[2], (B, T, H), jnp.float32)
    V = jax.random.normal(ks[3], (B, K, H), jnp.float32)

    params = {
        "h2att":     xavier_uniform(ks[4], (ATT, H)),
        "h2att2":    xavier_uniform(ks[5], (ATT, H)),
        "v2att":     xavier_uniform(ks[6], (ATT, H)),
        "s2att":     xavier_uniform(ks[7], (ATT, H)),
        "attW":      xavier_uniform(ks[8], (1, ATT)),
        "x2s":       xavier_uniform(ks[9], (H, H)),
        "h2s":       xavier_uniform(ks[10], (H, H)),
        "mlp_w":     kaiming_uniform(ks[11], (NW, H)),
        "mlp_b":     jnp.zeros((NW,), jnp.float32),
        "h2score_w": xavier_uniform(ks[12], (NW, H)),
        "h2score_b": 0.01 * jax.random.normal(ks[13], (NW,), jnp.float32),
    }

    s_ref, a_ref, b_ref = adaatten_reference(x, hid, mem, V, params)

    # 1) f32, exact reciprocal: tight check against the pure-JAX reference
    scores, aw, beta = adaatten_forward(x, hid, mem, V, params, approx_recip=False)
    jax.block_until_ready((scores, aw, beta))
    assert jnp.allclose(scores, s_ref, atol=2e-4, rtol=2e-4)
    assert jnp.allclose(aw, a_ref, atol=2e-4, rtol=2e-4)
    assert jnp.allclose(beta, b_ref, atol=2e-4, rtol=2e-4)

    # 2) f32 defaults (EUP approx reciprocal in the softmax): near-tight check
    s_a, a_a, b_a = adaatten_forward(x, hid, mem, V, params)
    jax.block_until_ready((s_a, a_a, b_a))
    assert jnp.allclose(s_a, s_ref, atol=1e-2, rtol=1e-2)
    assert jnp.allclose(a_a, a_ref, atol=1e-2, rtol=1e-2)
    assert jnp.allclose(b_a, b_ref, atol=1e-2, rtol=1e-2)

    # 3) bf16 inputs/weights + bf16 packed output (halves DMA/writeback bytes on all
    #    of v5e/v6e/v7x), loose check
    s16, a16, b16 = adaatten_forward(x, hid, mem, V, params,
                                     use_bf16=True, out_dtype=jnp.bfloat16)
    jax.block_until_ready((s16, a16, b16))
    assert jnp.allclose(s16.astype(jnp.float32), s_ref, atol=1.5e-1, rtol=1.5e-1)
    assert jnp.allclose(a16.astype(jnp.float32), a_ref, atol=5e-2, rtol=5e-2)
    assert jnp.allclose(b16.astype(jnp.float32), b_ref, atol=5e-2, rtol=5e-2)

    print("KERNEL_OK")
</pallas_src>

<mosaic_0001>
module attributes {stable_mosaic.version = 11 : i64} {
  func.func @adaatten_kernel(%arg0: i32, %arg1: memref<4x8x128xf32, #tpu.memory_space<vmem>>, %arg2: memref<4x8x32xf32, #tpu.memory_space<vmem>>, %arg3: memref<128x288xf32, #tpu.memory_space<vmem>>, %arg4: memref<32x256xf32, #tpu.memory_space<vmem>>, %arg5: memref<1x192xf32, #tpu.memory_space<vmem>>, %arg6: memref<4x8x256xf32, #tpu.memory_space<vmem>>) attributes {dimension_semantics = [#tpu.dimension_semantics<parallel>], iteration_bounds = array<i64: 1>, scalar_prefetch = 0 : i64, scratch_operands = 0 : i64, tpu.core_type = #tpu.core_type<tc>, window_params = [{transform_indices = @transform_0, window_bounds = array<i64: 4, 8, 128>}, {transform_indices = @transform_1, window_bounds = array<i64: 4, 8, 32>}, {pipeline_mode = #tpu.pipeline_mode<synchronous>, transform_indices = @transform_2, window_bounds = array<i64: 128, 288>}, {pipeline_mode = #tpu.pipeline_mode<synchronous>, transform_indices = @transform_3, window_bounds = array<i64: 32, 256>}, {pipeline_mode = #tpu.pipeline_mode<synchronous>, transform_indices = @transform_4, window_bounds = array<i64: 1, 192>}, {transform_indices = @transform_5, window_bounds = array<i64: 4, 8, 256>}]} {
    %c0 = arith.constant 0 : index
    %c0_0 = arith.constant 0 : index
    %c0_1 = arith.constant 0 : index
    %0 = vector.load %arg1[%c0, %c0_0, %c0_1] : memref<4x8x128xf32, #tpu.memory_space<vmem>>, vector<4x8x128xf32>
    %1 = vector.shape_cast %0 : vector<4x8x128xf32> to vector<32x128xf32>
    %c0_2 = arith.constant 0 : index
    %c0_3 = arith.constant 0 : index
    %2 = vector.load %arg3[%c0_2, %c0_3] : memref<128x288xf32, #tpu.memory_space<vmem>>, vector<128x288xf32>
    %cst = arith.constant dense<0.000000e+00> : vector<32x288xf32>
    %3 = tpu.matmul %1, %2, %cst {dimension_numbers = #tpu.dot_dimension_numbers<[1], [0], [0], [1], [0, 0, 1, 1], [], []>} : vector<32x128xf32>, vector<128x288xf32>, vector<32x288xf32> -> vector<32x288xf32>
    %4 = vector.extract_strided_slice %3 {offsets = [0, 0], sizes = [32, 64], strides = [1, 1]} : vector<32x288xf32> to vector<32x64xf32>
    %5 = vector.extract_strided_slice %3 {offsets = [0, 64], sizes = [32, 64], strides = [1, 1]} : vector<32x288xf32> to vector<32x64xf32>
    %6 = vector.extract_strided_slice %3 {offsets = [0, 128], sizes = [32, 128], strides = [1, 1]} : vector<32x288xf32> to vector<32x128xf32>
    %7 = vector.extract_strided_slice %3 {offsets = [0, 256], sizes = [32, 32], strides = [1, 1]} : vector<32x288xf32> to vector<32x32xf32>
    %8 = vector.extract_strided_slice %1 {offsets = [0, 96], sizes = [32, 32], strides = [1, 1]} : vector<32x128xf32> to vector<32x32xf32>
    %9 = arith.negf %7 : vector<32x32xf32>
    %10 = math.exp %9 : vector<32x32xf32>
    %cst_4 = arith.constant 1.000000e+00 : f32
    %11 = vector.broadcast %cst_4 : f32 to vector<32x32xf32>
    %12 = arith.addf %11, %10 : vector<32x32xf32>
    %13 = arith.divf %11, %12 : vector<32x32xf32>
    %14 = math.tanh %8 : vector<32x32xf32>
    %15 = arith.mulf %13, %14 : vector<32x32xf32>
    %c0_5 = arith.constant 0 : index
    %c0_6 = arith.constant 0 : index
    %16 = vector.load %arg4[%c0_5, %c0_6] : memref<32x256xf32, #tpu.memory_space<vmem>>, vector<32x256xf32>
    %c0_7 = arith.constant 0 : index
    %c0_8 = arith.constant 0 : index
    %c0_9 = arith.constant 0 : index
    %17 = vector.load %arg2[%c0_7, %c0_8, %c0_9] : memref<4x8x32xf32, #tpu.memory_space<vmem>>, vector<4x8x32xf32>
    %18 = vector.shape_cast %17 : vector<4x8x32xf32> to vector<32x32xf32>
    %19 = vector.extract_strided_slice %16 {offsets = [0, 0], sizes = [32, 64], strides = [1, 1]} : vector<32x256xf32> to vector<32x64xf32>
    %cst_10 = arith.constant dense<0.000000e+00> : vector<32x64xf32>
    %20 = tpu.matmul %18, %19, %cst_10 {dimension_numbers = #tpu.dot_dimension_numbers<[1], [0], [0], [1], [0, 0, 1, 1], [], []>} : vector<32x32xf32>, vector<32x64xf32>, vector<32x64xf32> -> vector<32x64xf32>
    %21 = vector.extract_strided_slice %16 {offsets = [0, 64], sizes = [32, 64], strides = [1, 1]} : vector<32x256xf32> to vector<32x64xf32>
    %cst_11 = arith.constant dense<0.000000e+00> : vector<32x64xf32>
    %22 = tpu.matmul %15, %21, %cst_11 {dimension_numbers = #tpu.dot_dimension_numbers<[1], [0], [0], [1], [0, 0, 1, 1], [], []>} : vector<32x32xf32>, vector<32x64xf32>, vector<32x64xf32> -> vector<32x64xf32>
    %c0_12 = arith.constant 0 : index
    %c0_13 = arith.constant 0 : index
    %23 = vector.load %arg5[%c0_12, %c0_13] : memref<1x192xf32, #tpu.memory_space<vmem>>, vector<1x64xf32>
    %c0_14 = arith.constant 0 : index
    %c64 = arith.constant 64 : index
    %24 = vector.load %arg5[%c0_14, %c64] : memref<1x192xf32, #tpu.memory_space<vmem>>, vector<1x128xf32>
    %25 = vector.shape_cast %20 : vector<32x64xf32> to vector<4x8x64xf32>
    %26 = vector.shape_cast %4 : vector<32x64xf32> to vector<4x8x64xf32>
    %27 = vector.shape_cast %26 : vector<4x8x64xf32> to vector<4x8x1x64xf32>
    %28 = vector.shape_cast %25 : vector<4x8x64xf32> to vector<4x1x8x64xf32>
    %29 = vector.broadcast %27 : vector<4x8x1x64xf32> to vector<4x8x8x64xf32>
    %30 = vector.broadcast %28 : vector<4x1x8x64xf32> to vector<4x8x8x64xf32>
    %31 = arith.addf %29, %30 : vector<4x8x8x64xf32>
    %32 = math.tanh %31 : vector<4x8x8x64xf32>
    %33 = vector.shape_cast %23 : vector<1x64xf32> to vector<1x1x1x64xf32>
    %34 = vector.broadcast %33 : vector<1x1x1x64xf32> to vector<4x8x8x64xf32>
    %35 = arith.mulf %32, %34 : vector<4x8x8x64xf32>
    %cst_15 = arith.constant dense<0.000000e+00> : vector<4x8x8xf32>
    %36 = vector.multi_reduction <add>, %35, %cst_15 [3] : vector<4x8x8x64xf32> to vector<4x8x8xf32>
    %37 = arith.addf %22, %5 : vector<32x64xf32>
    %38 = math.tanh %37 : vector<32x64xf32>
    %39 = vector.broadcast %23 : vector<1x64xf32> to vector<32x64xf32>
    %40 = arith.mulf %38, %39 : vector<32x64xf32>
    %cst_16 = arith.constant dense<0.000000e+00> : vector<32xf32>
    %41 = vector.multi_reduction <add>, %40, %cst_16 [1] : vector<32x64xf32> to vector<32xf32>
    %42 = vector.shape_cast %41 : vector<32xf32> to vector<32x1xf32>
    %43 = vector.shape_cast %42 : vector<32x1xf32> to vector<4x8x1xf32>
    %cst_17 = arith.constant dense<0xFF800000> : vector<4x8xf32>
    %44 = vector.multi_reduction <maximumf>, %36, %cst_17 [2] : vector<4x8x8xf32> to vector<4x8xf32>
    %45 = vector.shape_cast %44 : vector<4x8xf32> to vector<4x8x1xf32>
    %46 = arith.maximumf %45, %43 : vector<4x8x1xf32>
    %47 = vector.broadcast %46 : vector<4x8x1xf32> to vector<4x8x8xf32>
    %48 = arith.subf %36, %47 : vector<4x8x8xf32>
    %49 = math.exp %48 : vector<4x8x8xf32>
    %50 = arith.subf %43, %46 : vector<4x8x1xf32>
    %51 = math.exp %50 : vector<4x8x1xf32>
    %cst_18 = arith.constant dense<0.000000e+00> : vector<4x8xf32>
    %52 = vector.multi_reduction <add>, %49, %cst_18 [2] : vector<4x8x8xf32> to vector<4x8xf32>
    %53 = vector.shape_cast %52 : vector<4x8xf32> to vector<4x8x1xf32>
    %54 = arith.addf %53, %51 : vector<4x8x1xf32>
    %cst_19 = arith.constant 1.000000e+00 : f32
    %55 = vector.broadcast %cst_19 : f32 to vector<4x8x1xf32>
    %56 = arith.divf %55, %54 : vector<4x8x1xf32>
    %57 = vector.broadcast %56 : vector<4x8x1xf32> to vector<4x8x8xf32>
    %58 = arith.mulf %49, %57 : vector<4x8x8xf32>
    %59 = arith.mulf %51, %56 : vector<4x8x1xf32>
    %60 = vector.shape_cast %15 : vector<32x32xf32> to vector<4x8x32xf32>
    %c0_20 = arith.constant 0 : index
    %c0_21 = arith.constant 0 : index
    %c0_22 = arith.constant 0 : index
    %61 = vector.load %arg2[%c0_20, %c0_21, %c0_22] : memref<4x8x32xf32, #tpu.memory_space<vmem>>, vector<4x8x32xf32>
    %62 = vector.extract_strided_slice %58 {offsets = [0, 0, 0], sizes = [4, 8, 1], strides = [1, 1, 1]} : vector<4x8x8xf32> to vector<4x8x1xf32>
    %63 = vector.extract_strided_slice %61 {offsets = [0, 0, 0], sizes = [4, 1, 32], strides = [1, 1, 1]} : vector<4x8x32xf32> to vector<4x1x32xf32>
    %64 = vector.broadcast %62 : vector<4x8x1xf32> to vector<4x8x32xf32>
    %65 = vector.broadcast %63 : vector<4x1x32xf32> to vector<4x8x32xf32>
    %66 = arith.mulf %64, %65 : vector<4x8x32xf32>
    %67 = vector.extract_strided_slice %58 {offsets = [0, 0, 1], sizes = [4, 8, 1], strides = [1, 1, 1]} : vector<4x8x8xf32> to vector<4x8x1xf32>
    %68 = vector.extract_strided_slice %61 {offsets = [0, 1, 0], sizes = [4, 1, 32], strides = [1, 1, 1]} : vector<4x8x32xf32> to vector<4x1x32xf32>
    %69 = vector.broadcast %67 : vector<4x8x1xf32> to vector<4x8x32xf32>
    %70 = vector.broadcast %68 : vector<4x1x32xf32> to vector<4x8x32xf32>
    %71 = arith.mulf %69, %70 : vector<4x8x32xf32>
    %72 = arith.addf %66, %71 : vector<4x8x32xf32>
    %73 = vector.extract_strided_slice %58 {offsets = [0, 0, 2], sizes = [4, 8, 1], strides = [1, 1, 1]} : vector<4x8x8xf32> to vector<4x8x1xf32>
    %74 = vector.extract_strided_slice %61 {offsets = [0, 2, 0], sizes = [4, 1, 32], strides = [1, 1, 1]} : vector<4x8x32xf32> to vector<4x1x32xf32>
    %75 = vector.broadcast %73 : vector<4x8x1xf32> to vector<4x8x32xf32>
    %76 = vector.broadcast %74 : vector<4x1x32xf32> to vector<4x8x32xf32>
    %77 = arith.mulf %75, %76 : vector<4x8x32xf32>
    %78 = arith.addf %72, %77 : vector<4x8x32xf32>
    %79 = vector.extract_strided_slice %58 {offsets = [0, 0, 3], sizes = [4, 8, 1], strides = [1, 1, 1]} : vector<4x8x8xf32> to vector<4x8x1xf32>
    %80 = vector.extract_strided_slice %61 {offsets = [0, 3, 0], sizes = [4, 1, 32], strides = [1, 1, 1]} : vector<4x8x32xf32> to vector<4x1x32xf32>
    %81 = vector.broadcast %79 : vector<4x8x1xf32> to vector<4x8x32xf32>
    %82 = vector.broadcast %80 : vector<4x1x32xf32> to vector<4x8x32xf32>
    %83 = arith.mulf %81, %82 : vector<4x8x32xf32>
    %84 = arith.addf %78, %83 : vector<4x8x32xf32>
    %85 = vector.extract_strided_slice %58 {offsets = [0, 0, 4], sizes = [4, 8, 1], strides = [1, 1, 1]} : vector<4x8x8xf32> to vector<4x8x1xf32>
    %86 = vector.extract_strided_slice %61 {offsets = [0, 4, 0], sizes = [4, 1, 32], strides = [1, 1, 1]} : vector<4x8x32xf32> to vector<4x1x32xf32>
    %87 = vector.broadcast %85 : vector<4x8x1xf32> to vector<4x8x32xf32>
    %88 = vector.broadcast %86 : vector<4x1x32xf32> to vector<4x8x32xf32>
    %89 = arith.mulf %87, %88 : vector<4x8x32xf32>
    %90 = arith.addf %84, %89 : vector<4x8x32xf32>
    %91 = vector.extract_strided_slice %58 {offsets = [0, 0, 5], sizes = [4, 8, 1], strides = [1, 1, 1]} : vector<4x8x8xf32> to vector<4x8x1xf32>
    %92 = vector.extract_strided_slice %61 {offsets = [0, 5, 0], sizes = [4, 1, 32], strides = [1, 1, 1]} : vector<4x8x32xf32> to vector<4x1x32xf32>
    %93 = vector.broadcast %91 : vector<4x8x1xf32> to vector<4x8x32xf32>
    %94 = vector.broadcast %92 : vector<4x1x32xf32> to vector<4x8x32xf32>
    %95 = arith.mulf %93, %94 : vector<4x8x32xf32>
    %96 = arith.addf %90, %95 : vector<4x8x32xf32>
    %97 = vector.extract_strided_slice %58 {offsets = [0, 0, 6], sizes = [4, 8, 1], strides = [1, 1, 1]} : vector<4x8x8xf32> to vector<4x8x1xf32>
    %98 = vector.extract_strided_slice %61 {offsets = [0, 6, 0], sizes = [4, 1, 32], strides = [1, 1, 1]} : vector<4x8x32xf32> to vector<4x1x32xf32>
    %99 = vector.broadcast %97 : vector<4x8x1xf32> to vector<4x8x32xf32>
    %100 = vector.broadcast %98 : vector<4x1x32xf32> to vector<4x8x32xf32>
    %101 = arith.mulf %99, %100 : vector<4x8x32xf32>
    %102 = arith.addf %96, %101 : vector<4x8x32xf32>
    %103 = vector.extract_strided_slice %58 {offsets = [0, 0, 7], sizes = [4, 8, 1], strides = [1, 1, 1]} : vector<4x8x8xf32> to vector<4x8x1xf32>
    %104 = vector.extract_strided_slice %61 {offsets = [0, 7, 0], sizes = [4, 1, 32], strides = [1, 1, 1]} : vector<4x8x32xf32> to vector<4x1x32xf32>
    %105 = vector.broadcast %103 : vector<4x8x1xf32> to vector<4x8x32xf32>
    %106 = vector.broadcast %104 : vector<4x1x32xf32> to vector<4x8x32xf32>
    %107 = arith.mulf %105, %106 : vector<4x8x32xf32>
    %108 = arith.addf %102, %107 : vector<4x8x32xf32>
    %109 = vector.broadcast %59 : vector<4x8x1xf32> to vector<4x8x32xf32>
    %110 = arith.mulf %109, %60 : vector<4x8x32xf32>
    %111 = arith.addf %110, %108 : vector<4x8x32xf32>
    %112 = vector.shape_cast %111 : vector<4x8x32xf32> to vector<32x32xf32>
    %113 = vector.extract_strided_slice %16 {offsets = [0, 128], sizes = [32, 128], strides = [1, 1]} : vector<32x256xf32> to vector<32x128xf32>
    %cst_23 = arith.constant dense<0.000000e+00> : vector<32x128xf32>
    %114 = tpu.matmul %112, %113, %cst_23 {dimension_numbers = #tpu.dot_dimension_numbers<[1], [0], [0], [1], [0, 0, 1, 1], [], []>} : vector<32x32xf32>, vector<32x128xf32>, vector<32x128xf32> -> vector<32x128xf32>
    %115 = arith.addf %114, %6 : vector<32x128xf32>
    %116 = vector.broadcast %24 : vector<1x128xf32> to vector<32x128xf32>
    %117 = arith.addf %115, %116 : vector<32x128xf32>
    %cst_24 = arith.constant 1.000000e+00 : f32
    %118 = vector.broadcast %cst_24 : f32 to vector<4x8x1xf32>
    %119 = arith.subf %118, %59 : vector<4x8x1xf32>
    %120 = vector.broadcast %119 : vector<4x8x1xf32> to vector<4x8x8xf32>
    %121 = arith.mulf %58, %120 : vector<4x8x8xf32>
    %122 = vector.shape_cast %117 : vector<32x128xf32> to vector<4x8x128xf32>
    %cst_25 = arith.constant 0.000000e+00 : f32
    %123 = vector.broadcast %cst_25 : f32 to vector<4x8x119xf32>
    %124 = tpu.concatenate %122, %121, %59, %123 in 2 : vector<4x8x128xf32>, vector<4x8x8xf32>, vector<4x8x1xf32>, vector<4x8x119xf32> -> vector<4x8x256xf32>
    %c0_26 = arith.constant 0 : index
    %c0_27 = arith.constant 0 : index
    %c0_28 = arith.constant 0 : index
    %125 = vector.load %arg6[%c0_26, %c0_27, %c0_28] : memref<4x8x256xf32, #tpu.memory_space<vmem>>, vector<4x8x256xf32>
    tpu.vector_store %arg6[%c0_26, %c0_27, %c0_28], %124 {strides = array<i32>} : memref<4x8x256xf32, #tpu.memory_space<vmem>>, vector<4x8x256xf32>,
    return
  }
  func.func @transform_0(%arg0: i32) -> (i32, i32, i32) {
    %c0_i32 = arith.constant 0 : i32
    %c0_i32_0 = arith.constant 0 : i32
    %c0_i32_1 = arith.constant 0 : i32
    return %arg0, %c0_i32, %c0_i32_0 : i32, i32, i32
  }
  func.func @transform_1(%arg0: i32) -> (i32, i32, i32) {
    %c0_i32 = arith.constant 0 : i32
    %c0_i32_0 = arith.constant 0 : i32
    %c0_i32_1 = arith.constant 0 : i32
    return %arg0, %c0_i32, %c0_i32_0 : i32, i32, i32
  }
  func.func @transform_2(%arg0: i32) -> (i32, i32) {
    %c0_i32 = arith.constant 0 : i32
    %c0_i32_0 = arith.constant 0 : i32
    %c0_i32_1 = arith.constant 0 : i32
    return %c0_i32, %c0_i32_0 : i32, i32
  }
  func.func @transform_3(%arg0: i32) -> (i32, i32) {
    %c0_i32 = arith.constant 0 : i32
    %c0_i32_0 = arith.constant 0 : i32
    %c0_i32_1 = arith.constant 0 : i32
    return %c0_i32, %c0_i32_0 : i32, i32
  }
  func.func @transform_4(%arg0: i32) -> (i32, i32) {
    %c0_i32 = arith.constant 0 : i32
    %c0_i32_0 = arith.constant 0 : i32
    %c0_i32_1 = arith.constant 0 : i32
    return %c0_i32, %c0_i32_0 : i32, i32
  }
  func.func @transform_5(%arg0: i32) -> (i32, i32, i32) {
    %c0_i32 = arith.constant 0 : i32
    %c0_i32_0 = arith.constant 0 : i32
    %c0_i32_1 = arith.constant 0 : i32
    return %arg0, %c0_i32, %c0_i32_0 : i32, i32, i32
  }
}

</mosaic_0001>

<llo_original>
// kernel: tpu_custom_call.1
$region0: #{tpu_custom_call.1}
  #allocation0 [shape = 'u32[]', space=smem, size = 0x4, offset = 0x4, fixed_abs, tag = 'smem constant byte address 0x4 - core index']
  #allocation1 [shape = 'u32[72,128]{1,0:T(1,128)}', space=vmem, size = 0x9000, scoped, tag = 'internal scratch']
  %s0 = inlined_call_operand.vmem [shape: f32[4,8,128], index: 0, kind: input, shape index: {}]
  %s1 = inlined_call_operand.vmem [shape: f32[4,8,32], index: 1, kind: input, shape index: {}]
  %s2 = inlined_call_operand.vmem [shape: f32[128,288], index: 2, kind: input, shape index: {}]
  %s3 = inlined_call_operand.vmem [shape: f32[32,256], index: 3, kind: input, shape index: {}]
  %s4 = inlined_call_operand.vmem [shape: f32[1,192], index: 4, kind: input, shape index: {}]
  %s5 = inlined_call_operand.hbm [shape: f32[4,8,256], index: 5, kind: output, shape index: {}]
  %s6 = sld [smem:[#allocation0]]
  $region30: #{tpu_custom_call.1} parent=0
    _
  %s8 = ssub.s32 1, %s6
  %s9 = scalar_select 0, %s8, %s6
  $region1: #{tpu_custom_call.1} parent=0
    #allocation2 [shape = 'u8[32768]{0}', space=vmem, size = 0x8000, scoped, tag = 'output window, operand 0, single buffered']
    #allocation3 [shape = 's32[1]{0}', space=sflag, size = 0x4, scoped, tag = 'scoped memory for tpu_custom_call.1']
    %10 = vsyncpa [#allocation3], 0
    // Predicated region
    $region2: #{tpu_custom_call.1} parent=1 // pred_check
      _
    $region3: #{tpu_custom_call.1} parent=1 // pred_check_branch
      %12 = sbr.rel (0) target = $region5
    $region4: #{tpu_custom_call.1} parent=1 // pred_region
      _
    $region5: #{tpu_custom_call.1} parent=1 // pred_fallthru
      _
    // Predicated region
    $region6: #{tpu_custom_call.1} parent=1 // pred_check
      _
    $region7: #{tpu_custom_call.1} parent=1 // pred_check_branch
      %14 = sbr.rel (0) target = $region9
    $region8: #{tpu_custom_call.1} parent=1 // pred_region
      _
    $region9: #{tpu_custom_call.1} parent=1 // pred_fallthru
      _
    // Predicated region
    $region10: #{tpu_custom_call.1} parent=1 // pred_check
      _
    $region11: #{tpu_custom_call.1} parent=1 // pred_check_branch
      %16 = sbr.rel (0) target = $region13
    $region12: #{tpu_custom_call.1} parent=1 // pred_region
      _
    $region13: #{tpu_custom_call.1} parent=1 // pred_fallthru
      _
    // Predicated region
    $region14: #{tpu_custom_call.1} parent=1 // pred_check
      _
    $region15: #{tpu_custom_call.1} parent=1 // pred_check_branch
      %18 = sbr.rel (0) target = $region17
    $region16: #{tpu_custom_call.1} parent=1 // pred_region
      _
    $region17: #{tpu_custom_call.1} parent=1 // pred_fallthru
      _
    // Predicated region
    $region18: #{tpu_custom_call.1} parent=1 // pred_check
      _
    $region19: #{tpu_custom_call.1} parent=1 // pred_check_branch
      %20 = sbr.rel (0) target = $region21
    $region20: #{tpu_custom_call.1} parent=1 // pred_region
      _
    $region21: #{tpu_custom_call.1} parent=1 // pred_fallthru
      _
    %v21 = vld [vmem:[%s0] sm:$0xff]
    %v22 = vld [vmem:[%s0 + $0x8] sm:$0xff]
    %v23 = vld [vmem:[%s0 + $0x10] sm:$0xff]
    %v24 = vld [vmem:[%s0 + $0x18] sm:$0xff]
    %v25 = vld [vmem:[%s2] sm:$0xff]
    %v26 = vld [vmem:[%s2 + $0x8] sm:$0xff]
    %v27 = vld [vmem:[%s2 + $0x10] sm:$0xff]
    %v28 = vld [vmem:[%s2 + $0x18] sm:$0xff]
    %v29 = vld [vmem:[%s2 + $0x20] sm:$0xff]
    %v30 = vld [vmem:[%s2 + $0x28] sm:$0xff]
    %v31 = vld [vmem:[%s2 + $0x30] sm:$0xff]
    %v32 = vld [vmem:[%s2 + $0x38] sm:$0xff]
    %v33 = vld [vmem:[%s2 + $0x40] sm:$0xff]
    %v34 = vld [vmem:[%s2 + $0x48] sm:$0xff]
    %v35 = vld [vmem:[%s2 + $0x50] sm:$0xff]
    %v36 = vld [vmem:[%s2 + $0x58] sm:$0xff]
    %v37 = vld [vmem:[%s2 + $0x60] sm:$0xff]
    %v38 = vld [vmem:[%s2 + $0x68] sm:$0xff]
    %v39 = vld [vmem:[%s2 + $0x70] sm:$0xff]
    %v40 = vld [vmem:[%s2 + $0x78] sm:$0xff]
    %v41 = vld [vmem:[%s2 + $0x80] sm:$0xff]
    %v42 = vld [vmem:[%s2 + $0x88] sm:$0xff]
    %v43 = vld [vmem:[%s2 + $0x90] sm:$0xff]
    %v44 = vld [vmem:[%s2 + $0x98] sm:$0xff]
    %v45 = vld [vmem:[%s2 + $0xa0] sm:$0xff]
    %v46 = vld [vmem:[%s2 + $0xa8] sm:$0xff]
    %v47 = vld [vmem:[%s2 + $0xb0] sm:$0xff]
    %v48 = vld [vmem:[%s2 + $0xb8] sm:$0xff]
    %v49 = vld [vmem:[%s2 + $0xc0] sm:$0xff]
    %v50 = vld [vmem:[%s2 + $0xc8] sm:$0xff]
    %v51 = vld [vmem:[%s2 + $0xd0] sm:$0xff]
    %v52 = vld [vmem:[%s2 + $0xd8] sm:$0xff]
    %v53 = vld [vmem:[%s2 + $0xe0] sm:$0xff]
    %v54 = vld [vmem:[%s2 + $0xe8] sm:$0xff]
    %v55 = vld [vmem:[%s2 + $0xf0] sm:$0xff]
    %v56 = vld [vmem:[%s2 + $0xf8] sm:$0xff]
    %v57 = vld [vmem:[%s2 + $0x100] sm:$0xff]
    %v58 = vld [vmem:[%s2 + $0x108] sm:$0xff]
    %v59 = vld [vmem:[%s2 + $0x110] sm:$0xff]
    %v60 = vld [vmem:[%s2 + $0x118] sm:$0xff]
    %v61 = vld [vmem:[%s2 + $0x120] sm:$0xff]
    %v62 = vld [vmem:[%s2 + $0x128] sm:$0xff]
    %v63 = vld [vmem:[%s2 + $0x130] sm:$0xff]
    %v64 = vld [vmem:[%s2 + $0x138] sm:$0xff]
    %v65 = vld [vmem:[%s2 + $0x140] sm:$0xff]
    %v66 = vld [vmem:[%s2 + $0x148] sm:$0xff]
    %v67 = vld [vmem:[%s2 + $0x150] sm:$0xff]
    %v68 = vld [vmem:[%s2 + $0x158] sm:$0xff]
    %v69 = vld [vmem:[%s2 + $0x160] sm:$0xff]
    %v70 = vld [vmem:[%s2 + $0x168] sm:$0xff]
    %v71 = vld [vmem:[%s2 + $0x170] sm:$0xff]
    %v72 = vld [vmem:[%s2 + $0x178] sm:$0xff]
    %73 = vmatpush.msra.mxu0 %v70
    %74 = vmatpush.msra.mxu0 %v67
    %75 = vmatpush.msra.mxu0 %v64
    %76 = vmatpush.msra.mxu0 %v61
    %77 = vmatpush.msra.mxu0 %v58
    %78 = vmatpush.msra.mxu0 %v55
    %79 = vmatpush.msra.mxu0 %v52
    %80 = vmatpush.msra.mxu0 %v49
    %81 = vmatpush.msra.mxu0 %v46
    %82 = vmatpush.msra.mxu0 %v43
    %83 = vmatpush.msra.mxu0 %v40
    %84 = vmatpush.msra.mxu0 %v37
    %85 = vmatpush.msra.mxu0 %v34
    %86 = vmatpush.msra.mxu0 %v31
    %87 = vmatpush.msra.mxu0 %v28
    %88 = vmatpush.msra.mxu0 %v25
    %89 = vmatmul.f32.gmra.mxu0 %v21
    %v90 = vpop.f32.mrf.mxu0
    %v91 = vadd.f32 0.0, %v90
    %92 = vmatmul.f32.gmra.mxu0 %v22
    %v93 = vpop.f32.mrf.mxu0
    %v94 = vadd.f32 0.0, %v93
    %95 = vmatmul.f32.gmra.mxu0 %v23
    %v96 = vpop.f32.mrf.mxu0
    %v97 = vadd.f32 0.0, %v96
    %98 = vmatmul.f32.gmra.mxu0 %v24
    %v99 = vpop.f32.mrf.mxu0
    %v100 = vadd.f32 0.0, %v99
    %101 = vdwg.mxu0
    %102 = vmatpush.msra.mxu0 %v71
    %103 = vmatpush.msra.mxu0 %v68
    %104 = vmatpush.msra.mxu0 %v65
    %105 = vmatpush.msra.mxu0 %v62
    %106 = vmatpush.msra.mxu0 %v59
    %107 = vmatpush.msra.mxu0 %v56
    %108 = vmatpush.msra.mxu0 %v53
    %109 = vmatpush.msra.mxu0 %v50
    %110 = vmatpush.msra.mxu0 %v47
    %111 = vmatpush.msra.mxu0 %v44
    %112 = vmatpush.msra.mxu0 %v41
    %113 = vmatpush.msra.mxu0 %v38
    %114 = vmatpush.msra.mxu0 %v35
    %115 = vmatpush.msra.mxu0 %v32
    %116 = vmatpush.msra.mxu0 %v29
    %117 = vmatpush.msra.mxu0 %v26
    %118 = vmatmul.f32.gmra.mxu0 %v21
    %v119 = vpop.f32.mrf.mxu0
    %v120 = vadd.f32 0.0, %v119
    %121 = vmatmul.f32.gmra.mxu0 %v22
    %v122 = vpop.f32.mrf.mxu0
    %v123 = vadd.f32 0.0, %v122
    %124 = vmatmul.f32.gmra.mxu0 %v23
    %v125 = vpop.f32.mrf.mxu0
    %v126 = vadd.f32 0.0, %v125
    %127 = vmatmul.f32.gmra.mxu0 %v24
    %v128 = vpop.f32.mrf.mxu0
    %v129 = vadd.f32 0.0, %v128
    %130 = vdwg.mxu0
    %131 = vmatpush.msra.mxu0 %v72
    %132 = vmatpush.msra.mxu0 %v69
    %133 = vmatpush.msra.mxu0 %v66
    %134 = vmatpush.msra.mxu0 %v63
    %135 = vmatpush.msra.mxu0 %v60
    %136 = vmatpush.msra.mxu0 %v57
    %137 = vmatpush.msra.mxu0 %v54
    %138 = vmatpush.msra.mxu0 %v51
    %139 = vmatpush.msra.mxu0 %v48
    %140 = vmatpush.msra.mxu0 %v45
    %141 = vmatpush.msra.mxu0 %v42
    %142 = vmatpush.msra.mxu0 %v39
    %143 = vmatpush.msra.mxu0 %v36
    %144 = vmatpush.msra.mxu0 %v33
    %145 = vmatpush.msra.mxu0 %v30
    %146 = vmatpush.msra.mxu0 %v27
    %147 = vmatmul.f32.gmra.mxu0 %v21
    %v148 = vpop.f32.mrf.mxu0
    %v149 = vadd.f32 0.0, %v148
    %150 = vmatmul.f32.gmra.mxu0 %v22
    %v151 = vpop.f32.mrf.mxu0
    %v152 = vadd.f32 0.0, %v151
    %153 = vmatmul.f32.gmra.mxu0 %v23
    %v154 = vpop.f32.mrf.mxu0
    %v155 = vadd.f32 0.0, %v154
    %156 = vmatmul.f32.gmra.mxu0 %v24
    %v157 = vpop.f32.mrf.mxu0
    %v158 = vadd.f32 0.0, %v157
    %159 = vdwg.mxu0
    %v160 = vxor.u32 %v149, 2147483648
    %v161 = vxor.u32 %v152, 2147483648
    %v162 = vxor.u32 %v155, 2147483648
    %v163 = vxor.u32 %v158, 2147483648
    %v164 = vmul.f32 %v160, 1.442695
    %v165 = vpow.pop %v164
    %v166 = vmul.f32 %v161, 1.442695
    %v167 = vpow.pop %v166
    %v168 = vmul.f32 %v162, 1.442695
    %v169 = vpow.pop %v168
    %v170 = vmul.f32 %v163, 1.442695
    %v171 = vpow.pop %v170
    %v172 = vadd.f32 %v165, 1.0
    %v173 = vadd.f32 %v167, 1.0
    %v174 = vadd.f32 %v169, 1.0
    %v175 = vadd.f32 %v171, 1.0
    %v176 = vrcp.pop %v172
    %v177 = vmul.f32 %v172, %v176
    %v178 = vsub.f32 1.0, %v177
    %v179 = vmul.f32 %v176, %v178
    %v180 = vadd.f32 %v176, %v179
    %vm181 = vweird.f32 %v172
    %vm182 = vweird.f32 %v176
    %vm183 = vmor %vm181, %vm182
    %v184 = vsel %vm183, %v176, %v180
    %v185 = vand.u32 2147483647, %v172
    %vm186 = vcmp.eq.f32.partialorder %v185, 8.507059e+37
    %v187 = vand.u32 %v172, 2147483648
    %v188 = vor.u32 1.1754944e-38, %v187
    %v189 = vsel %vm186, %v188, %v184
    %v190 = vmul.f32 1.0, %v189
    %v191 = vrcp.pop %v173
    %v192 = vmul.f32 %v173, %v191
    %v193 = vsub.f32 1.0, %v192
    %v194 = vmul.f32 %v191, %v193
    %v195 = vadd.f32 %v191, %v194
    %vm196 = vweird.f32 %v173
    %vm197 = vweird.f32 %v191
    %vm198 = vmor %vm196, %vm197
    %v199 = vsel %vm198, %v191, %v195
    %v200 = vand.u32 2147483647, %v173
    %vm201 = vcmp.eq.f32.partialorder %v200, 8.507059e+37
    %v202 = vand.u32 %v173, 2147483648
    %v203 = vor.u32 1.1754944e-38, %v202
    %v204 = vsel %vm201, %v203, %v199
    %v205 = vmul.f32 1.0, %v204
    %v206 = vrcp.pop %v174
    %v207 = vmul.f32 %v174, %v206
    %v208 = vsub.f32 1.0, %v207
    %v209 = vmul.f32 %v206, %v208
    %v210 = vadd.f32 %v206, %v209
    %vm211 = vweird.f32 %v174
    %vm212 = vweird.f32 %v206
    %vm213 = vmor %vm211, %vm212
    %v214 = vsel %vm213, %v206, %v210
    %v215 = vand.u32 2147483647, %v174
    %vm216 = vcmp.eq.f32.partialorder %v215, 8.507059e+37
    %v217 = vand.u32 %v174, 2147483648
    %v218 = vor.u32 1.1754944e-38, %v217
    %v219 = vsel %vm216, %v218, %v214
    %v220 = vmul.f32 1.0, %v219
    %v221 = vrcp.pop %v175
    %v222 = vmul.f32 %v175, %v221
    %v223 = vsub.f32 1.0, %v222
    %v224 = vmul.f32 %v221, %v223
    %v225 = vadd.f32 %v221, %v224
    %vm226 = vweird.f32 %v175
    %vm227 = vweird.f32 %v221
    %vm228 = vmor %vm226, %vm227
    %v229 = vsel %vm228, %v221, %v225
    %v230 = vand.u32 2147483647, %v175
    %vm231 = vcmp.eq.f32.partialorder %v230, 8.507059e+37
    %v232 = vand.u32 %v175, 2147483648
    %v233 = vor.u32 1.1754944e-38, %v232
    %v234 = vsel %vm231, %v233, %v229
    %v235 = vmul.f32 1.0, %v234
    %v236 = vtanh.pop %v21
    %v237 = vtanh.pop %v22
    %v238 = vtanh.pop %v23
    %v239 = vtanh.pop %v24
    %244 = vrot.lane.b32.xlu0 %v236, 32
    %v245 = vpop.permute.xlu0 %244
    %246 = vrot.lane.b32.xlu0 %v237, 32
    %v247 = vpop.permute.xlu0 %246
    %248 = vrot.lane.b32.xlu0 %v238, 32
    %v249 = vpop.permute.xlu0 %248
    %250 = vrot.lane.b32.xlu0 %v239, 32
    %v251 = vpop.permute.xlu0 %250
    %v256 = vmul.f32 %v190, %v245
    %v257 = vmul.f32 %v205, %v247
    %v258 = vmul.f32 %v220, %v249
    %v259 = vmul.f32 %v235, %v251
    %v260 = vld [vmem:[%s3] sm:$0xff]
    %v261 = vld [vmem:[%s3 + $0x8] sm:$0xff]
    %v262 = vld [vmem:[%s3 + $0x10] sm:$0xff]
    %v263 = vld [vmem:[%s3 + $0x18] sm:$0xff]
    %v264 = vld [vmem:[%s3 + $0x20] sm:$0xff]
    %v265 = vld [vmem:[%s3 + $0x28] sm:$0xff]
    %v266 = vld [vmem:[%s3 + $0x30] sm:$0xff]
    %v267 = vld [vmem:[%s3 + $0x38] sm:$0xff]
    %v268 = vld [vmem:[%s1] sm:$0xff]
    %v269 = vld [vmem:[%s1 + $0x8] sm:$0xff]
    %v270 = vld [vmem:[%s1 + $0x10] sm:$0xff]
    %v271 = vld [vmem:[%s1 + $0x18] sm:$0xff]
    %vm272 = vcmask 261120
    %v274 = vsel %vm272, %v268, 0
    %v277 = vsel %vm272, %v269, 0
    %v280 = vsel %vm272, %v270, 0
    %v283 = vsel %vm272, %v271, 0
    %285 = vmatpush.msra.mxu0 0.0
    %286 = vmatpush.msra.mxu0 0.0
    %287 = vmatpush.msra.mxu0 0.0
    %288 = vmatpush.msra.mxu0 0.0
    %289 = vmatpush.msra.mxu0 0.0
    %290 = vmatpush.msra.mxu0 0.0
    %291 = vmatpush.msra.mxu0 0.0
    %292 = vmatpush.msra.mxu0 0.0
    %293 = vmatpush.msra.mxu0 0.0
    %294 = vmatpush.msra.mxu0 0.0
    %295 = vmatpush.msra.mxu0 0.0
    %296 = vmatpush.msra.mxu0 0.0
    %297 = vmatpush.msra.mxu0 %v266
    %298 = vmatpush.msra.mxu0 %v264
    %299 = vmatpush.msra.mxu0 %v262
    %300 = vmatpush.msra.mxu0 %v260
    %301 = vmatmul.f32.gmra.mxu0 %v274
    %v302 = vpop.f32.mrf.mxu0
    %v303 = vadd.f32 0.0, %v302
    %304 = vmatmul.f32.gmra.mxu0 %v277
    %v305 = vpop.f32.mrf.mxu0
    %v306 = vadd.f32 0.0, %v305
    %307 = vmatmul.f32.gmra.mxu0 %v280
    %v308 = vpop.f32.mrf.mxu0
    %v309 = vadd.f32 0.0, %v308
    %310 = vmatmul.f32.gmra.mxu0 %v283
    %v311 = vpop.f32.mrf.mxu0
    %v312 = vadd.f32 0.0, %v311
    %313 = vdwg.mxu0
    %v314 = vld [vmem:[%s4] sm:$0x1]
    %v315 = vld [vmem:[%s4] sm:$0x3]
    %v320 = vrot.slane %v91, 1
    %v321 = vrot.slane %v91, 2
    %v322 = vrot.slane %v91, 3
    %v323 = vrot.slane %v91, 4
    %v324 = vrot.slane %v91, 5
    %v325 = vrot.slane %v91, 6
    %v326 = vrot.slane %v91, 7
    %v327 = vrot.slane %v94, 1
    %v328 = vrot.slane %v94, 2
    %v329 = vrot.slane %v94, 3
    %v330 = vrot.slane %v94, 4
    %v331 = vrot.slane %v94, 5
    %v332 = vrot.slane %v94, 6
    %v333 = vrot.slane %v94, 7
    %v334 = vrot.slane %v97, 1
    %v335 = vrot.slane %v97, 2
    %v336 = vrot.slane %v97, 3
    %v337 = vrot.slane %v97, 4
    %v338 = vrot.slane %v97, 5
    %v339 = vrot.slane %v97, 6
    %v340 = vrot.slane %v97, 7
    %v341 = vrot.slane %v100, 1
    %v342 = vrot.slane %v100, 2
    %v343 = vrot.slane %v100, 3
    %v344 = vrot.slane %v100, 4
    %v345 = vrot.slane %v100, 5
    %v346 = vrot.slane %v100, 6
    %v347 = vrot.slane %v100, 7
    %v348 = vperm.slane %v91, 0
    %v349 = vperm.slane %v320, 0
    %v350 = vperm.slane %v321, 0
    %v351 = vperm.slane %v322, 0
    %v352 = vperm.slane %v323, 0
    %v353 = vperm.slane %v324, 0
    %v354 = vperm.slane %v325, 0
    %v355 = vperm.slane %v326, 0
    %v356 = vperm.slane %v94, 0
    %v357 = vperm.slane %v327, 0
    %v358 = vperm.slane %v328, 0
    %v359 = vperm.slane %v329, 0
    %v360 = vperm.slane %v330, 0
    %v361 = vperm.slane %v331, 0
    %v362 = vperm.slane %v332, 0
    %v363 = vperm.slane %v333, 0
    %v364 = vperm.slane %v97, 0
    %v365 = vperm.slane %v334, 0
    %v366 = vperm.slane %v335, 0
    %v367 = vperm.slane %v336, 0
    %v368 = vperm.slane %v337, 0
    %v369 = vperm.slane %v338, 0
    %v370 = vperm.slane %v339, 0
    %v371 = vperm.slane %v340, 0
    %v372 = vperm.slane %v100, 0
    %v373 = vperm.slane %v341, 0
    %v374 = vperm.slane %v342, 0
    %v375 = vperm.slane %v343, 0
    %v376 = vperm.slane %v344, 0
    %v377 = vperm.slane %v345, 0
    %v378 = vperm.slane %v346, 0
    %v379 = vperm.slane %v347, 0
    %v412 = vadd.f32 %v348, %v303
    %v413 = vadd.f32 %v349, %v303
    %v414 = vadd.f32 %v350, %v303
    %v415 = vadd.f32 %v351, %v303
    %v416 = vadd.f32 %v352, %v303
    %v417 = vadd.f32 %v353, %v303
    %v418 = vadd.f32 %v354, %v303
    %v419 = vadd.f32 %v355, %v303
    %v420 = vadd.f32 %v356, %v306
    %v421 = vadd.f32 %v357, %v306
    %v422 = vadd.f32 %v358, %v306
    %v423 = vadd.f32 %v359, %v306
    %v424 = vadd.f32 %v360, %v306
    %v425 = vadd.f32 %v361, %v306
    %v426 = vadd.f32 %v362, %v306
    %v427 = vadd.f32 %v363, %v306
    %v428 = vadd.f32 %v364, %v309
    %v429 = vadd.f32 %v365, %v309
    %v430 = vadd.f32 %v366, %v309
    %v431 = vadd.f32 %v367, %v309
    %v432 = vadd.f32 %v368, %v309
    %v433 = vadd.f32 %v369, %v309
    %v434 = vadd.f32 %v370, %v309
    %v435 = vadd.f32 %v371, %v309
    %v436 = vadd.f32 %v372, %v312
    %v437 = vadd.f32 %v373, %v312
    %v438 = vadd.f32 %v374, %v312
    %v439 = vadd.f32 %v375, %v312
    %v440 = vadd.f32 %v376, %v312
    %v441 = vadd.f32 %v377, %v312
    %v442 = vadd.f32 %v378, %v312
    %v443 = vadd.f32 %v379, %v312
    %v444 = vtanh.pop %v412
    %v445 = vtanh.pop %v413
    %v446 = vtanh.pop %v414
    %v447 = vtanh.pop %v415
    %v448 = vtanh.pop %v416
    %v449 = vtanh.pop %v417
    %v450 = vtanh.pop %v418
    %v451 = vtanh.pop %v419
    %v452 = vtanh.pop %v420
    %v453 = vtanh.pop %v421
    %v454 = vtanh.pop %v422
    %v455 = vtanh.pop %v423
    %v456 = vtanh.pop %v424
    %v457 = vtanh.pop %v425
    %v458 = vtanh.pop %v426
    %v459 = vtanh.pop %v427
    %v460 = vtanh.pop %v428
    %v461 = vtanh.pop %v429
    %v462 = vtanh.pop %v430
    %v463 = vtanh.pop %v431
    %v464 = vtanh.pop %v432
    %v465 = vtanh.pop %v433
    %v466 = vtanh.pop %v434
    %v467 = vtanh.pop %v435
    %v468 = vtanh.pop %v436
    %v469 = vtanh.pop %v437
    %v470 = vtanh.pop %v438
    %v471 = vtanh.pop %v439
    %v472 = vtanh.pop %v440
    %v473 = vtanh.pop %v441
    %v474 = vtanh.pop %v442
    %v475 = vtanh.pop %v443
    %v477 = vperm.slane %v314, 0
    %v479 = vmul.f32 %v444, %v477
    %v480 = vmul.f32 %v445, %v477
    %v481 = vmul.f32 %v446, %v477
    %v482 = vmul.f32 %v447, %v477
    %v483 = vmul.f32 %v448, %v477
    %v484 = vmul.f32 %v449, %v477
    %v485 = vmul.f32 %v450, %v477
    %v486 = vmul.f32 %v451, %v477
    %v487 = vmul.f32 %v452, %v477
    %v488 = vmul.f32 %v453, %v477
    %v489 = vmul.f32 %v454, %v477
    %v490 = vmul.f32 %v455, %v477
    %v491 = vmul.f32 %v456, %v477
    %v492 = vmul.f32 %v457, %v477
    %v493 = vmul.f32 %v458, %v477
    %v494 = vmul.f32 %v459, %v477
    %v495 = vmul.f32 %v460, %v477
    %v496 = vmul.f32 %v461, %v477
    %v497 = vmul.f32 %v462, %v477
    %v498 = vmul.f32 %v463, %v477
    %v499 = vmul.f32 %v464, %v477
    %v500 = vmul.f32 %v465, %v477
    %v501 = vmul.f32 %v466, %v477
    %v502 = vmul.f32 %v467, %v477
    %v503 = vmul.f32 %v468, %v477
    %v504 = vmul.f32 %v469, %v477
    %v505 = vmul.f32 %v470, %v477
    %v506 = vmul.f32 %v471, %v477
    %v507 = vmul.f32 %v472, %v477
    %v508 = vmul.f32 %v473, %v477
    %v509 = vmul.f32 %v474, %v477
    %v510 = vmul.f32 %v475, %v477
    %vm511 = vcmask 523264
    %v512 = vsel %vm511, %v479, 0.0
    %513 = vadd.xlane.f32.xlu0 %v512
    %v514 = vpop.xlane.xlu0 %513
    %v515 = vsel %vm511, %v480, 0.0
    %516 = vadd.xlane.f32.xlu0 %v515
    %v517 = vpop.xlane.xlu0 %516
    %v518 = vsel %vm511, %v481, 0.0
    %519 = vadd.xlane.f32.xlu0 %v518
    %v520 = vpop.xlane.xlu0 %519
    %v521 = vsel %vm511, %v482, 0.0
    %522 = vadd.xlane.f32.xlu0 %v521
    %v523 = vpop.xlane.xlu0 %522
    %v524 = vsel %vm511, %v483, 0.0
    %525 = vadd.xlane.f32.xlu0 %v524
    %v526 = vpop.xlane.xlu0 %525
    %v527 = vsel %vm511, %v484, 0.0
    %528 = vadd.xlane.f32.xlu0 %v527
    %v529 = vpop.xlane.xlu0 %528
    %v530 = vsel %vm511, %v485, 0.0
    %531 = vadd.xlane.f32.xlu0 %v530
    %v532 = vpop.xlane.xlu0 %531
    %v533 = vsel %vm511, %v486, 0.0
    %534 = vadd.xlane.f32.xlu0 %v533
    %v535 = vpop.xlane.xlu0 %534
    %v536 = vsel %vm511, %v487, 0.0
    %537 = vadd.xlane.f32.xlu0 %v536
    %v538 = vpop.xlane.xlu0 %537
    %v539 = vsel %vm511, %v488, 0.0
    %540 = vadd.xlane.f32.xlu0 %v539
    %v541 = vpop.xlane.xlu0 %540
    %v542 = vsel %vm511, %v489, 0.0
    %543 = vadd.xlane.f32.xlu0 %v542
    %v544 = vpop.xlane.xlu0 %543
    %v545 = vsel %vm511, %v490, 0.0
    %546 = vadd.xlane.f32.xlu0 %v545
    %v547 = vpop.xlane.xlu0 %546
    %v548 = vsel %vm511, %v491, 0.0
    %549 = vadd.xlane.f32.xlu0 %v548
    %v550 = vpop.xlane.xlu0 %549
    %v551 = vsel %vm511, %v492, 0.0
    %552 = vadd.xlane.f32.xlu0 %v551
    %v553 = vpop.xlane.xlu0 %552
    %v554 = vsel %vm511, %v493, 0.0
    %555 = vadd.xlane.f32.xlu0 %v554
    %v556 = vpop.xlane.xlu0 %555
    %v557 = vsel %vm511, %v494, 0.0
    %558 = vadd.xlane.f32.xlu0 %v557
    %v559 = vpop.xlane.xlu0 %558
    %v560 = vsel %vm511, %v495, 0.0
    %561 = vadd.xlane.f32.xlu0 %v560
    %v562 = vpop.xlane.xlu0 %561
    %v563 = vsel %vm511, %v496, 0.0
    %564 = vadd.xlane.f32.xlu0 %v563
    %v565 = vpop.xlane.xlu0 %564
    %v566 = vsel %vm511, %v497, 0.0
    %567 = vadd.xlane.f32.xlu0 %v566
    %v568 = vpop.xlane.xlu0 %567
    %v569 = vsel %vm511, %v498, 0.0
    %570 = vadd.xlane.f32.xlu0 %v569
    %v571 = vpop.xlane.xlu0 %570
    %v572 = vsel %vm511, %v499, 0.0
    %573 = vadd.xlane.f32.xlu0 %v572
    %v574 = vpop.xlane.xlu0 %573
    %v575 = vsel %vm511, %v500, 0.0
    %576 = vadd.xlane.f32.xlu0 %v575
    %v577 = vpop.xlane.xlu0 %576
    %v578 = vsel %vm511, %v501, 0.0
    %579 = vadd.xlane.f32.xlu0 %v578
    %v580 = vpop.xlane.xlu0 %579
    %v581 = vsel %vm511, %v502, 0.0
    %582 = vadd.xlane.f32.xlu0 %v581
    %v583 = vpop.xlane.xlu0 %582
    %v584 = vsel %vm511, %v503, 0.0
    %585 = vadd.xlane.f32.xlu0 %v584
    %v586 = vpop.xlane.xlu0 %585
    %v587 = vsel %vm511, %v504, 0.0
    %588 = vadd.xlane.f32.xlu0 %v587
    %v589 = vpop.xlane.xlu0 %588
    %v590 = vsel %vm511, %v505, 0.0
    %591 = vadd.xlane.f32.xlu0 %v590
    %v592 = vpop.xlane.xlu0 %591
    %v593 = vsel %vm511, %v506, 0.0
    %594 = vadd.xlane.f32.xlu0 %v593
    %v595 = vpop.xlane.xlu0 %594
    %v596 = vsel %vm511, %v507, 0.0
    %597 = vadd.xlane.f32.xlu0 %v596
    %v598 = vpop.xlane.xlu0 %597
    %v599 = vsel %vm511, %v508, 0.0
    %600 = vadd.xlane.f32.xlu0 %v599
    %v601 = vpop.xlane.xlu0 %600
    %v602 = vsel %vm511, %v509, 0.0
    %603 = vadd.xlane.f32.xlu0 %v602
    %v604 = vpop.xlane.xlu0 %603
    %v605 = vsel %vm511, %v510, 0.0
    %606 = vadd.xlane.f32.xlu0 %v605
    %v607 = vpop.xlane.xlu0 %606
    %612 = vrot.lane.b32.xlu0 %v260, 64
    %v613 = vpop.permute.xlu0 %612
    %614 = vrot.lane.b32.xlu0 %v262, 64
    %v615 = vpop.permute.xlu0 %614
    %616 = vrot.lane.b32.xlu0 %v264, 64
    %v617 = vpop.permute.xlu0 %616
    %618 = vrot.lane.b32.xlu0 %v266, 64
    %v619 = vpop.permute.xlu0 %618
    %624 = vrot.lane.b32.xlu0 %v91, 64
    %v625 = vpop.permute.xlu0 %624
    %626 = vrot.lane.b32.xlu0 %v94, 64
    %v627 = vpop.permute.xlu0 %626
    %628 = vrot.lane.b32.xlu0 %v97, 64
    %v629 = vpop.permute.xlu0 %628
    %630 = vrot.lane.b32.xlu0 %v100, 64
    %v631 = vpop.permute.xlu0 %630
    %v637 = vsel %vm272, %v256, 0
    %v640 = vsel %vm272, %v257, 0
    %v643 = vsel %vm272, %v258, 0
    %v646 = vsel %vm272, %v259, 0
    %648 = vmatpush.msra.mxu0 0.0
    %649 = vmatpush.msra.mxu0 0.0
    %650 = vmatpush.msra.mxu0 0.0
    %651 = vmatpush.msra.mxu0 0.0
    %652 = vmatpush.msra.mxu0 0.0
    %653 = vmatpush.msra.mxu0 0.0
    %654 = vmatpush.msra.mxu0 0.0
    %655 = vmatpush.msra.mxu0 0.0
    %656 = vmatpush.msra.mxu0 0.0
    %657 = vmatpush.msra.mxu0 0.0
    %658 = vmatpush.msra.mxu0 0.0
    %659 = vmatpush.msra.mxu0 0.0
    %660 = vmatpush.msra.mxu0 %v619
    %661 = vmatpush.msra.mxu0 %v617
    %662 = vmatpush.msra.mxu0 %v615
    %663 = vmatpush.msra.mxu0 %v613
    %664 = vmatmul.f32.gmra.mxu0 %v637
    %v665 = vpop.f32.mrf.mxu0
    %v666 = vadd.f32 %v625, %v665
    %667 = vmatmul.f32.gmra.mxu0 %v640
    %v668 = vpop.f32.mrf.mxu0
    %v669 = vadd.f32 %v627, %v668
    %670 = vmatmul.f32.gmra.mxu0 %v643
    %v671 = vpop.f32.mrf.mxu0
    %v672 = vadd.f32 %v629, %v671
    %673 = vmatmul.f32.gmra.mxu0 %v646
    %v674 = vpop.f32.mrf.mxu0
    %v675 = vadd.f32 %v631, %v674
    %676 = vdwg.mxu0
    %v677 = vtanh.pop %v666
    %v678 = vtanh.pop %v669
    %v679 = vtanh.pop %v672
    %v680 = vtanh.pop %v675
    %v681 = vmul.f32 %v677, %v477
    %v682 = vmul.f32 %v678, %v477
    %v683 = vmul.f32 %v679, %v477
    %v684 = vmul.f32 %v680, %v477
    %v685 = vsel %vm511, %v681, 0.0
    %686 = vadd.xlane.f32.xlu0 %v685
    %v687 = vpop.xlane.xlu0 %686
    %v688 = vsel %vm511, %v682, 0.0
    %689 = vadd.xlane.f32.xlu0 %v688
    %v690 = vpop.xlane.xlu0 %689
    %v691 = vsel %vm511, %v683, 0.0
    %692 = vadd.xlane.f32.xlu0 %v691
    %v693 = vpop.xlane.xlu0 %692
    %v694 = vsel %vm511, %v684, 0.0
    %695 = vadd.xlane.f32.xlu0 %v694
    %v696 = vpop.xlane.xlu0 %695
    %v729 = vlaneseq
    %v730 = vand.u32 %v729, 127
    %v731 = vperm.slane %v514, %v730
    %v732 = vperm.slane %v517, %v730
    %v733 = vperm.slane %v520, %v730
    %v734 = vperm.slane %v523, %v730
    %v735 = vperm.slane %v526, %v730
    %v736 = vperm.slane %v529, %v730
    %v737 = vperm.slane %v532, %v730
    %v738 = vperm.slane %v535, %v730
    %v739 = vperm.slane %v538, %v730
    %v740 = vperm.slane %v541, %v730
    %v741 = vperm.slane %v544, %v730
    %v742 = vperm.slane %v547, %v730
    %v743 = vperm.slane %v550, %v730
    %v744 = vperm.slane %v553, %v730
    %v745 = vperm.slane %v556, %v730
    %v746 = vperm.slane %v559, %v730
    %v747 = vperm.slane %v562, %v730
    %v748 = vperm.slane %v565, %v730
    %v749 = vperm.slane %v568, %v730
    %v750 = vperm.slane %v571, %v730
    %v751 = vperm.slane %v574, %v730
    %v752 = vperm.slane %v577, %v730
    %v753 = vperm.slane %v580, %v730
    %v754 = vperm.slane %v583, %v730
    %v755 = vperm.slane %v586, %v730
    %v756 = vperm.slane %v589, %v730
    %v757 = vperm.slane %v592, %v730
    %v758 = vperm.slane %v595, %v730
    %v759 = vperm.slane %v598, %v730
    %v760 = vperm.slane %v601, %v730
    %v761 = vperm.slane %v604, %v730
    %v762 = vperm.slane %v607, %v730
    %vm763 = vcmask 1041409
    %v764 = vsel %vm763, %v732, %v731
    %vm765 = vcmask 1042434
    %v766 = vsel %vm765, %v733, %v764
    %vm767 = vcmask 1043459
    %v768 = vsel %vm767, %v734, %v766
    %vm769 = vcmask 1044484
    %v770 = vsel %vm769, %v735, %v768
    %vm771 = vcmask 1045509
    %v772 = vsel %vm771, %v736, %v770
    %vm773 = vcmask 1046534
    %v774 = vsel %vm773, %v737, %v772
    %vm775 = vcmask 1047559
    %v776 = vsel %vm775, %v738, %v774
    %v777 = vsel %vm763, %v740, %v739
    %v778 = vsel %vm765, %v741, %v777
    %v779 = vsel %vm767, %v742, %v778
    %v780 = vsel %vm769, %v743, %v779
    %v781 = vsel %vm771, %v744, %v780
    %v782 = vsel %vm773, %v745, %v781
    %v783 = vsel %vm775, %v746, %v782
    %v784 = vsel %vm763, %v748, %v747
    %v785 = vsel %vm765, %v749, %v784
    %v786 = vsel %vm767, %v750, %v785
    %v787 = vsel %vm769, %v751, %v786
    %v788 = vsel %vm771, %v752, %v787
    %v789 = vsel %vm773, %v753, %v788
    %v790 = vsel %vm775, %v754, %v789
    %v791 = vsel %vm763, %v756, %v755
    %v792 = vsel %vm765, %v757, %v791
    %v793 = vsel %vm767, %v758, %v792
    %v794 = vsel %vm769, %v759, %v793
    %v795 = vsel %vm771, %v760, %v794
    %v796 = vsel %vm773, %v761, %v795
    %v797 = vsel %vm775, %v762, %v796
    %vm802 = vcmask 64512
    %v803 = vsel %vm802, %v776, -inf
    %804 = vmax.xlane.f32.xlu0 %v803
    %v805 = vpop.xlane.xlu0 %804
    %v806 = vsel %vm802, %v783, -inf
    %807 = vmax.xlane.f32.xlu0 %v806
    %v808 = vpop.xlane.xlu0 %807
    %v809 = vsel %vm802, %v790, -inf
    %810 = vmax.xlane.f32.xlu0 %v809
    %v811 = vpop.xlane.xlu0 %810
    %v812 = vsel %vm802, %v797, -inf
    %813 = vmax.xlane.f32.xlu0 %v812
    %v814 = vpop.xlane.xlu0 %813
    %v815 = vmax.f32 %v805, %v687
    %v816 = vmax.f32 %v808, %v690
    %v817 = vmax.f32 %v811, %v693
    %v818 = vmax.f32 %v814, %v696
    %v823 = vperm.slane %v815, 0
    %v824 = vperm.slane %v815, 1
    %v825 = vperm.slane %v815, 2
    %v826 = vperm.slane %v815, 3
    %v827 = vperm.slane %v815, 4
    %v828 = vperm.slane %v815, 5
    %v829 = vperm.slane %v815, 6
    %v830 = vperm.slane %v815, 7
    %v831 = vperm.slane %v816, 0
    %v832 = vperm.slane %v816, 1
    %v833 = vperm.slane %v816, 2
    %v834 = vperm.slane %v816, 3
    %v835 = vperm.slane %v816, 4
    %v836 = vperm.slane %v816, 5
    %v837 = vperm.slane %v816, 6
    %v838 = vperm.slane %v816, 7
    %v839 = vperm.slane %v817, 0
    %v840 = vperm.slane %v817, 1
    %v841 = vperm.slane %v817, 2
    %v842 = vperm.slane %v817, 3
    %v843 = vperm.slane %v817, 4
    %v844 = vperm.slane %v817, 5
    %v845 = vperm.slane %v817, 6
    %v846 = vperm.slane %v817, 7
    %v847 = vperm.slane %v818, 0
    %v848 = vperm.slane %v818, 1
    %v849 = vperm.slane %v818, 2
    %v850 = vperm.slane %v818, 3
    %v851 = vperm.slane %v818, 4
    %v852 = vperm.slane %v818, 5
    %v853 = vperm.slane %v818, 6
    %v854 = vperm.slane %v818, 7
    %v887 = vsub.f32 %v514, %v823
    %v888 = vsub.f32 %v517, %v824
    %v889 = vsub.f32 %v520, %v825
    %v890 = vsub.f32 %v523, %v826
    %v891 = vsub.f32 %v526, %v827
    %v892 = vsub.f32 %v529, %v828
    %v893 = vsub.f32 %v532, %v829
    %v894 = vsub.f32 %v535, %v830
    %v895 = vsub.f32 %v538, %v831
    %v896 = vsub.f32 %v541, %v832
    %v897 = vsub.f32 %v544, %v833
    %v898 = vsub.f32 %v547, %v834
    %v899 = vsub.f32 %v550, %v835
    %v900 = vsub.f32 %v553, %v836
    %v901 = vsub.f32 %v556, %v837
    %v902 = vsub.f32 %v559, %v838
    %v903 = vsub.f32 %v562, %v839
    %v904 = vsub.f32 %v565, %v840
    %v905 = vsub.f32 %v568, %v841
    %v906 = vsub.f32 %v571, %v842
    %v907 = vsub.f32 %v574, %v843
    %v908 = vsub.f32 %v577, %v844
    %v909 = vsub.f32 %v580, %v845
    %v910 = vsub.f32 %v583, %v846
    %v911 = vsub.f32 %v586, %v847
    %v912 = vsub.f32 %v589, %v848
    %v913 = vsub.f32 %v592, %v849
    %v914 = vsub.f32 %v595, %v850
    %v915 = vsub.f32 %v598, %v851
    %v916 = vsub.f32 %v601, %v852
    %v917 = vsub.f32 %v604, %v853
    %v918 = vsub.f32 %v607, %v854
    %v919 = vmul.f32 %v887, 1.442695
    %v920 = vpow.pop %v919
    %v921 = vmul.f32 %v888, 1.442695
    %v922 = vpow.pop %v921
    %v923 = vmul.f32 %v889, 1.442695
    %v924 = vpow.pop %v923
    %v925 = vmul.f32 %v890, 1.442695
    %v926 = vpow.pop %v925
    %v927 = vmul.f32 %v891, 1.442695
    %v928 = vpow.pop %v927
    %v929 = vmul.f32 %v892, 1.442695
    %v930 = vpow.pop %v929
    %v931 = vmul.f32 %v893, 1.442695
    %v932 = vpow.pop %v931
    %v933 = vmul.f32 %v894, 1.442695
    %v934 = vpow.pop %v933
    %v935 = vmul.f32 %v895, 1.442695
    %v936 = vpow.pop %v935
    %v937 = vmul.f32 %v896, 1.442695
    %v938 = vpow.pop %v937
    %v939 = vmul.f32 %v897, 1.442695
    %v940 = vpow.pop %v939
    %v941 = vmul.f32 %v898, 1.442695
    %v942 = vpow.pop %v941
    %v943 = vmul.f32 %v899, 1.442695
    %v944 = vpow.pop %v943
    %v945 = vmul.f32 %v900, 1.442695
    %v946 = vpow.pop %v945
    %v947 = vmul.f32 %v901, 1.442695
    %v948 = vpow.pop %v947
    %v949 = vmul.f32 %v902, 1.442695
    %v950 = vpow.pop %v949
    %v951 = vmul.f32 %v903, 1.442695
    %v952 = vpow.pop %v951
    %v953 = vmul.f32 %v904, 1.442695
    %v954 = vpow.pop %v953
    %v955 = vmul.f32 %v905, 1.442695
    %v956 = vpow.pop %v955
    %v957 = vmul.f32 %v906, 1.442695
    %v958 = vpow.pop %v957
    %v959 = vmul.f32 %v907, 1.442695
    %v960 = vpow.pop %v959
    %v961 = vmul.f32 %v908, 1.442695
    %v962 = vpow.pop %v961
    %v963 = vmul.f32 %v909, 1.442695
    %v964 = vpow.pop %v963
    %v965 = vmul.f32 %v910, 1.442695
    %v966 = vpow.pop %v965
    %v967 = vmul.f32 %v911, 1.442695
    %v968 = vpow.pop %v967
    %v969 = vmul.f32 %v912, 1.442695
    %v970 = vpow.pop %v969
    %v971 = vmul.f32 %v913, 1.442695
    %v972 = vpow.pop %v971
    %v973 = vmul.f32 %v914, 1.442695
    %v974 = vpow.pop %v973
    %v975 = vmul.f32 %v915, 1.442695
    %v976 = vpow.pop %v975
    %v977 = vmul.f32 %v916, 1.442695
    %v978 = vpow.pop %v977
    %v979 = vmul.f32 %v917, 1.442695
    %v980 = vpow.pop %v979
    %v981 = vmul.f32 %v918, 1.442695
    %v982 = vpow.pop %v981
    %v983 = vsub.f32 %v687, %v815
    %v984 = vsub.f32 %v690, %v816
    %v985 = vsub.f32 %v693, %v817
    %v986 = vsub.f32 %v696, %v818
    %v987 = vmul.f32 %v983, 1.442695
    %v988 = vpow.pop %v987
    %v989 = vmul.f32 %v984, 1.442695
    %v990 = vpow.pop %v989
    %v991 = vmul.f32 %v985, 1.442695
    %v992 = vpow.pop %v991
    %v993 = vmul.f32 %v986, 1.442695
    %v994 = vpow.pop %v993
    %1027 = vset.pattern.permute.xlu0 0
    %1028 = vperm.xlu0 %1027, %v920
    %v1029 = vpop.permute.xlu0 %1028
    %1030 = vset.pattern.permute.xlu0 0
    %1031 = vperm.xlu0 %1030, %v922
    %v1032 = vpop.permute.xlu0 %1031
    %1033 = vset.pattern.permute.xlu0 0
    %1034 = vperm.xlu0 %1033, %v924
    %v1035 = vpop.permute.xlu0 %1034
    %1036 = vset.pattern.permute.xlu0 0
    %1037 = vperm.xlu0 %1036, %v926
    %v1038 = vpop.permute.xlu0 %1037
    %1039 = vset.pattern.permute.xlu0 0
    %1040 = vperm.xlu0 %1039, %v928
    %v1041 = vpop.permute.xlu0 %1040
    %1042 = vset.pattern.permute.xlu0 0
    %1043 = vperm.xlu0 %1042, %v930
    %v1044 = vpop.permute.xlu0 %1043
    %1045 = vset.pattern.permute.xlu0 0
    %1046 = vperm.xlu0 %1045, %v932
    %v1047 = vpop.permute.xlu0 %1046
    %1048 = vset.pattern.permute.xlu0 0
    %1049 = vperm.xlu0 %1048, %v934
    %v1050 = vpop.permute.xlu0 %1049
    %1051 = vset.pattern.permute.xlu0 0
    %1052 = vperm.xlu0 %1051, %v936
    %v1053 = vpop.permute.xlu0 %1052
    %1054 = vset.pattern.permute.xlu0 0
    %1055 = vperm.xlu0 %1054, %v938
    %v1056 = vpop.permute.xlu0 %1055
    %1057 = vset.pattern.permute.xlu0 0
    %1058 = vperm.xlu0 %1057, %v940
    %v1059 = vpop.permute.xlu0 %1058
    %1060 = vset.pattern.permute.xlu0 0
    %1061 = vperm.xlu0 %1060, %v942
    %v1062 = vpop.permute.xlu0 %1061
    %1063 = vset.pattern.permute.xlu0 0
    %1064 = vperm.xlu0 %1063, %v944
    %v1065 = vpop.permute.xlu0 %1064
    %1066 = vset.pattern.permute.xlu0 0
    %1067 = vperm.xlu0 %1066, %v946
    %v1068 = vpop.permute.xlu0 %1067
    %1069 = vset.pattern.permute.xlu0 0
    %1070 = vperm.xlu0 %1069, %v948
    %v1071 = vpop.permute.xlu0 %1070
    %1072 = vset.pattern.permute.xlu0 0
    %1073 = vperm.xlu0 %1072, %v950
    %v1074 = vpop.permute.xlu0 %1073
    %1075 = vset.pattern.permute.xlu0 0
    %1076 = vperm.xlu0 %1075, %v952
    %v1077 = vpop.permute.xlu0 %1076
    %1078 = vset.pattern.permute.xlu0 0
    %1079 = vperm.xlu0 %1078, %v954
    %v1080 = vpop.permute.xlu0 %1079
    %1081 = vset.pattern.permute.xlu0 0
    %1082 = vperm.xlu0 %1081, %v956
    %v1083 = vpop.permute.xlu0 %1082
    %1084 = vset.pattern.permute.xlu0 0
    %1085 = vperm.xlu0 %1084, %v958
    %v1086 = vpop.permute.xlu0 %1085
    %1087 = vset.pattern.permute.xlu0 0
    %1088 = vperm.xlu0 %1087, %v960
    %v1089 = vpop.permute.xlu0 %1088
    %1090 = vset.pattern.permute.xlu0 0
    %1091 = vperm.xlu0 %1090, %v962
    %v1092 = vpop.permute.xlu0 %1091
    %1093 = vset.pattern.permute.xlu0 0
    %1094 = vperm.xlu0 %1093, %v964
    %v1095 = vpop.permute.xlu0 %1094
    %1096 = vset.pattern.permute.xlu0 0
    %1097 = vperm.xlu0 %1096, %v966
    %v1098 = vpop.permute.xlu0 %1097
    %1099 = vset.pattern.permute.xlu0 0
    %1100 = vperm.xlu0 %1099, %v968
    %v1101 = vpop.permute.xlu0 %1100
    %1102 = vset.pattern.permute.xlu0 0
    %1103 = vperm.xlu0 %1102, %v970
    %v1104 = vpop.permute.xlu0 %1103
    %1105 = vset.pattern.permute.xlu0 0
    %1106 = vperm.xlu0 %1105, %v972
    %v1107 = vpop.permute.xlu0 %1106
    %1108 = vset.pattern.permute.xlu0 0
    %1109 = vperm.xlu0 %1108, %v974
    %v1110 = vpop.permute.xlu0 %1109
    %1111 = vset.pattern.permute.xlu0 0
    %1112 = vperm.xlu0 %1111, %v976
    %v1113 = vpop.permute.xlu0 %1112
    %1114 = vset.pattern.permute.xlu0 0
    %1115 = vperm.xlu0 %1114, %v978
    %v1116 = vpop.permute.xlu0 %1115
    %1117 = vset.pattern.permute.xlu0 0
    %1118 = vperm.xlu0 %1117, %v980
    %v1119 = vpop.permute.xlu0 %1118
    %1120 = vset.pattern.permute.xlu0 0
    %1121 = vperm.xlu0 %1120, %v982
    %v1122 = vpop.permute.xlu0 %1121
    %v1123 = vperm.slane %v1029, %v730
    %v1124 = vperm.slane %v1032, %v730
    %v1125 = vperm.slane %v1035, %v730
    %v1126 = vperm.slane %v1038, %v730
    %v1127 = vperm.slane %v1041, %v730
    %v1128 = vperm.slane %v1044, %v730
    %v1129 = vperm.slane %v1047, %v730
    %v1130 = vperm.slane %v1050, %v730
    %v1131 = vperm.slane %v1053, %v730
    %v1132 = vperm.slane %v1056, %v730
    %v1133 = vperm.slane %v1059, %v730
    %v1134 = vperm.slane %v1062, %v730
    %v1135 = vperm.slane %v1065, %v730
    %v1136 = vperm.slane %v1068, %v730
    %v1137 = vperm.slane %v1071, %v730
    %v1138 = vperm.slane %v1074, %v730
    %v1139 = vperm.slane %v1077, %v730
    %v1140 = vperm.slane %v1080, %v730
    %v1141 = vperm.slane %v1083, %v730
    %v1142 = vperm.slane %v1086, %v730
    %v1143 = vperm.slane %v1089, %v730
    %v1144 = vperm.slane %v1092, %v730
    %v1145 = vperm.slane %v1095, %v730
    %v1146 = vperm.slane %v1098, %v730
    %v1147 = vperm.slane %v1101, %v730
    %v1148 = vperm.slane %v1104, %v730
    %v1149 = vperm.slane %v1107, %v730
    %v1150 = vperm.slane %v1110, %v730
    %v1151 = vperm.slane %v1113, %v730
    %v1152 = vperm.slane %v1116, %v730
    %v1153 = vperm.slane %v1119, %v730
    %v1154 = vperm.slane %v1122, %v730
    %v1155 = vsel %vm763, %v1124, %v1123
    %v1156 = vsel %vm765, %v1125, %v1155
    %v1157 = vsel %vm767, %v1126, %v1156
    %v1158 = vsel %vm769, %v1127, %v1157
    %v1159 = vsel %vm771, %v1128, %v1158
    %v1160 = vsel %vm773, %v1129, %v1159
    %v1161 = vsel %vm775, %v1130, %v1160
    %v1162 = vsel %vm763, %v1132, %v1131
    %v1163 = vsel %vm765, %v1133, %v1162
    %v1164 = vsel %vm767, %v1134, %v1163
    %v1165 = vsel %vm769, %v1135, %v1164
    %v1166 = vsel %vm771, %v1136, %v1165
    %v1167 = vsel %vm773, %v1137, %v1166
    %v1168 = vsel %vm775, %v1138, %v1167
    %v1169 = vsel %vm763, %v1140, %v1139
    %v1170 = vsel %vm765, %v1141, %v1169
    %v1171 = vsel %vm767, %v1142, %v1170
    %v1172 = vsel %vm769, %v1143, %v1171
    %v1173 = vsel %vm771, %v1144, %v1172
    %v1174 = vsel %vm773, %v1145, %v1173
    %v1175 = vsel %vm775, %v1146, %v1174
    %v1176 = vsel %vm763, %v1148, %v1147
    %v1177 = vsel %vm765, %v1149, %v1176
    %v1178 = vsel %vm767, %v1150, %v1177
    %v1179 = vsel %vm769, %v1151, %v1178
    %v1180 = vsel %vm771, %v1152, %v1179
    %v1181 = vsel %vm773, %v1153, %v1180
    %v1182 = vsel %vm775, %v1154, %v1181
    %v1187 = vsel %vm802, %v1161, 0.0
    %1188 = vadd.xlane.f32.xlu0 %v1187
    %v1189 = vpop.xlane.xlu0 %1188
    %v1190 = vsel %vm802, %v1168, 0.0
    %1191 = vadd.xlane.f32.xlu0 %v1190
    %v1192 = vpop.xlane.xlu0 %1191
    %v1193 = vsel %vm802, %v1175, 0.0
    %1194 = vadd.xlane.f32.xlu0 %v1193
    %v1195 = vpop.xlane.xlu0 %1194
    %v1196 = vsel %vm802, %v1182, 0.0
    %1197 = vadd.xlane.f32.xlu0 %v1196
    %v1198 = vpop.xlane.xlu0 %1197
    %v1199 = vadd.f32 %v1189, %v988
    %v1200 = vadd.f32 %v1192, %v990
    %v1201 = vadd.f32 %v1195, %v992
    %v1202 = vadd.f32 %v1198, %v994
    %v1203 = vrcp.pop %v1199
    %v1204 = vmul.f32 %v1199, %v1203
    %v1205 = vsub.f32 1.0, %v1204
    %v1206 = vmul.f32 %v1203, %v1205
    %v1207 = vadd.f32 %v1203, %v1206
    %vm1208 = vweird.f32 %v1199
    %vm1209 = vweird.f32 %v1203
    %vm1210 = vmor %vm1208, %vm1209
    %v1211 = vsel %vm1210, %v1203, %v1207
    %v1212 = vand.u32 2147483647, %v1199
    %vm1213 = vcmp.eq.f32.partialorder %v1212, 8.507059e+37
    %v1214 = vand.u32 %v1199, 2147483648
    %v1215 = vor.u32 1.1754944e-38, %v1214
    %v1216 = vsel %vm1213, %v1215, %v1211
    %v1217 = vmul.f32 1.0, %v1216
    %v1218 = vrcp.pop %v1200
    %v1219 = vmul.f32 %v1200, %v1218
    %v1220 = vsub.f32 1.0, %v1219
    %v1221 = vmul.f32 %v1218, %v1220
    %v1222 = vadd.f32 %v1218, %v1221
    %vm1223 = vweird.f32 %v1200
    %vm1224 = vweird.f32 %v1218
    %vm1225 = vmor %vm1223, %vm1224
    %v1226 = vsel %vm1225, %v1218, %v1222
    %v1227 = vand.u32 2147483647, %v1200
    %vm1228 = vcmp.eq.f32.partialorder %v1227, 8.507059e+37
    %v1229 = vand.u32 %v1200, 2147483648
    %v1230 = vor.u32 1.1754944e-38, %v1229
    %v1231 = vsel %vm1228, %v1230, %v1226
    %v1232 = vmul.f32 1.0, %v1231
    %v1233 = vrcp.pop %v1201
    %v1234 = vmul.f32 %v1201, %v1233
    %v1235 = vsub.f32 1.0, %v1234
    %v1236 = vmul.f32 %v1233, %v1235
    %v1237 = vadd.f32 %v1233, %v1236
    %vm1238 = vweird.f32 %v1201
    %vm1239 = vweird.f32 %v1233
    %vm1240 = vmor %vm1238, %vm1239
    %v1241 = vsel %vm1240, %v1233, %v1237
    %v1242 = vand.u32 2147483647, %v1201
    %vm1243 = vcmp.eq.f32.partialorder %v1242, 8.507059e+37
    %v1244 = vand.u32 %v1201, 2147483648
    %v1245 = vor.u32 1.1754944e-38, %v1244
    %v1246 = vsel %vm1243, %v1245, %v1241
    %v1247 = vmul.f32 1.0, %v1246
    %v1248 = vrcp.pop %v1202
    %v1249 = vmul.f32 %v1202, %v1248
    %v1250 = vsub.f32 1.0, %v1249
    %v1251 = vmul.f32 %v1248, %v1250
    %v1252 = vadd.f32 %v1248, %v1251
    %vm1253 = vweird.f32 %v1202
    %vm1254 = vweird.f32 %v1248
    %vm1255 = vmor %vm1253, %vm1254
    %v1256 = vsel %vm1255, %v1248, %v1252
    %v1257 = vand.u32 2147483647, %v1202
    %vm1258 = vcmp.eq.f32.partialorder %v1257, 8.507059e+37
    %v1259 = vand.u32 %v1202, 2147483648
    %v1260 = vor.u32 1.1754944e-38, %v1259
    %v1261 = vsel %vm1258, %v1260, %v1256
    %v1262 = vmul.f32 1.0, %v1261
    %v1267 = vperm.slane %v1217, 0
    %v1268 = vperm.slane %v1217, 1
    %v1269 = vperm.slane %v1217, 2
    %v1270 = vperm.slane %v1217, 3
    %v1271 = vperm.slane %v1217, 4
    %v1272 = vperm.slane %v1217, 5
    %v1273 = vperm.slane %v1217, 6
    %v1274 = vperm.slane %v1217, 7
    %v1275 = vperm.slane %v1232, 0
    %v1276 = vperm.slane %v1232, 1
    %v1277 = vperm.slane %v1232, 2
    %v1278 = vperm.slane %v1232, 3
    %v1279 = vperm.slane %v1232, 4
    %v1280 = vperm.slane %v1232, 5
    %v1281 = vperm.slane %v1232, 6
    %v1282 = vperm.slane %v1232, 7
    %v1283 = vperm.slane %v1247, 0
    %v1284 = vperm.slane %v1247, 1
    %v1285 = vperm.slane %v1247, 2
    %v1286 = vperm.slane %v1247, 3
    %v1287 = vperm.slane %v1247, 4
    %v1288 = vperm.slane %v1247, 5
    %v1289 = vperm.slane %v1247, 6
    %v1290 = vperm.slane %v1247, 7
    %v1291 = vperm.slane %v1262, 0
    %v1292 = vperm.slane %v1262, 1
    %v1293 = vperm.slane %v1262, 2
    %v1294 = vperm.slane %v1262, 3
    %v1295 = vperm.slane %v1262, 4
    %v1296 = vperm.slane %v1262, 5
    %v1297 = vperm.slane %v1262, 6
    %v1298 = vperm.slane %v1262, 7
    %v1331 = vmul.f32 %v920, %v1267
    %v1332 = vmul.f32 %v922, %v1268
    %v1333 = vmul.f32 %v924, %v1269
    %v1334 = vmul.f32 %v926, %v1270
    %v1335 = vmul.f32 %v928, %v1271
    %v1336 = vmul.f32 %v930, %v1272
    %v1337 = vmul.f32 %v932, %v1273
    %v1338 = vmul.f32 %v934, %v1274
    %v1339 = vmul.f32 %v936, %v1275
    %v1340 = vmul.f32 %v938, %v1276
    %v1341 = vmul.f32 %v940, %v1277
    %v1342 = vmul.f32 %v942, %v1278
    %v1343 = vmul.f32 %v944, %v1279
    %v1344 = vmul.f32 %v946, %v1280
    %v1345 = vmul.f32 %v948, %v1281
    %v1346 = vmul.f32 %v950, %v1282
    %v1347 = vmul.f32 %v952, %v1283
    %v1348 = vmul.f32 %v954, %v1284
    %v1349 = vmul.f32 %v956, %v1285
    %v1350 = vmul.f32 %v958, %v1286
    %v1351 = vmul.f32 %v960, %v1287
    %v1352 = vmul.f32 %v962, %v1288
    %v1353 = vmul.f32 %v964, %v1289
    %v1354 = vmul.f32 %v966, %v1290
    %v1355 = vmul.f32 %v968, %v1291
    %v1356 = vmul.f32 %v970, %v1292
    %v1357 = vmul.f32 %v972, %v1293
    %v1358 = vmul.f32 %v974, %v1294
    %v1359 = vmul.f32 %v976, %v1295
    %v1360 = vmul.f32 %v978, %v1296
    %v1361 = vmul.f32 %v980, %v1297
    %v1362 = vmul.f32 %v982, %v1298
    %v1363 = vmul.f32 %v988, %v1217
    %v1364 = vmul.f32 %v990, %v1232
    %v1365 = vmul.f32 %v992, %v1247
    %v1366 = vmul.f32 %v994, %v1262
    %v1367 = vperm.slane %v1331, 0
    %v1368 = vperm.slane %v1332, 0
    %v1369 = vperm.slane %v1333, 0
    %v1370 = vperm.slane %v1334, 0
    %v1371 = vperm.slane %v1335, 0
    %v1372 = vperm.slane %v1336, 0
    %v1373 = vperm.slane %v1337, 0
    %v1374 = vperm.slane %v1338, 0
    %v1375 = vperm.slane %v1339, 0
    %v1376 = vperm.slane %v1340, 0
    %v1377 = vperm.slane %v1341, 0
    %v1378 = vperm.slane %v1342, 0
    %v1379 = vperm.slane %v1343, 0
    %v1380 = vperm.slane %v1344, 0
    %v1381 = vperm.slane %v1345, 0
    %v1382 = vperm.slane %v1346, 0
    %v1383 = vperm.slane %v1347, 0
    %v1384 = vperm.slane %v1348, 0
    %v1385 = vperm.slane %v1349, 0
    %v1386 = vperm.slane %v1350, 0
    %v1387 = vperm.slane %v1351, 0
    %v1388 = vperm.slane %v1352, 0
    %v1389 = vperm.slane %v1353, 0
    %v1390 = vperm.slane %v1354, 0
    %v1391 = vperm.slane %v1355, 0
    %v1392 = vperm.slane %v1356, 0
    %v1393 = vperm.slane %v1357, 0
    %v1394 = vperm.slane %v1358, 0
    %v1395 = vperm.slane %v1359, 0
    %v1396 = vperm.slane %v1360, 0
    %v1397 = vperm.slane %v1361, 0
    %v1398 = vperm.slane %v1362, 0
    %v1399 = vperm.slane %v268, 0
    %v1400 = vperm.slane %v269, 0
    %v1401 = vperm.slane %v270, 0
    %v1402 = vperm.slane %v271, 0
    %v1407 = vlaneseq
    %v1408 = vshrl.u32 %v1407, 7
    %1410 = vset.pattern.permute.xlu0 %v1408
    %1411 = vperm.xlu0 %1410, %v1399
    %v1412 = vpop.permute.xlu0 %1411
    %v1413 = vlaneseq
    %v1414 = vshrl.u32 %v1413, 7
    %v1415 = vadd.s32 %v1414, 8
    %1416 = vset.pattern.permute.xlu0 %v1415
    %1417 = vperm.xlu0 %1416, %v1399
    %v1418 = vpop.permute.xlu0 %1417
    %v1419 = vlaneseq
    %v1420 = vshrl.u32 %v1419, 7
    %v1421 = vadd.s32 %v1420, 16
    %1422 = vset.pattern.permute.xlu0 %v1421
    %1423 = vperm.xlu0 %1422, %v1399
    %v1424 = vpop.permute.xlu0 %1423
    %v1425 = vlaneseq
    %v1426 = vshrl.u32 %v1425, 7
    %v1427 = vadd.s32 %v1426, 24
    %1428 = vset.pattern.permute.xlu0 %v1427
    %1429 = vperm.xlu0 %1428, %v1399
    %v1430 = vpop.permute.xlu0 %1429
    %v1431 = vlaneseq
    %v1432 = vshrl.u32 %v1431, 7
    %1434 = vset.pattern.permute.xlu0 %v1432
    %1435 = vperm.xlu0 %1434, %v1400
    %v1436 = vpop.permute.xlu0 %1435
    %v1437 = vlaneseq
    %v1438 = vshrl.u32 %v1437, 7
    %v1439 = vadd.s32 %v1438, 8
    %1440 = vset.pattern.permute.xlu0 %v1439
    %1441 = vperm.xlu0 %1440, %v1400
    %v1442 = vpop.permute.xlu0 %1441
    %v1443 = vlaneseq
    %v1444 = vshrl.u32 %v1443, 7
    %v1445 = vadd.s32 %v1444, 16
    %1446 = vset.pattern.permute.xlu0 %v1445
    %1447 = vperm.xlu0 %1446, %v1400
    %v1448 = vpop.permute.xlu0 %1447
    %v1449 = vlaneseq
    %v1450 = vshrl.u32 %v1449, 7
    %v1451 = vadd.s32 %v1450, 24
    %1452 = vset.pattern.permute.xlu0 %v1451
    %1453 = vperm.xlu0 %1452, %v1400
    %v1454 = vpop.permute.xlu0 %1453
    %v1455 = vlaneseq
    %v1456 = vshrl.u32 %v1455, 7
    %1458 = vset.pattern.permute.xlu0 %v1456
    %1459 = vperm.xlu0 %1458, %v1401
    %v1460 = vpop.permute.xlu0 %1459
    %v1461 = vlaneseq
    %v1462 = vshrl.u32 %v1461, 7
    %v1463 = vadd.s32 %v1462, 8
    %1464 = vset.pattern.permute.xlu0 %v1463
    %1465 = vperm.xlu0 %1464, %v1401
    %v1466 = vpop.permute.xlu0 %1465
    %v1467 = vlaneseq
    %v1468 = vshrl.u32 %v1467, 7
    %v1469 = vadd.s32 %v1468, 16
    %1470 = vset.pattern.permute.xlu0 %v1469
    %1471 = vperm.xlu0 %1470, %v1401
    %v1472 = vpop.permute.xlu0 %1471
    %v1473 = vlaneseq
    %v1474 = vshrl.u32 %v1473, 7
    %v1475 = vadd.s32 %v1474, 24
    %1476 = vset.pattern.permute.xlu0 %v1475
    %1477 = vperm.xlu0 %1476, %v1401
    %v1478 = vpop.permute.xlu0 %1477
    %v1479 = vlaneseq
    %v1480 = vshrl.u32 %v1479, 7
    %1482 = vset.pattern.permute.xlu0 %v1480
    %1483 = vperm.xlu0 %1482, %v1402
    %v1484 = vpop.permute.xlu0 %1483
    %v1485 = vlaneseq
    %v1486 = vshrl.u32 %v1485, 7
    %v1487 = vadd.s32 %v1486, 8
    %1488 = vset.pattern.permute.xlu0 %v1487
    %1489 = vperm.xlu0 %1488, %v1402
    %v1490 = vpop.permute.xlu0 %1489
    %v1491 = vlaneseq
    %v1492 = vshrl.u32 %v1491, 7
    %v1493 = vadd.s32 %v1492, 16
    %1494 = vset.pattern.permute.xlu0 %v1493
    %1495 = vperm.xlu0 %1494, %v1402
    %v1496 = vpop.permute.xlu0 %1495
    %v1497 = vlaneseq
    %v1498 = vshrl.u32 %v1497, 7
    %v1499 = vadd.s32 %v1498, 24
    %1500 = vset.pattern.permute.xlu0 %v1499
    %1501 = vperm.xlu0 %1500, %v1402
    %v1502 = vpop.permute.xlu0 %1501
    %v1519 = vmul.f32 %v1367, %v1412
    %v1520 = vmul.f32 %v1367, %v1418
    %v1521 = vmul.f32 %v1367, %v1424
    %v1522 = vmul.f32 %v1367, %v1430
    %v1523 = vmul.f32 %v1368, %v1412
    %v1524 = vmul.f32 %v1368, %v1418
    %v1525 = vmul.f32 %v1368, %v1424
    %v1526 = vmul.f32 %v1368, %v1430
    %v1527 = vmul.f32 %v1369, %v1412
    %v1528 = vmul.f32 %v1369, %v1418
    %v1529 = vmul.f32 %v1369, %v1424
    %v1530 = vmul.f32 %v1369, %v1430
    %v1531 = vmul.f32 %v1370, %v1412
    %v1532 = vmul.f32 %v1370, %v1418
    %v1533 = vmul.f32 %v1370, %v1424
    %v1534 = vmul.f32 %v1370, %v1430
    %v1535 = vmul.f32 %v1371, %v1412
    %v1536 = vmul.f32 %v1371, %v1418
    %v1537 = vmul.f32 %v1371, %v1424
    %v1538 = vmul.f32 %v1371, %v1430
    %v1539 = vmul.f32 %v1372, %v1412
    %v1540 = vmul.f32 %v1372, %v1418
    %v1541 = vmul.f32 %v1372, %v1424
    %v1542 = vmul.f32 %v1372, %v1430
    %v1543 = vmul.f32 %v1373, %v1412
    %v1544 = vmul.f32 %v1373, %v1418
    %v1545 = vmul.f32 %v1373, %v1424
    %v1546 = vmul.f32 %v1373, %v1430
    %v1547 = vmul.f32 %v1374, %v1412
    %v1548 = vmul.f32 %v1374, %v1418
    %v1549 = vmul.f32 %v1374, %v1424
    %v1550 = vmul.f32 %v1374, %v1430
    %v1551 = vmul.f32 %v1375, %v1436
    %v1552 = vmul.f32 %v1375, %v1442
    %v1553 = vmul.f32 %v1375, %v1448
    %v1554 = vmul.f32 %v1375, %v1454
    %v1555 = vmul.f32 %v1376, %v1436
    %v1556 = vmul.f32 %v1376, %v1442
    %v1557 = vmul.f32 %v1376, %v1448
    %v1558 = vmul.f32 %v1376, %v1454
    %v1559 = vmul.f32 %v1377, %v1436
    %v1560 = vmul.f32 %v1377, %v1442
    %v1561 = vmul.f32 %v1377, %v1448
    %v1562 = vmul.f32 %v1377, %v1454
    %v1563 = vmul.f32 %v1378, %v1436
    %v1564 = vmul.f32 %v1378, %v1442
    %v1565 = vmul.f32 %v1378, %v1448
    %v1566 = vmul.f32 %v1378, %v1454
    %v1567 = vmul.f32 %v1379, %v1436
    %v1568 = vmul.f32 %v1379, %v1442
    %v1569 = vmul.f32 %v1379, %v1448
    %v1570 = vmul.f32 %v1379, %v1454
    %v1571 = vmul.f32 %v1380, %v1436
    %v1572 = vmul.f32 %v1380, %v1442
    %v1573 = vmul.f32 %v1380, %v1448
    %v1574 = vmul.f32 %v1380, %v1454
    %v1575 = vmul.f32 %v1381, %v1436
    %v1576 = vmul.f32 %v1381, %v1442
    %v1577 = vmul.f32 %v1381, %v1448
    %v1578 = vmul.f32 %v1381, %v1454
    %v1579 = vmul.f32 %v1382, %v1436
    %v1580 = vmul.f32 %v1382, %v1442
    %v1581 = vmul.f32 %v1382, %v1448
    %v1582 = vmul.f32 %v1382, %v1454
    %v1583 = vmul.f32 %v1383, %v1460
    %v1584 = vmul.f32 %v1383, %v1466
    %v1585 = vmul.f32 %v1383, %v1472
    %v1586 = vmul.f32 %v1383, %v1478
    %v1587 = vmul.f32 %v1384, %v1460
    %v1588 = vmul.f32 %v1384, %v1466
    %v1589 = vmul.f32 %v1384, %v1472
    %v1590 = vmul.f32 %v1384, %v1478
    %v1591 = vmul.f32 %v1385, %v1460
    %v1592 = vmul.f32 %v1385, %v1466
    %v1593 = vmul.f32 %v1385, %v1472
    %v1594 = vmul.f32 %v1385, %v1478
    %v1595 = vmul.f32 %v1386, %v1460
    %v1596 = vmul.f32 %v1386, %v1466
    %v1597 = vmul.f32 %v1386, %v1472
    %v1598 = vmul.f32 %v1386, %v1478
    %v1599 = vmul.f32 %v1387, %v1460
    %v1600 = vmul.f32 %v1387, %v1466
    %v1601 = vmul.f32 %v1387, %v1472
    %v1602 = vmul.f32 %v1387, %v1478
    %v1603 = vmul.f32 %v1388, %v1460
    %v1604 = vmul.f32 %v1388, %v1466
    %v1605 = vmul.f32 %v1388, %v1472
    %v1606 = vmul.f32 %v1388, %v1478
    %v1607 = vmul.f32 %v1389, %v1460
    %v1608 = vmul.f32 %v1389, %v1466
    %v1609 = vmul.f32 %v1389, %v1472
    %v1610 = vmul.f32 %v1389, %v1478
    %v1611 = vmul.f32 %v1390, %v1460
    %v1612 = vmul.f32 %v1390, %v1466
    %v1613 = vmul.f32 %v1390, %v1472
    %v1614 = vmul.f32 %v1390, %v1478
    %v1615 = vmul.f32 %v1391, %v1484
    %v1616 = vmul.f32 %v1391, %v1490
    %v1617 = vmul.f32 %v1391, %v1496
    %v1618 = vmul.f32 %v1391, %v1502
    %v1619 = vmul.f32 %v1392, %v1484
    %v1620 = vmul.f32 %v1392, %v1490
    %v1621 = vmul.f32 %v1392, %v1496
    %v1622 = vmul.f32 %v1392, %v1502
    %v1623 = vmul.f32 %v1393, %v1484
    %v1624 = vmul.f32 %v1393, %v1490
    %v1625 = vmul.f32 %v1393, %v1496
    %v1626 = vmul.f32 %v1393, %v1502
    %v1627 = vmul.f32 %v1394, %v1484
    %v1628 = vmul.f32 %v1394, %v1490
    %v1629 = vmul.f32 %v1394, %v1496
    %v1630 = vmul.f32 %v1394, %v1502
    %v1631 = vmul.f32 %v1395, %v1484
    %v1632 = vmul.f32 %v1395, %v1490
    %v1633 = vmul.f32 %v1395, %v1496
    %v1634 = vmul.f32 %v1395, %v1502
    %v1635 = vmul.f32 %v1396, %v1484
    %v1636 = vmul.f32 %v1396, %v1490
    %v1637 = vmul.f32 %v1396, %v1496
    %v1638 = vmul.f32 %v1396, %v1502
    %v1639 = vmul.f32 %v1397, %v1484
    %v1640 = vmul.f32 %v1397, %v1490
    %v1641 = vmul.f32 %v1397, %v1496
    %v1642 = vmul.f32 %v1397, %v1502
    %v1643 = vmul.f32 %v1398, %v1484
    %v1644 = vmul.f32 %v1398, %v1490
    %v1645 = vmul.f32 %v1398, %v1496
    %v1646 = vmul.f32 %v1398, %v1502
    %v1647 = vperm.slane %v1331, 1
    %v1648 = vperm.slane %v1332, 1
    %v1649 = vperm.slane %v1333, 1
    %v1650 = vperm.slane %v1334, 1
    %v1651 = vperm.slane %v1335, 1
    %v1652 = vperm.slane %v1336, 1
    %v1653 = vperm.slane %v1337, 1
    %v1654 = vperm.slane %v1338, 1
    %v1655 = vperm.slane %v1339, 1
    %v1656 = vperm.slane %v1340, 1
    %v1657 = vperm.slane %v1341, 1
    %v1658 = vperm.slane %v1342, 1
    %v1659 = vperm.slane %v1343, 1
    %v1660 = vperm.slane %v1344, 1
    %v1661 = vperm.slane %v1345, 1
    %v1662 = vperm.slane %v1346, 1
    %v1663 = vperm.slane %v1347, 1
    %v1664 = vperm.slane %v1348, 1
    %v1665 = vperm.slane %v1349, 1
    %v1666 = vperm.slane %v1350, 1
    %v1667 = vperm.slane %v1351, 1
    %v1668 = vperm.slane %v1352, 1
    %v1669 = vperm.slane %v1353, 1
    %v1670 = vperm.slane %v1354, 1
    %v1671 = vperm.slane %v1355, 1
    %v1672 = vperm.slane %v1356, 1
    %v1673 = vperm.slane %v1357, 1
    %v1674 = vperm.slane %v1358, 1
    %v1675 = vperm.slane %v1359, 1
    %v1676 = vperm.slane %v1360, 1
    %v1677 = vperm.slane %v1361, 1
    %v1678 = vperm.slane %v1362, 1
    %v1679 = vperm.slane %v268, 1
    %v1680 = vperm.slane %v269, 1
    %v1681 = vperm.slane %v270, 1
    %v1682 = vperm.slane %v271, 1
    %v1687 = vlaneseq
    %v1688 = vshrl.u32 %v1687, 7
    %1690 = vset.pattern.permute.xlu0 %v1688
    %1691 = vperm.xlu0 %1690, %v1679
    %v1692 = vpop.permute.xlu0 %1691
    %v1693 = vlaneseq
    %v1694 = vshrl.u32 %v1693, 7
    %v1695 = vadd.s32 %v1694, 8
    %1696 = vset.pattern.permute.xlu0 %v1695
    %1697 = vperm.xlu0 %1696, %v1679
    %v1698 = vpop.permute.xlu0 %1697
    %v1699 = vlaneseq
    %v1700 = vshrl.u32 %v1699, 7
    %v1701 = vadd.s32 %v1700, 16
    %1702 = vset.pattern.permute.xlu0 %v1701
    %1703 = vperm.xlu0 %1702, %v1679
    %v1704 = vpop.permute.xlu0 %1703
    %v1705 = vlaneseq
    %v1706 = vshrl.u32 %v1705, 7
    %v1707 = vadd.s32 %v1706, 24
    %1708 = vset.pattern.permute.xlu0 %v1707
    %1709 = vperm.xlu0 %1708, %v1679
    %v1710 = vpop.permute.xlu0 %1709
    %v1711 = vlaneseq
    %v1712 = vshrl.u32 %v1711, 7
    %1714 = vset.pattern.permute.xlu0 %v1712
    %1715 = vperm.xlu0 %1714, %v1680
    %v1716 = vpop.permute.xlu0 %1715
    %v1717 = vlaneseq
    %v1718 = vshrl.u32 %v1717, 7
    %v1719 = vadd.s32 %v1718, 8
    %1720 = vset.pattern.permute.xlu0 %v1719
    %1721 = vperm.xlu0 %1720, %v1680
    %v1722 = vpop.permute.xlu0 %1721
    %v1723 = vlaneseq
    %v1724 = vshrl.u32 %v1723, 7
    %v1725 = vadd.s32 %v1724, 16
    %1726 = vset.pattern.permute.xlu0 %v1725
    %1727 = vperm.xlu0 %1726, %v1680
    %v1728 = vpop.permute.xlu0 %1727
    %v1729 = vlaneseq
    %v1730 = vshrl.u32 %v1729, 7
    %v1731 = vadd.s32 %v1730, 24
    %1732 = vset.pattern.permute.xlu0 %v1731
    %1733 = vperm.xlu0 %1732, %v1680
    %v1734 = vpop.permute.xlu0 %1733
    %v1735 = vlaneseq
    %v1736 = vshrl.u32 %v1735, 7
    %1738 = vset.pattern.permute.xlu0 %v1736
    %1739 = vperm.xlu0 %1738, %v1681
    %v1740 = vpop.permute.xlu0 %1739
    %v1741 = vlaneseq
    %v1742 = vshrl.u32 %v1741, 7
    %v1743 = vadd.s32 %v1742, 8
    %1744 = vset.pattern.permute.xlu0 %v1743
    %1745 = vperm.xlu0 %1744, %v1681
    %v1746 = vpop.permute.xlu0 %1745
    %v1747 = vlaneseq
    %v1748 = vshrl.u32 %v1747, 7
    %v1749 = vadd.s32 %v1748, 16
    %1750 = vset.pattern.permute.xlu0 %v1749
    %1751 = vperm.xlu0 %1750, %v1681
    %v1752 = vpop.permute.xlu0 %1751
    %v1753 = vlaneseq
    %v1754 = vshrl.u32 %v1753, 7
    %v1755 = vadd.s32 %v1754, 24
    %1756 = vset.pattern.permute.xlu0 %v1755
    %1757 = vperm.xlu0 %1756, %v1681
    %v1758 = vpop.permute.xlu0 %1757
    %v1759 = vlaneseq
    %v1760 = vshrl.u32 %v1759, 7
    %1762 = vset.pattern.permute.xlu0 %v1760
    %1763 = vperm.xlu0 %1762, %v1682
    %v1764 = vpop.permute.xlu0 %1763
    %v1765 = vlaneseq
    %v1766 = vshrl.u32 %v1765, 7
    %v1767 = vadd.s32 %v1766, 8
    %1768 = vset.pattern.permute.xlu0 %v1767
    %1769 = vperm.xlu0 %1768, %v1682
    %v1770 = vpop.permute.xlu0 %1769
    %v1771 = vlaneseq
    %v1772 = vshrl.u32 %v1771, 7
    %v1773 = vadd.s32 %v1772, 16
    %1774 = vset.pattern.permute.xlu0 %v1773
    %1775 = vperm.xlu0 %1774, %v1682
    %v1776 = vpop.permute.xlu0 %1775
    %v1777 = vlaneseq
    %v1778 = vshrl.u32 %v1777, 7
    %v1779 = vadd.s32 %v1778, 24
    %1780 = vset.pattern.permute.xlu0 %v1779
    %1781 = vperm.xlu0 %1780, %v1682
    %v1782 = vpop.permute.xlu0 %1781
    %v1799 = vmul.f32 %v1647, %v1692
    %v1800 = vmul.f32 %v1647, %v1698
    %v1801 = vmul.f32 %v1647, %v1704
    %v1802 = vmul.f32 %v1647, %v1710
    %v1803 = vmul.f32 %v1648, %v1692
    %v1804 = vmul.f32 %v1648, %v1698
    %v1805 = vmul.f32 %v1648, %v1704
    %v1806 = vmul.f32 %v1648, %v1710
    %v1807 = vmul.f32 %v1649, %v1692
    %v1808 = vmul.f32 %v1649, %v1698
    %v1809 = vmul.f32 %v1649, %v1704
    %v1810 = vmul.f32 %v1649, %v1710
    %v1811 = vmul.f32 %v1650, %v1692
    %v1812 = vmul.f32 %v1650, %v1698
    %v1813 = vmul.f32 %v1650, %v1704
    %v1814 = vmul.f32 %v1650, %v1710
    %v1815 = vmul.f32 %v1651, %v1692
    %v1816 = vmul.f32 %v1651, %v1698
    %v1817 = vmul.f32 %v1651, %v1704
    %v1818 = vmul.f32 %v1651, %v1710
    %v1819 = vmul.f32 %v1652, %v1692
    %v1820 = vmul.f32 %v1652, %v1698
    %v1821 = vmul.f32 %v1652, %v1704
    %v1822 = vmul.f32 %v1652, %v1710
    %v1823 = vmul.f32 %v1653, %v1692
    %v1824 = vmul.f32 %v1653, %v1698
    %v1825 = vmul.f32 %v1653, %v1704
    %v1826 = vmul.f32 %v1653, %v1710
    %v1827 = vmul.f32 %v1654, %v1692
    %v1828 = vmul.f32 %v1654, %v1698
    %v1829 = vmul.f32 %v1654, %v1704
    %v1830 = vmul.f32 %v1654, %v1710
    %v1831 = vmul.f32 %v1655, %v1716
    %v1832 = vmul.f32 %v1655, %v1722
    %v1833 = vmul.f32 %v1655, %v1728
    %v1834 = vmul.f32 %v1655, %v1734
    %v1835 = vmul.f32 %v1656, %v1716
    %v1836 = vmul.f32 %v1656, %v1722
    %v1837 = vmul.f32 %v1656, %v1728
    %v1838 = vmul.f32 %v1656, %v1734
    %v1839 = vmul.f32 %v1657, %v1716
    %v1840 = vmul.f32 %v1657, %v1722
    %v1841 = vmul.f32 %v1657, %v1728
    %v1842 = vmul.f32 %v1657, %v1734
    %v1843 = vmul.f32 %v1658, %v1716
    %v1844 = vmul.f32 %v1658, %v1722
    %v1845 = vmul.f32 %v1658, %v1728
    %v1846 = vmul.f32 %v1658, %v1734
    %v1847 = vmul.f32 %v1659, %v1716
    %v1848 = vmul.f32 %v1659, %v1722
    %v1849 = vmul.f32 %v1659, %v1728
    %v1850 = vmul.f32 %v1659, %v1734
    %v1851 = vmul.f32 %v1660, %v1716
    %v1852 = vmul.f32 %v1660, %v1722
    %v1853 = vmul.f32 %v1660, %v1728
    %v1854 = vmul.f32 %v1660, %v1734
    %v1855 = vmul.f32 %v1661, %v1716
    %v1856 = vmul.f32 %v1661, %v1722
    %v1857 = vmul.f32 %v1661, %v1728
    %v1858 = vmul.f32 %v1661, %v1734
    %v1859 = vmul.f32 %v1662, %v1716
    %v1860 = vmul.f32 %v1662, %v1722
    %v1861 = vmul.f32 %v1662, %v1728
    %v1862 = vmul.f32 %v1662, %v1734
    %v1863 = vmul.f32 %v1663, %v1740
    %v1864 = vmul.f32 %v1663, %v1746
    %v1865 = vmul.f32 %v1663, %v1752
    %v1866 = vmul.f32 %v1663, %v1758
    %v1867 = vmul.f32 %v1664, %v1740
    %v1868 = vmul.f32 %v1664, %v1746
    %v1869 = vmul.f32 %v1664, %v1752
    %v1870 = vmul.f32 %v1664, %v1758
    %v1871 = vmul.f32 %v1665, %v1740
    %v1872 = vmul.f32 %v1665, %v1746
    %v1873 = vmul.f32 %v1665, %v1752
    %v1874 = vmul.f32 %v1665, %v1758
    %v1875 = vmul.f32 %v1666, %v1740
    %v1876 = vmul.f32 %v1666, %v1746
    %v1877 = vmul.f32 %v1666, %v1752
    %v1878 = vmul.f32 %v1666, %v1758
    %v1879 = vmul.f32 %v1667, %v1740
    %v1880 = vmul.f32 %v1667, %v1746
    %v1881 = vmul.f32 %v1667, %v1752
    %v1882 = vmul.f32 %v1667, %v1758
    %v1883 = vmul.f32 %v1668, %v1740
    %v1884 = vmul.f32 %v1668, %v1746
    %v1885 = vmul.f32 %v1668, %v1752
    %v1886 = vmul.f32 %v1668, %v1758
    %v1887 = vmul.f32 %v1669, %v1740
    %v1888 = vmul.f32 %v1669, %v1746
    %v1889 = vmul.f32 %v1669, %v1752
    %v1890 = vmul.f32 %v1669, %v1758
    %v1891 = vmul.f32 %v1670, %v1740
    %v1892 = vmul.f32 %v1670, %v1746
    %v1893 = vmul.f32 %v1670, %v1752
    %v1894 = vmul.f32 %v1670, %v1758
    %v1895 = vmul.f32 %v1671, %v1764
    %v1896 = vmul.f32 %v1671, %v1770
    %v1897 = vmul.f32 %v1671, %v1776
    %v1898 = vmul.f32 %v1671, %v1782
    %v1899 = vmul.f32 %v1672, %v1764
    %v1900 = vmul.f32 %v1672, %v1770
    %v1901 = vmul.f32 %v1672, %v1776
    %v1902 = vmul.f32 %v1672, %v1782
    %v1903 = vmul.f32 %v1673, %v1764
    %v1904 = vmul.f32 %v1673, %v1770
    %v1905 = vmul.f32 %v1673, %v1776
    %v1906 = vmul.f32 %v1673, %v1782
    %v1907 = vmul.f32 %v1674, %v1764
    %v1908 = vmul.f32 %v1674, %v1770
    %v1909 = vmul.f32 %v1674, %v1776
    %v1910 = vmul.f32 %v1674, %v1782
    %v1911 = vmul.f32 %v1675, %v1764
    %v1912 = vmul.f32 %v1675, %v1770
    %v1913 = vmul.f32 %v1675, %v1776
    %v1914 = vmul.f32 %v1675, %v1782
    %v1915 = vmul.f32 %v1676, %v1764
    %v1916 = vmul.f32 %v1676, %v1770
    %v1917 = vmul.f32 %v1676, %v1776
    %v1918 = vmul.f32 %v1676, %v1782
    %v1919 = vmul.f32 %v1677, %v1764
    %v1920 = vmul.f32 %v1677, %v1770
    %v1921 = vmul.f32 %v1677, %v1776
    %v1922 = vmul.f32 %v1677, %v1782
    %v1923 = vmul.f32 %v1678, %v1764
    %v1924 = vmul.f32 %v1678, %v1770
    %v1925 = vmul.f32 %v1678, %v1776
    %v1926 = vmul.f32 %v1678, %v1782
    %v1927 = vadd.f32 %v1519, %v1799
    %v1928 = vadd.f32 %v1520, %v1800
    %v1929 = vadd.f32 %v1521, %v1801
    %v1930 = vadd.f32 %v1522, %v1802
    %v1931 = vadd.f32 %v1523, %v1803
    %v1932 = vadd.f32 %v1524, %v1804
    %v1933 = vadd.f32 %v1525, %v1805
    %v1934 = vadd.f32 %v1526, %v1806
    %v1935 = vadd.f32 %v1527, %v1807
    %v1936 = vadd.f32 %v1528, %v1808
    %v1937 = vadd.f32 %v1529, %v1809
    %v1938 = vadd.f32 %v1530, %v1810
    %v1939 = vadd.f32 %v1531, %v1811
    %v1940 = vadd.f32 %v1532, %v1812
    %v1941 = vadd.f32 %v1533, %v1813
    %v1942 = vadd.f32 %v1534, %v1814
    %v1943 = vadd.f32 %v1535, %v1815
    %v1944 = vadd.f32 %v1536, %v1816
    %v1945 = vadd.f32 %v1537, %v1817
    %v1946 = vadd.f32 %v1538, %v1818
    %v1947 = vadd.f32 %v1539, %v1819
    %v1948 = vadd.f32 %v1540, %v1820
    %v1949 = vadd.f32 %v1541, %v1821
    %v1950 = vadd.f32 %v1542, %v1822
    %v1951 = vadd.f32 %v1543, %v1823
    %v1952 = vadd.f32 %v1544, %v1824
    %v1953 = vadd.f32 %v1545, %v1825
    %v1954 = vadd.f32 %v1546, %v1826
    %v1955 = vadd.f32 %v1547, %v1827
    %v1956 = vadd.f32 %v1548, %v1828
    %v1957 = vadd.f32 %v1549, %v1829
    %v1958 = vadd.f32 %v1550, %v1830
    %v1959 = vadd.f32 %v1551, %v1831
    %v1960 = vadd.f32 %v1552, %v1832
    %v1961 = vadd.f32 %v1553, %v1833
    %v1962 = vadd.f32 %v1554, %v1834
    %v1963 = vadd.f32 %v1555, %v1835
    %v1964 = vadd.f32 %v1556, %v1836
    %v1965 = vadd.f32 %v1557, %v1837
    %v1966 = vadd.f32 %v1558, %v1838
    %v1967 = vadd.f32 %v1559, %v1839
    %v1968 = vadd.f32 %v1560, %v1840
    %v1969 = vadd.f32 %v1561, %v1841
    %v1970 = vadd.f32 %v1562, %v1842
    %v1971 = vadd.f32 %v1563, %v1843
    %v1972 = vadd.f32 %v1564, %v1844
    %v1973 = vadd.f32 %v1565, %v1845
    %v1974 = vadd.f32 %v1566, %v1846
    %v1975 = vadd.f32 %v1567, %v1847
    %v1976 = vadd.f32 %v1568, %v1848
    %v1977 = vadd.f32 %v1569, %v1849
    %v1978 = vadd.f32 %v1570, %v1850
    %v1979 = vadd.f32 %v1571, %v1851
    %v1980 = vadd.f32 %v1572, %v1852
    %v1981 = vadd.f32 %v1573, %v1853
    %v1982 = vadd.f32 %v1574, %v1854
    %v1983 = vadd.f32 %v1575, %v1855
    %v1984 = vadd.f32 %v1576, %v1856
    %v1985 = vadd.f32 %v1577, %v1857
    %v1986 = vadd.f32 %v1578, %v1858
    %v1987 = vadd.f32 %v1579, %v1859
    %v1988 = vadd.f32 %v1580, %v1860
    %v1989 = vadd.f32 %v1581, %v1861
    %v1990 = vadd.f32 %v1582, %v1862
    %v1991 = vadd.f32 %v1583, %v1863
    %v1992 = vadd.f32 %v1584, %v1864
    %v1993 = vadd.f32 %v1585, %v1865
    %v1994 = vadd.f32 %v1586, %v1866
    %v1995 = vadd.f32 %v1587, %v1867
    %v1996 = vadd.f32 %v1588, %v1868
    %v1997 = vadd.f32 %v1589, %v1869
    %v1998 = vadd.f32 %v1590, %v1870
    %v1999 = vadd.f32 %v1591, %v1871
    %v2000 = vadd.f32 %v1592, %v1872
    %v2001 = vadd.f32 %v1593, %v1873
    %v2002 = vadd.f32 %v1594, %v1874
    %v2003 = vadd.f32 %v1595, %v1875
    %v2004 = vadd.f32 %v1596, %v1876
    %v2005 = vadd.f32 %v1597, %v1877
    %v2006 = vadd.f32 %v1598, %v1878
    %v2007 = vadd.f32 %v1599, %v1879
    %v2008 = vadd.f32 %v1600, %v1880
    %v2009 = vadd.f32 %v1601, %v1881
    %v2010 = vadd.f32 %v1602, %v1882
    %v2011 = vadd.f32 %v1603, %v1883
    %v2012 = vadd.f32 %v1604, %v1884
    %v2013 = vadd.f32 %v1605, %v1885
    %v2014 = vadd.f32 %v1606, %v1886
    %v2015 = vadd.f32 %v1607, %v1887
    %v2016 = vadd.f32 %v1608, %v1888
    %v2017 = vadd.f32 %v1609, %v1889
    %v2018 = vadd.f32 %v1610, %v1890
    %v2019 = vadd.f32 %v1611, %v1891
    %v2020 = vadd.f32 %v1612, %v1892
    %v2021 = vadd.f32 %v1613, %v1893
    %v2022 = vadd.f32 %v1614, %v1894
    %v2023 = vadd.f32 %v1615, %v1895
    %v2024 = vadd.f32 %v1616, %v1896
    %v2025 = vadd.f32 %v1617, %v1897
    %v2026 = vadd.f32 %v1618, %v1898
    %v2027 = vadd.f32 %v1619, %v1899
    %v2028 = vadd.f32 %v1620, %v1900
    %v2029 = vadd.f32 %v1621, %v1901
    %v2030 = vadd.f32 %v1622, %v1902
    %v2031 = vadd.f32 %v1623, %v1903
    %v2032 = vadd.f32 %v1624, %v1904
    %v2033 = vadd.f32 %v1625, %v1905
    %v2034 = vadd.f32 %v1626, %v1906
    %v2035 = vadd.f32 %v1627, %v1907
    %v2036 = vadd.f32 %v1628, %v1908
    %v2037 = vadd.f32 %v1629, %v1909
    %v2038 = vadd.f32 %v1630, %v1910
    %v2039 = vadd.f32 %v1631, %v1911
    %v2040 = vadd.f32 %v1632, %v1912
    %v2041 = vadd.f32 %v1633, %v1913
    %v2042 = vadd.f32 %v1634, %v1914
    %v2043 = vadd.f32 %v1635, %v1915
    %v2044 = vadd.f32 %v1636, %v1916
    %v2045 = vadd.f32 %v1637, %v1917
    %v2046 = vadd.f32 %v1638, %v1918
    %v2047 = vadd.f32 %v1639, %v1919
    %v2048 = vadd.f32 %v1640, %v1920
    %v2049 = vadd.f32 %v1641, %v1921
    %v2050 = vadd.f32 %v1642, %v1922
    %v2051 = vadd.f32 %v1643, %v1923
    %v2052 = vadd.f32 %v1644, %v1924
    %v2053 = vadd.f32 %v1645, %v1925
    %v2054 = vadd.f32 %v1646, %v1926
    %v2055 = vperm.slane %v1331, 2
    %v2056 = vperm.slane %v1332, 2
    %v2057 = vperm.slane %v1333, 2
    %v2058 = vperm.slane %v1334, 2
    %v2059 = vperm.slane %v1335, 2
    %v2060 = vperm.slane %v1336, 2
    %v2061 = vperm.slane %v1337, 2
    %v2062 = vperm.slane %v1338, 2
    %v2063 = vperm.slane %v1339, 2
    %v2064 = vperm.slane %v1340, 2
    %v2065 = vperm.slane %v1341, 2
    %v2066 = vperm.slane %v1342, 2
    %v2067 = vperm.slane %v1343, 2
    %v2068 = vperm.slane %v1344, 2
    %v2069 = vperm.slane %v1345, 2
    %v2070 = vperm.slane %v1346, 2
    %v2071 = vperm.slane %v1347, 2
    %v2072 = vperm.slane %v1348, 2
    %v2073 = vperm.slane %v1349, 2
    %v2074 = vperm.slane %v1350, 2
    %v2075 = vperm.slane %v1351, 2
    %v2076 = vperm.slane %v1352, 2
    %v2077 = vperm.slane %v1353, 2
    %v2078 = vperm.slane %v1354, 2
    %v2079 = vperm.slane %v1355, 2
    %v2080 = vperm.slane %v1356, 2
    %v2081 = vperm.slane %v1357, 2
    %v2082 = vperm.slane %v1358, 2
    %v2083 = vperm.slane %v1359, 2
    %v2084 = vperm.slane %v1360, 2
    %v2085 = vperm.slane %v1361, 2
    %v2086 = vperm.slane %v1362, 2
    %v2087 = vperm.slane %v268, 2
    %v2088 = vperm.slane %v269, 2
    %v2089 = vperm.slane %v270, 2
    %v2090 = vperm.slane %v271, 2
    %v2095 = vlaneseq
    %v2096 = vshrl.u32 %v2095, 7
    %2098 = vset.pattern.permute.xlu0 %v2096
    %2099 = vperm.xlu0 %2098, %v2087
    %v2100 = vpop.permute.xlu0 %2099
    %v2101 = vlaneseq
    %v2102 = vshrl.u32 %v2101, 7
    %v2103 = vadd.s32 %v2102, 8
    %2104 = vset.pattern.permute.xlu0 %v2103
    %2105 = vperm.xlu0 %2104, %v2087
    %v2106 = vpop.permute.xlu0 %2105
    %v2107 = vlaneseq
    %v2108 = vshrl.u32 %v2107, 7
    %v2109 = vadd.s32 %v2108, 16
    %2110 = vset.pattern.permute.xlu0 %v2109
    %2111 = vperm.xlu0 %2110, %v2087
    %v2112 = vpop.permute.xlu0 %2111
    %v2113 = vlaneseq
    %v2114 = vshrl.u32 %v2113, 7
    %v2115 = vadd.s32 %v2114, 24
    %2116 = vset.pattern.permute.xlu0 %v2115
    %2117 = vperm.xlu0 %2116, %v2087
    %v2118 = vpop.permute.xlu0 %2117
    %v2119 = vlaneseq
    %v2120 = vshrl.u32 %v2119, 7
    %2122 = vset.pattern.permute.xlu0 %v2120
    %2123 = vperm.xlu0 %2122, %v2088
    %v2124 = vpop.permute.xlu0 %2123
    %v2125 = vlaneseq
    %v2126 = vshrl.u32 %v2125, 7
    %v2127 = vadd.s32 %v2126, 8
    %2128 = vset.pattern.permute.xlu0 %v2127
    %2129 = vperm.xlu0 %2128, %v2088
    %v2130 = vpop.permute.xlu0 %2129
    %v2131 = vlaneseq
    %v2132 = vshrl.u32 %v2131, 7
    %v2133 = vadd.s32 %v2132, 16
    %2134 = vset.pattern.permute.xlu0 %v2133
    %2135 = vperm.xlu0 %2134, %v2088
    %v2136 = vpop.permute.xlu0 %2135
    %v2137 = vlaneseq
    %v2138 = vshrl.u32 %v2137, 7
    %v2139 = vadd.s32 %v2138, 24
    %2140 = vset.pattern.permute.xlu0 %v2139
    %2141 = vperm.xlu0 %2140, %v2088
    %v2142 = vpop.permute.xlu0 %2141
    %v2143 = vlaneseq
    %v2144 = vshrl.u32 %v2143, 7
    %2146 = vset.pattern.permute.xlu0 %v2144
    %2147 = vperm.xlu0 %2146, %v2089
    %v2148 = vpop.permute.xlu0 %2147
    %v2149 = vlaneseq
    %v2150 = vshrl.u32 %v2149, 7
    %v2151 = vadd.s32 %v2150, 8
    %2152 = vset.pattern.permute.xlu0 %v2151
    %2153 = vperm.xlu0 %2152, %v2089
    %v2154 = vpop.permute.xlu0 %2153
    %v2155 = vlaneseq
    %v2156 = vshrl.u32 %v2155, 7
    %v2157 = vadd.s32 %v2156, 16
    %2158 = vset.pattern.permute.xlu0 %v2157
    %2159 = vperm.xlu0 %2158, %v2089
    %v2160 = vpop.permute.xlu0 %2159
    %v2161 = vlaneseq
    %v2162 = vshrl.u32 %v2161, 7
    %v2163 = vadd.s32 %v2162, 24
    %2164 = vset.pattern.permute.xlu0 %v2163
    %2165 = vperm.xlu0 %2164, %v2089
    %v2166 = vpop.permute.xlu0 %2165
    %v2167 = vlaneseq
    %v2168 = vshrl.u32 %v2167, 7
    %2170 = vset.pattern.permute.xlu0 %v2168
    %2171 = vperm.xlu0 %2170, %v2090
    %v2172 = vpop.permute.xlu0 %2171
    %v2173 = vlaneseq
    %v2174 = vshrl.u32 %v2173, 7
    %v2175 = vadd.s32 %v2174, 8
    %2176 = vset.pattern.permute.xlu0 %v2175
    %2177 = vperm.xlu0 %2176, %v2090
    %v2178 = vpop.permute.xlu0 %2177
    %v2179 = vlaneseq
    %v2180 = vshrl.u32 %v2179, 7
    %v2181 = vadd.s32 %v2180, 16
    %2182 = vset.pattern.permute.xlu0 %v2181
    %2183 = vperm.xlu0 %2182, %v2090
    %v2184 = vpop.permute.xlu0 %2183
    %v2185 = vlaneseq
    %v2186 = vshrl.u32 %v2185, 7
    %v2187 = vadd.s32 %v2186, 24
    %2188 = vset.pattern.permute.xlu0 %v2187
    %2189 = vperm.xlu0 %2188, %v2090
    %v2190 = vpop.permute.xlu0 %2189
    %v2207 = vmul.f32 %v2055, %v2100
    %v2208 = vmul.f32 %v2055, %v2106
    %v2209 = vmul.f32 %v2055, %v2112
    %v2210 = vmul.f32 %v2055, %v2118
    %v2211 = vmul.f32 %v2056, %v2100
    %v2212 = vmul.f32 %v2056, %v2106
    %v2213 = vmul.f32 %v2056, %v2112
    %v2214 = vmul.f32 %v2056, %v2118
    %v2215 = vmul.f32 %v2057, %v2100
    %v2216 = vmul.f32 %v2057, %v2106
    %v2217 = vmul.f32 %v2057, %v2112
    %v2218 = vmul.f32 %v2057, %v2118
    %v2219 = vmul.f32 %v2058, %v2100
    %v2220 = vmul.f32 %v2058, %v2106
    %v2221 = vmul.f32 %v2058, %v2112
    %v2222 = vmul.f32 %v2058, %v2118
    %v2223 = vmul.f32 %v2059, %v2100
    %v2224 = vmul.f32 %v2059, %v2106
    %v2225 = vmul.f32 %v2059, %v2112
    %v2226 = vmul.f32 %v2059, %v2118
    %v2227 = vmul.f32 %v2060, %v2100
    %v2228 = vmul.f32 %v2060, %v2106
    %v2229 = vmul.f32 %v2060, %v2112
    %v2230 = vmul.f32 %v2060, %v2118
    %v2231 = vmul.f32 %v2061, %v2100
    %v2232 = vmul.f32 %v2061, %v2106
    %v2233 = vmul.f32 %v2061, %v2112
    %v2234 = vmul.f32 %v2061, %v2118
    %v2235 = vmul.f32 %v2062, %v2100
    %v2236 = vmul.f32 %v2062, %v2106
    %v2237 = vmul.f32 %v2062, %v2112
    %v2238 = vmul.f32 %v2062, %v2118
    %v2239 = vmul.f32 %v2063, %v2124
    %v2240 = vmul.f32 %v2063, %v2130
    %v2241 = vmul.f32 %v2063, %v2136
    %v2242 = vmul.f32 %v2063, %v2142
    %v2243 = vmul.f32 %v2064, %v2124
    %v2244 = vmul.f32 %v2064, %v2130
    %v2245 = vmul.f32 %v2064, %v2136
    %v2246 = vmul.f32 %v2064, %v2142
    %v2247 = vmul.f32 %v2065, %v2124
    %v2248 = vmul.f32 %v2065, %v2130
    %v2249 = vmul.f32 %v2065, %v2136
    %v2250 = vmul.f32 %v2065, %v2142
    %v2251 = vmul.f32 %v2066, %v2124
    %v2252 = vmul.f32 %v2066, %v2130
    %v2253 = vmul.f32 %v2066, %v2136
    %v2254 = vmul.f32 %v2066, %v2142
    %v2255 = vmul.f32 %v2067, %v2124
    %v2256 = vmul.f32 %v2067, %v2130
    %v2257 = vmul.f32 %v2067, %v2136
    %v2258 = vmul.f32 %v2067, %v2142
    %v2259 = vmul.f32 %v2068, %v2124
    %v2260 = vmul.f32 %v2068, %v2130
    %v2261 = vmul.f32 %v2068, %v2136
    %v2262 = vmul.f32 %v2068, %v2142
    %v2263 = vmul.f32 %v2069, %v2124
    %v2264 = vmul.f32 %v2069, %v2130
    %v2265 = vmul.f32 %v2069, %v2136
    %v2266 = vmul.f32 %v2069, %v2142
    %v2267 = vmul.f32 %v2070, %v2124
    %v2268 = vmul.f32 %v2070, %v2130
    %v2269 = vmul.f32 %v2070, %v2136
    %v2270 = vmul.f32 %v2070, %v2142
    %v2271 = vmul.f32 %v2071, %v2148
    %v2272 = vmul.f32 %v2071, %v2154
    %v2273 = vmul.f32 %v2071, %v2160
    %v2274 = vmul.f32 %v2071, %v2166
    %v2275 = vmul.f32 %v2072, %v2148
    %v2276 = vmul.f32 %v2072, %v2154
    %v2277 = vmul.f32 %v2072, %v2160
    %v2278 = vmul.f32 %v2072, %v2166
    %v2279 = vmul.f32 %v2073, %v2148
    %v2280 = vmul.f32 %v2073, %v2154
    %v2281 = vmul.f32 %v2073, %v2160
    %v2282 = vmul.f32 %v2073, %v2166
    %v2283 = vmul.f32 %v2074, %v2148
    %v2284 = vmul.f32 %v2074, %v2154
    %v2285 = vmul.f32 %v2074, %v2160
    %v2286 = vmul.f32 %v2074, %v2166
    %v2287 = vmul.f32 %v2075, %v2148
    %v2288 = vmul.f32 %v2075, %v2154
    %v2289 = vmul.f32 %v2075, %v2160
    %v2290 = vmul.f32 %v2075, %v2166
    %v2291 = vmul.f32 %v2076, %v2148
    %v2292 = vmul.f32 %v2076, %v2154
    %v2293 = vmul.f32 %v2076, %v2160
    %v2294 = vmul.f32 %v2076, %v2166
    %v2295 = vmul.f32 %v2077, %v2148
    %v2296 = vmul.f32 %v2077, %v2154
    %v2297 = vmul.f32 %v2077, %v2160
    %v2298 = vmul.f32 %v2077, %v2166
    %v2299 = vmul.f32 %v2078, %v2148
    %v2300 = vmul.f32 %v2078, %v2154
    %v2301 = vmul.f32 %v2078, %v2160
    %v2302 = vmul.f32 %v2078, %v2166
    %v2303 = vmul.f32 %v2079, %v2172
    %v2304 = vmul.f32 %v2079, %v2178
    %v2305 = vmul.f32 %v2079, %v2184
    %v2306 = vmul.f32 %v2079, %v2190
    %v2307 = vmul.f32 %v2080, %v2172
    %v2308 = vmul.f32 %v2080, %v2178
    %v2309 = vmul.f32 %v2080, %v2184
    %v2310 = vmul.f32 %v2080, %v2190
    %v2311 = vmul.f32 %v2081, %v2172
    %v2312 = vmul.f32 %v2081, %v2178
    %v2313 = vmul.f32 %v2081, %v2184
    %v2314 = vmul.f32 %v2081, %v2190
    %v2315 = vmul.f32 %v2082, %v2172
    %v2316 = vmul.f32 %v2082, %v2178
    %v2317 = vmul.f32 %v2082, %v2184
    %v2318 = vmul.f32 %v2082, %v2190
    %v2319 = vmul.f32 %v2083, %v2172
    %v2320 = vmul.f32 %v2083, %v2178
    %v2321 = vmul.f32 %v2083, %v2184
    %v2322 = vmul.f32 %v2083, %v2190
    %v2323 = vmul.f32 %v2084, %v2172
    %v2324 = vmul.f32 %v2084, %v2178
    %v2325 = vmul.f32 %v2084, %v2184
    %v2326 = vmul.f32 %v2084, %v2190
    %v2327 = vmul.f32 %v2085, %v2172
    %v2328 = vmul.f32 %v2085, %v2178
    %v2329 = vmul.f32 %v2085, %v2184
    %v2330 = vmul.f32 %v2085, %v2190
    %v2331 = vmul.f32 %v2086, %v2172
    %v2332 = vmul.f32 %v2086, %v2178
    %v2333 = vmul.f32 %v2086, %v2184
    %v2334 = vmul.f32 %v2086, %v2190
    %v2335 = vadd.f32 %v1927, %v2207
    %v2336 = vadd.f32 %v1928, %v2208
    %v2337 = vadd.f32 %v1929, %v2209
    %v2338 = vadd.f32 %v1930, %v2210
    %v2339 = vadd.f32 %v1931, %v2211
    %v2340 = vadd.f32 %v1932, %v2212
    %v2341 = vadd.f32 %v1933, %v2213
    %v2342 = vadd.f32 %v1934, %v2214
    %v2343 = vadd.f32 %v1935, %v2215
    %v2344 = vadd.f32 %v1936, %v2216
    %v2345 = vadd.f32 %v1937, %v2217
    %v2346 = vadd.f32 %v1938, %v2218
    %v2347 = vadd.f32 %v1939, %v2219
    %v2348 = vadd.f32 %v1940, %v2220
    %v2349 = vadd.f32 %v1941, %v2221
    %v2350 = vadd.f32 %v1942, %v2222
    %v2351 = vadd.f32 %v1943, %v2223
    %v2352 = vadd.f32 %v1944, %v2224
    %v2353 = vadd.f32 %v1945, %v2225
    %v2354 = vadd.f32 %v1946, %v2226
    %v2355 = vadd.f32 %v1947, %v2227
    %v2356 = vadd.f32 %v1948, %v2228
    %v2357 = vadd.f32 %v1949, %v2229
    %v2358 = vadd.f32 %v1950, %v2230
    %v2359 = vadd.f32 %v1951, %v2231
    %v2360 = vadd.f32 %v1952, %v2232
    %v2361 = vadd.f32 %v1953, %v2233
    %v2362 = vadd.f32 %v1954, %v2234
    %v2363 = vadd.f32 %v1955, %v2235
    %v2364 = vadd.f32 %v1956, %v2236
    %v2365 = vadd.f32 %v1957, %v2237
    %v2366 = vadd.f32 %v1958, %v2238
    %v2367 = vadd.f32 %v1959, %v2239
    %v2368 = vadd.f32 %v1960, %v2240
    %v2369 = vadd.f32 %v1961, %v2241
    %v2370 = vadd.f32 %v1962, %v2242
    %v2371 = vadd.f32 %v1963, %v2243
    %v2372 = vadd.f32 %v1964, %v2244
    %v2373 = vadd.f32 %v1965, %v2245
    %v2374 = vadd.f32 %v1966, %v2246
    %v2375 = vadd.f32 %v1967, %v2247
    %v2376 = vadd.f32 %v1968, %v2248
    %v2377 = vadd.f32 %v1969, %v2249
    %v2378 = vadd.f32 %v1970, %v2250
    %v2379 = vadd.f32 %v1971, %v2251
    %v2380 = vadd.f32 %v1972, %v2252
    %v2381 = vadd.f32 %v1973, %v2253
    %v2382 = vadd.f32 %v1974, %v2254
    %v2383 = vadd.f32 %v1975, %v2255
    %v2384 = vadd.f32 %v1976, %v2256
    %v2385 = vadd.f32 %v1977, %v2257
    %v2386 = vadd.f32 %v1978, %v2258
    %v2387 = vadd.f32 %v1979, %v2259
    %v2388 = vadd.f32 %v1980, %v2260
    %v2389 = vadd.f32 %v1981, %v2261
    %v2390 = vadd.f32 %v1982, %v2262
    %v2391 = vadd.f32 %v1983, %v2263
    %v2392 = vadd.f32 %v1984, %v2264
    %v2393 = vadd.f32 %v1985, %v2265
    %v2394 = vadd.f32 %v1986, %v2266
    %v2395 = vadd.f32 %v1987, %v2267
    %v2396 = vadd.f32 %v1988, %v2268
    %v2397 = vadd.f32 %v1989, %v2269
    %v2398 = vadd.f32 %v1990, %v2270
    %v2399 = vadd.f32 %v1991, %v2271
    %v2400 = vadd.f32 %v1992, %v2272
    %v2401 = vadd.f32 %v1993, %v2273
    %v2402 = vadd.f32 %v1994, %v2274
    %v2403 = vadd.f32 %v1995, %v2275
    %v2404 = vadd.f32 %v1996, %v2276
    %v2405 = vadd.f32 %v1997, %v2277
    %v2406 = vadd.f32 %v1998, %v2278
    %v2407 = vadd.f32 %v1999, %v2279
    %v2408 = vadd.f32 %v2000, %v2280
    %v2409 = vadd.f32 %v2001, %v2281
    %v2410 = vadd.f32 %v2002, %v2282
    %v2411 = vadd.f32 %v2003, %v2283
    %v2412 = vadd.f32 %v2004, %v2284
    %v2413 = vadd.f32 %v2005, %v2285
    %v2414 = vadd.f32 %v2006, %v2286
    %v2415 = vadd.f32 %v2007, %v2287
    %v2416 = vadd.f32 %v2008, %v2288
    %v2417 = vadd.f32 %v2009, %v2289
    %v2418 = vadd.f32 %v2010, %v2290
    %v2419 = vadd.f32 %v2011, %v2291
    %v2420 = vadd.f32 %v2012, %v2292
    %v2421 = vadd.f32 %v2013, %v2293
    %v2422 = vadd.f32 %v2014, %v2294
    %v2423 = vadd.f32 %v2015, %v2295
    %v2424 = vadd.f32 %v2016, %v2296
    %v2425 = vadd.f32 %v2017, %v2297
    %v2426 = vadd.f32 %v2018, %v2298
    %v2427 = vadd.f32 %v2019, %v2299
    %v2428 = vadd.f32 %v2020, %v2300
    %v2429 = vadd.f32 %v2021, %v2301
    %v2430 = vadd.f32 %v2022, %v2302
    %v2431 = vadd.f32 %v2023, %v2303
    %v2432 = vadd.f32 %v2024, %v2304
    %v2433 = vadd.f32 %v2025, %v2305
    %v2434 = vadd.f32 %v2026, %v2306
    %v2435 = vadd.f32 %v2027, %v2307
    %v2436 = vadd.f32 %v2028, %v2308
    %v2437 = vadd.f32 %v2029, %v2309
    %v2438 = vadd.f32 %v2030, %v2310
    %v2439 = vadd.f32 %v2031, %v2311
    %v2440 = vadd.f32 %v2032, %v2312
    %v2441 = vadd.f32 %v2033, %v2313
    %v2442 = vadd.f32 %v2034, %v2314
    %v2443 = vadd.f32 %v2035, %v2315
    %v2444 = vadd.f32 %v2036, %v2316
    %v2445 = vadd.f32 %v2037, %v2317
    %v2446 = vadd.f32 %v2038, %v2318
    %v2447 = vadd.f32 %v2039, %v2319
    %v2448 = vadd.f32 %v2040, %v2320
    %v2449 = vadd.f32 %v2041, %v2321
    %v2450 = vadd.f32 %v2042, %v2322
    %v2451 = vadd.f32 %v2043, %v2323
    %v2452 = vadd.f32 %v2044, %v2324
    %v2453 = vadd.f32 %v2045, %v2325
    %v2454 = vadd.f32 %v2046, %v2326
    %v2455 = vadd.f32 %v2047, %v2327
    %v2456 = vadd.f32 %v2048, %v2328
    %v2457 = vadd.f32 %v2049, %v2329
    %v2458 = vadd.f32 %v2050, %v2330
    %v2459 = vadd.f32 %v2051, %v2331
    %v2460 = vadd.f32 %v2052, %v2332
    %v2461 = vadd.f32 %v2053, %v2333
    %v2462 = vadd.f32 %v2054, %v2334
    %v2463 = vperm.slane %v1331, 3
    %v2464 = vperm.slane %v1332, 3
    %v2465 = vperm.slane %v1333, 3
    %v2466 = vperm.slane %v1334, 3
    %v2467 = vperm.slane %v1335, 3
    %v2468 = vperm.slane %v1336, 3
    %v2469 = vperm.slane %v1337, 3
    %v2470 = vperm.slane %v1338, 3
    %v2471 = vperm.slane %v1339, 3
    %v2472 = vperm.slane %v1340, 3
    %v2473 = vperm.slane %v1341, 3
    %v2474 = vperm.slane %v1342, 3
    %v2475 = vperm.slane %v1343, 3
    %v2476 = vperm.slane %v1344, 3
    %v2477 = vperm.slane %v1345, 3
    %v2478 = vperm.slane %v1346, 3
    %v2479 = vperm.slane %v1347, 3
    %v2480 = vperm.slane %v1348, 3
    %v2481 = vperm.slane %v1349, 3
    %v2482 = vperm.slane %v1350, 3
    %v2483 = vperm.slane %v1351, 3
    %v2484 = vperm.slane %v1352, 3
    %v2485 = vperm.slane %v1353, 3
    %v2486 = vperm.slane %v1354, 3
    %v2487 = vperm.slane %v1355, 3
    %v2488 = vperm.slane %v1356, 3
    %v2489 = vperm.slane %v1357, 3
    %v2490 = vperm.slane %v1358, 3
    %v2491 = vperm.slane %v1359, 3
    %v2492 = vperm.slane %v1360, 3
    %v2493 = vperm.slane %v1361, 3
    %v2494 = vperm.slane %v1362, 3
    %v2495 = vperm.slane %v268, 3
    %v2496 = vperm.slane %v269, 3
    %v2497 = vperm.slane %v270, 3
    %v2498 = vperm.slane %v271, 3
    %v2503 = vlaneseq
    %v2504 = vshrl.u32 %v2503, 7
    %2506 = vset.pattern.permute.xlu0 %v2504
    %2507 = vperm.xlu0 %2506, %v2495
    %v2508 = vpop.permute.xlu0 %2507
    %v2509 = vlaneseq
    %v2510 = vshrl.u32 %v2509, 7
    %v2511 = vadd.s32 %v2510, 8
    %2512 = vset.pattern.permute.xlu0 %v2511
    %2513 = vperm.xlu0 %2512, %v2495
    %v2514 = vpop.permute.xlu0 %2513
    %v2515 = vlaneseq
    %v2516 = vshrl.u32 %v2515, 7
    %v2517 = vadd.s32 %v2516, 16
    %2518 = vset.pattern.permute.xlu0 %v2517
    %2519 = vperm.xlu0 %2518, %v2495
    %v2520 = vpop.permute.xlu0 %2519
    %v2521 = vlaneseq
    %v2522 = vshrl.u32 %v2521, 7
    %v2523 = vadd.s32 %v2522, 24
    %2524 = vset.pattern.permute.xlu0 %v2523
    %2525 = vperm.xlu0 %2524, %v2495
    %v2526 = vpop.permute.xlu0 %2525
    %v2527 = vlaneseq
    %v2528 = vshrl.u32 %v2527, 7
    %2530 = vset.pattern.permute.xlu0 %v2528
    %2531 = vperm.xlu0 %2530, %v2496
    %v2532 = vpop.permute.xlu0 %2531
    %v2533 = vlaneseq
    %v2534 = vshrl.u32 %v2533, 7
    %v2535 = vadd.s32 %v2534, 8
    %2536 = vset.pattern.permute.xlu0 %v2535
    %2537 = vperm.xlu0 %2536, %v2496
    %v2538 = vpop.permute.xlu0 %2537
    %v2539 = vlaneseq
    %v2540 = vshrl.u32 %v2539, 7
    %v2541 = vadd.s32 %v2540, 16
    %2542 = vset.pattern.permute.xlu0 %v2541
    %2543 = vperm.xlu0 %2542, %v2496
    %v2544 = vpop.permute.xlu0 %2543
    %v2545 = vlaneseq
    %v2546 = vshrl.u32 %v2545, 7
    %v2547 = vadd.s32 %v2546, 24
    %2548 = vset.pattern.permute.xlu0 %v2547
    %2549 = vperm.xlu0 %2548, %v2496
    %v2550 = vpop.permute.xlu0 %2549
    %v2551 = vlaneseq
    %v2552 = vshrl.u32 %v2551, 7
    %2554 = vset.pattern.permute.xlu0 %v2552
    %2555 = vperm.xlu0 %2554, %v2497
    %v2556 = vpop.permute.xlu0 %2555
    %v2557 = vlaneseq
    %v2558 = vshrl.u32 %v2557, 7
    %v2559 = vadd.s32 %v2558, 8
    %2560 = vset.pattern.permute.xlu0 %v2559
    %2561 = vperm.xlu0 %2560, %v2497
    %v2562 = vpop.permute.xlu0 %2561
    %v2563 = vlaneseq
    %v2564 = vshrl.u32 %v2563, 7
    %v2565 = vadd.s32 %v2564, 16
    %2566 = vset.pattern.permute.xlu0 %v2565
    %2567 = vperm.xlu0 %2566, %v2497
    %v2568 = vpop.permute.xlu0 %2567
    %v2569 = vlaneseq
    %v2570 = vshrl.u32 %v2569, 7
    %v2571 = vadd.s32 %v2570, 24
    %2572 = vset.pattern.permute.xlu0 %v2571
    %2573 = vperm.xlu0 %2572, %v2497
    %v2574 = vpop.permute.xlu0 %2573
    %v2575 = vlaneseq
    %v2576 = vshrl.u32 %v2575, 7
    %2578 = vset.pattern.permute.xlu0 %v2576
    %2579 = vperm.xlu0 %2578, %v2498
    %v2580 = vpop.permute.xlu0 %2579
    %v2581 = vlaneseq
    %v2582 = vshrl.u32 %v2581, 7
    %v2583 = vadd.s32 %v2582, 8
    %2584 = vset.pattern.permute.xlu0 %v2583
    %2585 = vperm.xlu0 %2584, %v2498
    %v2586 = vpop.permute.xlu0 %2585
    %v2587 = vlaneseq
    %v2588 = vshrl.u32 %v2587, 7
    %v2589 = vadd.s32 %v2588, 16
    %2590 = vset.pattern.permute.xlu0 %v2589
    %2591 = vperm.xlu0 %2590, %v2498
    %v2592 = vpop.permute.xlu0 %2591
    %v2593 = vlaneseq
    %v2594 = vshrl.u32 %v2593, 7
    %v2595 = vadd.s32 %v2594, 24
    %2596 = vset.pattern.permute.xlu0 %v2595
    %2597 = vperm.xlu0 %2596, %v2498
    %v2598 = vpop.permute.xlu0 %2597
    %v2615 = vmul.f32 %v2463, %v2508
    %v2616 = vmul.f32 %v2463, %v2514
    %v2617 = vmul.f32 %v2463, %v2520
    %v2618 = vmul.f32 %v2463, %v2526
    %v2619 = vmul.f32 %v2464, %v2508
    %v2620 = vmul.f32 %v2464, %v2514
    %v2621 = vmul.f32 %v2464, %v2520
    %v2622 = vmul.f32 %v2464, %v2526
    %v2623 = vmul.f32 %v2465, %v2508
    %v2624 = vmul.f32 %v2465, %v2514
    %v2625 = vmul.f32 %v2465, %v2520
    %v2626 = vmul.f32 %v2465, %v2526
    %v2627 = vmul.f32 %v2466, %v2508
    %v2628 = vmul.f32 %v2466, %v2514
    %v2629 = vmul.f32 %v2466, %v2520
    %v2630 = vmul.f32 %v2466, %v2526
    %v2631 = vmul.f32 %v2467, %v2508
    %v2632 = vmul.f32 %v2467, %v2514
    %v2633 = vmul.f32 %v2467, %v2520
    %v2634 = vmul.f32 %v2467, %v2526
    %v2635 = vmul.f32 %v2468, %v2508
    %v2636 = vmul.f32 %v2468, %v2514
    %v2637 = vmul.f32 %v2468, %v2520
    %v2638 = vmul.f32 %v2468, %v2526
    %v2639 = vmul.f32 %v2469, %v2508
    %v2640 = vmul.f32 %v2469, %v2514
    %v2641 = vmul.f32 %v2469, %v2520
    %v2642 = vmul.f32 %v2469, %v2526
    %v2643 = vmul.f32 %v2470, %v2508
    %v2644 = vmul.f32 %v2470, %v2514
    %v2645 = vmul.f32 %v2470, %v2520
    %v2646 = vmul.f32 %v2470, %v2526
    %v2647 = vmul.f32 %v2471, %v2532
    %v2648 = vmul.f32 %v2471, %v2538
    %v2649 = vmul.f32 %v2471, %v2544
    %v2650 = vmul.f32 %v2471, %v2550
    %v2651 = vmul.f32 %v2472, %v2532
    %v2652 = vmul.f32 %v2472, %v2538
    %v2653 = vmul.f32 %v2472, %v2544
    %v2654 = vmul.f32 %v2472, %v2550
    %v2655 = vmul.f32 %v2473, %v2532
    %v2656 = vmul.f32 %v2473, %v2538
    %v2657 = vmul.f32 %v2473, %v2544
    %v2658 = vmul.f32 %v2473, %v2550
    %v2659 = vmul.f32 %v2474, %v2532
    %v2660 = vmul.f32 %v2474, %v2538
    %v2661 = vmul.f32 %v2474, %v2544
    %v2662 = vmul.f32 %v2474, %v2550
    %v2663 = vmul.f32 %v2475, %v2532
    %v2664 = vmul.f32 %v2475, %v2538
    %v2665 = vmul.f32 %v2475, %v2544
    %v2666 = vmul.f32 %v2475, %v2550
    %v2667 = vmul.f32 %v2476, %v2532
    %v2668 = vmul.f32 %v2476, %v2538
    %v2669 = vmul.f32 %v2476, %v2544
    %v2670 = vmul.f32 %v2476, %v2550
    %v2671 = vmul.f32 %v2477, %v2532
    %v2672 = vmul.f32 %v2477, %v2538
    %v2673 = vmul.f32 %v2477, %v2544
    %v2674 = vmul.f32 %v2477, %v2550
    %v2675 = vmul.f32 %v2478, %v2532
    %v2676 = vmul.f32 %v2478, %v2538
    %v2677 = vmul.f32 %v2478, %v2544
    %v2678 = vmul.f32 %v2478, %v2550
    %v2679 = vmul.f32 %v2479, %v2556
    %v2680 = vmul.f32 %v2479, %v2562
    %v2681 = vmul.f32 %v2479, %v2568
    %v2682 = vmul.f32 %v2479, %v2574
    %v2683 = vmul.f32 %v2480, %v2556
    %v2684 = vmul.f32 %v2480, %v2562
    %v2685 = vmul.f32 %v2480, %v2568
    %v2686 = vmul.f32 %v2480, %v2574
    %v2687 = vmul.f32 %v2481, %v2556
    %v2688 = vmul.f32 %v2481, %v2562
    %v2689 = vmul.f32 %v2481, %v2568
    %v2690 = vmul.f32 %v2481, %v2574
    %v2691 = vmul.f32 %v2482, %v2556
    %v2692 = vmul.f32 %v2482, %v2562
    %v2693 = vmul.f32 %v2482, %v2568
    %v2694 = vmul.f32 %v2482, %v2574
    %v2695 = vmul.f32 %v2483, %v2556
    %v2696 = vmul.f32 %v2483, %v2562
    %v2697 = vmul.f32 %v2483, %v2568
    %v2698 = vmul.f32 %v2483, %v2574
    %v2699 = vmul.f32 %v2484, %v2556
    %v2700 = vmul.f32 %v2484, %v2562
    %v2701 = vmul.f32 %v2484, %v2568
    %v2702 = vmul.f32 %v2484, %v2574
    %v2703 = vmul.f32 %v2485, %v2556
    %v2704 = vmul.f32 %v2485, %v2562
    %v2705 = vmul.f32 %v2485, %v2568
    %v2706 = vmul.f32 %v2485, %v2574
    %v2707 = vmul.f32 %v2486, %v2556
    %v2708 = vmul.f32 %v2486, %v2562
    %v2709 = vmul.f32 %v2486, %v2568
    %v2710 = vmul.f32 %v2486, %v2574
    %v2711 = vmul.f32 %v2487, %v2580
    %v2712 = vmul.f32 %v2487, %v2586
    %v2713 = vmul.f32 %v2487, %v2592
    %v2714 = vmul.f32 %v2487, %v2598
    %v2715 = vmul.f32 %v2488, %v2580
    %v2716 = vmul.f32 %v2488, %v2586
    %v2717 = vmul.f32 %v2488, %v2592
    %v2718 = vmul.f32 %v2488, %v2598
    %v2719 = vmul.f32 %v2489, %v2580
    %v2720 = vmul.f32 %v2489, %v2586
    %v2721 = vmul.f32 %v2489, %v2592
    %v2722 = vmul.f32 %v2489, %v2598
    %v2723 = vmul.f32 %v2490, %v2580
    %v2724 = vmul.f32 %v2490, %v2586
    %v2725 = vmul.f32 %v2490, %v2592
    %v2726 = vmul.f32 %v2490, %v2598
    %v2727 = vmul.f32 %v2491, %v2580
    %v2728 = vmul.f32 %v2491, %v2586
    %v2729 = vmul.f32 %v2491, %v2592
    %v2730 = vmul.f32 %v2491, %v2598
    %v2731 = vmul.f32 %v2492, %v2580
    %v2732 = vmul.f32 %v2492, %v2586
    %v2733 = vmul.f32 %v2492, %v2592
    %v2734 = vmul.f32 %v2492, %v2598
    %v2735 = vmul.f32 %v2493, %v2580
    %v2736 = vmul.f32 %v2493, %v2586
    %v2737 = vmul.f32 %v2493, %v2592
    %v2738 = vmul.f32 %v2493, %v2598
    %v2739 = vmul.f32 %v2494, %v2580
    %v2740 = vmul.f32 %v2494, %v2586
    %v2741 = vmul.f32 %v2494, %v2592
    %v2742 = vmul.f32 %v2494, %v2598
    %v2743 = vadd.f32 %v2335, %v2615
    %v2744 = vadd.f32 %v2336, %v2616
    %v2745 = vadd.f32 %v2337, %v2617
    %v2746 = vadd.f32 %v2338, %v2618
    %v2747 = vadd.f32 %v2339, %v2619
    %v2748 = vadd.f32 %v2340, %v2620
    %v2749 = vadd.f32 %v2341, %v2621
    %v2750 = vadd.f32 %v2342, %v2622
    %v2751 = vadd.f32 %v2343, %v2623
    %v2752 = vadd.f32 %v2344, %v2624
    %v2753 = vadd.f32 %v2345, %v2625
    %v2754 = vadd.f32 %v2346, %v2626
    %v2755 = vadd.f32 %v2347, %v2627
    %v2756 = vadd.f32 %v2348, %v2628
    %v2757 = vadd.f32 %v2349, %v2629
    %v2758 = vadd.f32 %v2350, %v2630
    %v2759 = vadd.f32 %v2351, %v2631
    %v2760 = vadd.f32 %v2352, %v2632
    %v2761 = vadd.f32 %v2353, %v2633
    %v2762 = vadd.f32 %v2354, %v2634
    %v2763 = vadd.f32 %v2355, %v2635
    %v2764 = vadd.f32 %v2356, %v2636
    %v2765 = vadd.f32 %v2357, %v2637
    %v2766 = vadd.f32 %v2358, %v2638
    %v2767 = vadd.f32 %v2359, %v2639
    %v2768 = vadd.f32 %v2360, %v2640
    %v2769 = vadd.f32 %v2361, %v2641
    %v2770 = vadd.f32 %v2362, %v2642
    %v2771 = vadd.f32 %v2363, %v2643
    %v2772 = vadd.f32 %v2364, %v2644
    %v2773 = vadd.f32 %v2365, %v2645
    %v2774 = vadd.f32 %v2366, %v2646
    %v2775 = vadd.f32 %v2367, %v2647
    %v2776 = vadd.f32 %v2368, %v2648
    %v2777 = vadd.f32 %v2369, %v2649
    %v2778 = vadd.f32 %v2370, %v2650
    %v2779 = vadd.f32 %v2371, %v2651
    %v2780 = vadd.f32 %v2372, %v2652
    %v2781 = vadd.f32 %v2373, %v2653
    %v2782 = vadd.f32 %v2374, %v2654
    %v2783 = vadd.f32 %v2375, %v2655
    %v2784 = vadd.f32 %v2376, %v2656
    %v2785 = vadd.f32 %v2377, %v2657
    %v2786 = vadd.f32 %v2378, %v2658
    %v2787 = vadd.f32 %v2379, %v2659
    %v2788 = vadd.f32 %v2380, %v2660
    %v2789 = vadd.f32 %v2381, %v2661
    %v2790 = vadd.f32 %v2382, %v2662
    %v2791 = vadd.f32 %v2383, %v2663
    %v2792 = vadd.f32 %v2384, %v2664
    %v2793 = vadd.f32 %v2385, %v2665
    %v2794 = vadd.f32 %v2386, %v2666
    %v2795 = vadd.f32 %v2387, %v2667
    %v2796 = vadd.f32 %v2388, %v2668
    %v2797 = vadd.f32 %v2389, %v2669
    %v2798 = vadd.f32 %v2390, %v2670
    %v2799 = vadd.f32 %v2391, %v2671
    %v2800 = vadd.f32 %v2392, %v2672
    %v2801 = vadd.f32 %v2393, %v2673
    %v2802 = vadd.f32 %v2394, %v2674
    %v2803 = vadd.f32 %v2395, %v2675
    %v2804 = vadd.f32 %v2396, %v2676
    %v2805 = vadd.f32 %v2397, %v2677
    %v2806 = vadd.f32 %v2398, %v2678
    %v2807 = vadd.f32 %v2399, %v2679
    %v2808 = vadd.f32 %v2400, %v2680
    %v2809 = vadd.f32 %v2401, %v2681
    %v2810 = vadd.f32 %v2402, %v2682
    %v2811 = vadd.f32 %v2403, %v2683
    %v2812 = vadd.f32 %v2404, %v2684
    %v2813 = vadd.f32 %v2405, %v2685
    %v2814 = vadd.f32 %v2406, %v2686
    %v2815 = vadd.f32 %v2407, %v2687
    %v2816 = vadd.f32 %v2408, %v2688
    %v2817 = vadd.f32 %v2409, %v2689
    %v2818 = vadd.f32 %v2410, %v2690
    %v2819 = vadd.f32 %v2411, %v2691
    %v2820 = vadd.f32 %v2412, %v2692
    %v2821 = vadd.f32 %v2413, %v2693
    %v2822 = vadd.f32 %v2414, %v2694
    %v2823 = vadd.f32 %v2415, %v2695
    %v2824 = vadd.f32 %v2416, %v2696
    %v2825 = vadd.f32 %v2417, %v2697
    %v2826 = vadd.f32 %v2418, %v2698
    %v2827 = vadd.f32 %v2419, %v2699
    %v2828 = vadd.f32 %v2420, %v2700
    %v2829 = vadd.f32 %v2421, %v2701
    %v2830 = vadd.f32 %v2422, %v2702
    %v2831 = vadd.f32 %v2423, %v2703
    %v2832 = vadd.f32 %v2424, %v2704
    %v2833 = vadd.f32 %v2425, %v2705
    %v2834 = vadd.f32 %v2426, %v2706
    %v2835 = vadd.f32 %v2427, %v2707
    %v2836 = vadd.f32 %v2428, %v2708
    %v2837 = vadd.f32 %v2429, %v2709
    %v2838 = vadd.f32 %v2430, %v2710
    %v2839 = vadd.f32 %v2431, %v2711
    %v2840 = vadd.f32 %v2432, %v2712
    %v2841 = vadd.f32 %v2433, %v2713
    %v2842 = vadd.f32 %v2434, %v2714
    %v2843 = vadd.f32 %v2435, %v2715
    %v2844 = vadd.f32 %v2436, %v2716
    %v2845 = vadd.f32 %v2437, %v2717
    %v2846 = vadd.f32 %v2438, %v2718
    %v2847 = vadd.f32 %v2439, %v2719
    %v2848 = vadd.f32 %v2440, %v2720
    %v2849 = vadd.f32 %v2441, %v2721
    %v2850 = vadd.f32 %v2442, %v2722
    %v2851 = vadd.f32 %v2443, %v2723
    %v2852 = vadd.f32 %v2444, %v2724
    %v2853 = vadd.f32 %v2445, %v2725
    %v2854 = vadd.f32 %v2446, %v2726
    %v2855 = vadd.f32 %v2447, %v2727
    %v2856 = vadd.f32 %v2448, %v2728
    %v2857 = vadd.f32 %v2449, %v2729
    %v2858 = vadd.f32 %v2450, %v2730
    %v2859 = vadd.f32 %v2451, %v2731
    %v2860 = vadd.f32 %v2452, %v2732
    %v2861 = vadd.f32 %v2453, %v2733
    %v2862 = vadd.f32 %v2454, %v2734
    %v2863 = vadd.f32 %v2455, %v2735
    %v2864 = vadd.f32 %v2456, %v2736
    %v2865 = vadd.f32 %v2457, %v2737
    %v2866 = vadd.f32 %v2458, %v2738
    %v2867 = vadd.f32 %v2459, %v2739
    %v2868 = vadd.f32 %v2460, %v2740
    %v2869 = vadd.f32 %v2461, %v2741
    %v2870 = vadd.f32 %v2462, %v2742
    %v2871 = vperm.slane %v1331, 4
    %v2872 = vperm.slane %v1332, 4
    %v2873 = vperm.slane %v1333, 4
    %v2874 = vperm.slane %v1334, 4
    %v2875 = vperm.slane %v1335, 4
    %v2876 = vperm.slane %v1336, 4
    %v2877 = vperm.slane %v1337, 4
    %v2878 = vperm.slane %v1338, 4
    %v2879 = vperm.slane %v1339, 4
    %v2880 = vperm.slane %v1340, 4
    %v2881 = vperm.slane %v1341, 4
    %v2882 = vperm.slane %v1342, 4
    %v2883 = vperm.slane %v1343, 4
    %v2884 = vperm.slane %v1344, 4
    %v2885 = vperm.slane %v1345, 4
    %v2886 = vperm.slane %v1346, 4
    %v2887 = vperm.slane %v1347, 4
    %v2888 = vperm.slane %v1348, 4
    %v2889 = vperm.slane %v1349, 4
    %v2890 = vperm.slane %v1350, 4
    %v2891 = vperm.slane %v1351, 4
    %v2892 = vperm.slane %v1352, 4
    %v2893 = vperm.slane %v1353, 4
    %v2894 = vperm.slane %v1354, 4
    %v2895 = vperm.slane %v1355, 4
    %v2896 = vperm.slane %v1356, 4
    %v2897 = vperm.slane %v1357, 4
    %v2898 = vperm.slane %v1358, 4
    %v2899 = vperm.slane %v1359, 4
    %v2900 = vperm.slane %v1360, 4
    %v2901 = vperm.slane %v1361, 4
    %v2902 = vperm.slane %v1362, 4
    %v2903 = vperm.slane %v268, 4
    %v2904 = vperm.slane %v269, 4
    %v2905 = vperm.slane %v270, 4
    %v2906 = vperm.slane %v271, 4
    %v2911 = vlaneseq
    %v2912 = vshrl.u32 %v2911, 7
    %2914 = vset.pattern.permute.xlu0 %v2912
    %2915 = vperm.xlu0 %2914, %v2903
    %v2916 = vpop.permute.xlu0 %2915
    %v2917 = vlaneseq
    %v2918 = vshrl.u32 %v2917, 7
    %v2919 = vadd.s32 %v2918, 8
    %2920 = vset.pattern.permute.xlu0 %v2919
    %2921 = vperm.xlu0 %2920, %v2903
    %v2922 = vpop.permute.xlu0 %2921
    %v2923 = vlaneseq
    %v2924 = vshrl.u32 %v2923, 7
    %v2925 = vadd.s32 %v2924, 16
    %2926 = vset.pattern.permute.xlu0 %v2925
    %2927 = vperm.xlu0 %2926, %v2903
    %v2928 = vpop.permute.xlu0 %2927
    %v2929 = vlaneseq
    %v2930 = vshrl.u32 %v2929, 7
    %v2931 = vadd.s32 %v2930, 24
    %2932 = vset.pattern.permute.xlu0 %v2931
    %2933 = vperm.xlu0 %2932, %v2903
    %v2934 = vpop.permute.xlu0 %2933
    %v2935 = vlaneseq
    %v2936 = vshrl.u32 %v2935, 7
    %2938 = vset.pattern.permute.xlu0 %v2936
    %2939 = vperm.xlu0 %2938, %v2904
    %v2940 = vpop.permute.xlu0 %2939
    %v2941 = vlaneseq
    %v2942 = vshrl.u32 %v2941, 7
    %v2943 = vadd.s32 %v2942, 8
    %2944 = vset.pattern.permute.xlu0 %v2943
    %2945 = vperm.xlu0 %2944, %v2904
    %v2946 = vpop.permute.xlu0 %2945
    %v2947 = vlaneseq
    %v2948 = vshrl.u32 %v2947, 7
    %v2949 = vadd.s32 %v2948, 16
    %2950 = vset.pattern.permute.xlu0 %v2949
    %2951 = vperm.xlu0 %2950, %v2904
    %v2952 = vpop.permute.xlu0 %2951
    %v2953 = vlaneseq
    %v2954 = vshrl.u32 %v2953, 7
    %v2955 = vadd.s32 %v2954, 24
    %2956 = vset.pattern.permute.xlu0 %v2955
    %2957 = vperm.xlu0 %2956, %v2904
    %v2958 = vpop.permute.xlu0 %2957
    %v2959 = vlaneseq
    %v2960 = vshrl.u32 %v2959, 7
    %2962 = vset.pattern.permute.xlu0 %v2960
    %2963 = vperm.xlu0 %2962, %v2905
    %v2964 = vpop.permute.xlu0 %2963
    %v2965 = vlaneseq
    %v2966 = vshrl.u32 %v2965, 7
    %v2967 = vadd.s32 %v2966, 8
    %2968 = vset.pattern.permute.xlu0 %v2967
    %2969 = vperm.xlu0 %2968, %v2905
    %v2970 = vpop.permute.xlu0 %2969
    %v2971 = vlaneseq
    %v2972 = vshrl.u32 %v2971, 7
    %v2973 = vadd.s32 %v2972, 16
    %2974 = vset.pattern.permute.xlu0 %v2973
    %2975 = vperm.xlu0 %2974, %v2905
    %v2976 = vpop.permute.xlu0 %2975
    %v2977 = vlaneseq
    %v2978 = vshrl.u32 %v2977, 7
    %v2979 = vadd.s32 %v2978, 24
    %2980 = vset.pattern.permute.xlu0 %v2979
    %2981 = vperm.xlu0 %2980, %v2905
    %v2982 = vpop.permute.xlu0 %2981
    %v2983 = vlaneseq
    %v2984 = vshrl.u32 %v2983, 7
    %2986 = vset.pattern.permute.xlu0 %v2984
    %2987 = vperm.xlu0 %2986, %v2906
    %v2988 = vpop.permute.xlu0 %2987
    %v2989 = vlaneseq
    %v2990 = vshrl.u32 %v2989, 7
    %v2991 = vadd.s32 %v2990, 8
    %2992 = vset.pattern.permute.xlu0 %v2991
    %2993 = vperm.xlu0 %2992, %v2906
    %v2994 = vpop.permute.xlu0 %2993
    %v2995 = vlaneseq
    %v2996 = vshrl.u32 %v2995, 7
    %v2997 = vadd.s32 %v2996, 16
    %2998 = vset.pattern.permute.xlu0 %v2997
    %2999 = vperm.xlu0 %2998, %v2906
    %v3000 = vpop.permute.xlu0 %2999
    %v3001 = vlaneseq
    %v3002 = vshrl.u32 %v3001, 7
    %v3003 = vadd.s32 %v3002, 24
    %3004 = vset.pattern.permute.xlu0 %v3003
    %3005 = vperm.xlu0 %3004, %v2906
    %v3006 = vpop.permute.xlu0 %3005
    %v3023 = vmul.f32 %v2871, %v2916
    %v3024 = vmul.f32 %v2871, %v2922
    %v3025 = vmul.f32 %v2871, %v2928
    %v3026 = vmul.f32 %v2871, %v2934
    %v3027 = vmul.f32 %v2872, %v2916
    %v3028 = vmul.f32 %v2872, %v2922
    %v3029 = vmul.f32 %v2872, %v2928
    %v3030 = vmul.f32 %v2872, %v2934
    %v3031 = vmul.f32 %v2873, %v2916
    %v3032 = vmul.f32 %v2873, %v2922
    %v3033 = vmul.f32 %v2873, %v2928
    %v3034 = vmul.f32 %v2873, %v2934
    %v3035 = vmul.f32 %v2874, %v2916
    %v3036 = vmul.f32 %v2874, %v2922
    %v3037 = vmul.f32 %v2874, %v2928
    %v3038 = vmul.f32 %v2874, %v2934
    %v3039 = vmul.f32 %v2875, %v2916
    %v3040 = vmul.f32 %v2875, %v2922
    %v3041 = vmul.f32 %v2875, %v2928
    %v3042 = vmul.f32 %v2875, %v2934
    %v3043 = vmul.f32 %v2876, %v2916
    %v3044 = vmul.f32 %v2876, %v2922
    %v3045 = vmul.f32 %v2876, %v2928
    %v3046 = vmul.f32 %v2876, %v2934
    %v3047 = vmul.f32 %v2877, %v2916
    %v3048 = vmul.f32 %v2877, %v2922
    %v3049 = vmul.f32 %v2877, %v2928
    %v3050 = vmul.f32 %v2877, %v2934
    %v3051 = vmul.f32 %v2878, %v2916
    %v3052 = vmul.f32 %v2878, %v2922
    %v3053 = vmul.f32 %v2878, %v2928
    %v3054 = vmul.f32 %v2878, %v2934
    %v3055 = vmul.f32 %v2879, %v2940
    %v3056 = vmul.f32 %v2879, %v2946
    %v3057 = vmul.f32 %v2879, %v2952
    %v3058 = vmul.f32 %v2879, %v2958
    %v3059 = vmul.f32 %v2880, %v2940
    %v3060 = vmul.f32 %v2880, %v2946
    %v3061 = vmul.f32 %v2880, %v2952
    %v3062 = vmul.f32 %v2880, %v2958
    %v3063 = vmul.f32 %v2881, %v2940
    %v3064 = vmul.f32 %v2881, %v2946
    %v3065 = vmul.f32 %v2881, %v2952
    %v3066 = vmul.f32 %v2881, %v2958
    %v3067 = vmul.f32 %v2882, %v2940
    %v3068 = vmul.f32 %v2882, %v2946
    %v3069 = vmul.f32 %v2882, %v2952
    %v3070 = vmul.f32 %v2882, %v2958
    %v3071 = vmul.f32 %v2883, %v2940
    %v3072 = vmul.f32 %v2883, %v2946
    %v3073 = vmul.f32 %v2883, %v2952
    %v3074 = vmul.f32 %v2883, %v2958
    %v3075 = vmul.f32 %v2884, %v2940
    %v3076 = vmul.f32 %v2884, %v2946
    %v3077 = vmul.f32 %v2884, %v2952
    %v3078 = vmul.f32 %v2884, %v2958
    %v3079 = vmul.f32 %v2885, %v2940
    %v3080 = vmul.f32 %v2885, %v2946
    %v3081 = vmul.f32 %v2885, %v2952
    %v3082 = vmul.f32 %v2885, %v2958
    %v3083 = vmul.f32 %v2886, %v2940
    %v3084 = vmul.f32 %v2886, %v2946
    %v3085 = vmul.f32 %v2886, %v2952
    %v3086 = vmul.f32 %v2886, %v2958
    %v3087 = vmul.f32 %v2887, %v2964
    %v3088 = vmul.f32 %v2887, %v2970
    %v3089 = vmul.f32 %v2887, %v2976
    %v3090 = vmul.f32 %v2887, %v2982
    %v3091 = vmul.f32 %v2888, %v2964
    %v3092 = vmul.f32 %v2888, %v2970
    %v3093 = vmul.f32 %v2888, %v2976
    %v3094 = vmul.f32 %v2888, %v2982
    %v3095 = vmul.f32 %v2889, %v2964
    %v3096 = vmul.f32 %v2889, %v2970
    %v3097 = vmul.f32 %v2889, %v2976
    %v3098 = vmul.f32 %v2889, %v2982
    %v3099 = vmul.f32 %v2890, %v2964
    %v3100 = vmul.f32 %v2890, %v2970
    %v3101 = vmul.f32 %v2890, %v2976
    %v3102 = vmul.f32 %v2890, %v2982
    %v3103 = vmul.f32 %v2891, %v2964
    %v3104 = vmul.f32 %v2891, %v2970
    %v3105 = vmul.f32 %v2891, %v2976
    %v3106 = vmul.f32 %v2891, %v2982
    %v3107 = vmul.f32 %v2892, %v2964
    %v3108 = vmul.f32 %v2892, %v2970
    %v3109 = vmul.f32 %v2892, %v2976
    %v3110 = vmul.f32 %v2892, %v2982
    %v3111 = vmul.f32 %v2893, %v2964
    %v3112 = vmul.f32 %v2893, %v2970
    %v3113 = vmul.f32 %v2893, %v2976
    %v3114 = vmul.f32 %v2893, %v2982
    %v3115 = vmul.f32 %v2894, %v2964
    %v3116 = vmul.f32 %v2894, %v2970
    %v3117 = vmul.f32 %v2894, %v2976
    %v3118 = vmul.f32 %v2894, %v2982
    %v3119 = vmul.f32 %v2895, %v2988
    %v3120 = vmul.f32 %v2895, %v2994
    %v3121 = vmul.f32 %v2895, %v3000
    %v3122 = vmul.f32 %v2895, %v3006
    %v3123 = vmul.f32 %v2896, %v2988
    %v3124 = vmul.f32 %v2896, %v2994
    %v3125 = vmul.f32 %v2896, %v3000
    %v3126 = vmul.f32 %v2896, %v3006
    %v3127 = vmul.f32 %v2897, %v2988
    %v3128 = vmul.f32 %v2897, %v2994
    %v3129 = vmul.f32 %v2897, %v3000
    %v3130 = vmul.f32 %v2897, %v3006
    %v3131 = vmul.f32 %v2898, %v2988
    %v3132 = vmul.f32 %v2898, %v2994
    %v3133 = vmul.f32 %v2898, %v3000
    %v3134 = vmul.f32 %v2898, %v3006
    %v3135 = vmul.f32 %v2899, %v2988
    %v3136 = vmul.f32 %v2899, %v2994
    %v3137 = vmul.f32 %v2899, %v3000
    %v3138 = vmul.f32 %v2899, %v3006
    %v3139 = vmul.f32 %v2900, %v2988
    %v3140 = vmul.f32 %v2900, %v2994
    %v3141 = vmul.f32 %v2900, %v3000
    %v3142 = vmul.f32 %v2900, %v3006
    %v3143 = vmul.f32 %v2901, %v2988
    %v3144 = vmul.f32 %v2901, %v2994
    %v3145 = vmul.f32 %v2901, %v3000
    %v3146 = vmul.f32 %v2901, %v3006
    %v3147 = vmul.f32 %v2902, %v2988
    %v3148 = vmul.f32 %v2902, %v2994
    %v3149 = vmul.f32 %v2902, %v3000
    %v3150 = vmul.f32 %v2902, %v3006
    %v3151 = vadd.f32 %v2743, %v3023
    %v3152 = vadd.f32 %v2744, %v3024
    %v3153 = vadd.f32 %v2745, %v3025
    %v3154 = vadd.f32 %v2746, %v3026
    %v3155 = vadd.f32 %v2747, %v3027
    %v3156 = vadd.f32 %v2748, %v3028
    %v3157 = vadd.f32 %v2749, %v3029
    %v3158 = vadd.f32 %v2750, %v3030
    %v3159 = vadd.f32 %v2751, %v3031
    %v3160 = vadd.f32 %v2752, %v3032
    %v3161 = vadd.f32 %v2753, %v3033
    %v3162 = vadd.f32 %v2754, %v3034
    %v3163 = vadd.f32 %v2755, %v3035
    %v3164 = vadd.f32 %v2756, %v3036
    %v3165 = vadd.f32 %v2757, %v3037
    %v3166 = vadd.f32 %v2758, %v3038
    %v3167 = vadd.f32 %v2759, %v3039
    %v3168 = vadd.f32 %v2760, %v3040
    %v3169 = vadd.f32 %v2761, %v3041
    %v3170 = vadd.f32 %v2762, %v3042
    %v3171 = vadd.f32 %v2763, %v3043
    %v3172 = vadd.f32 %v2764, %v3044
    %v3173 = vadd.f32 %v2765, %v3045
    %v3174 = vadd.f32 %v2766, %v3046
    %v3175 = vadd.f32 %v2767, %v3047
    %v3176 = vadd.f32 %v2768, %v3048
    %v3177 = vadd.f32 %v2769, %v3049
    %v3178 = vadd.f32 %v2770, %v3050
    %v3179 = vadd.f32 %v2771, %v3051
    %v3180 = vadd.f32 %v2772, %v3052
    %v3181 = vadd.f32 %v2773, %v3053
    %v3182 = vadd.f32 %v2774, %v3054
    %v3183 = vadd.f32 %v2775, %v3055
    %v3184 = vadd.f32 %v2776, %v3056
    %v3185 = vadd.f32 %v2777, %v3057
    %v3186 = vadd.f32 %v2778, %v3058
    %v3187 = vadd.f32 %v2779, %v3059
    %v3188 = vadd.f32 %v2780, %v3060
    %v3189 = vadd.f32 %v2781, %v3061
    %v3190 = vadd.f32 %v2782, %v3062
    %v3191 = vadd.f32 %v2783, %v3063
    %v3192 = vadd.f32 %v2784, %v3064
    %v3193 = vadd.f32 %v2785, %v3065
    %v3194 = vadd.f32 %v2786, %v3066
    %v3195 = vadd.f32 %v2787, %v3067
    %v3196 = vadd.f32 %v2788, %v3068
    %v3197 = vadd.f32 %v2789, %v3069
    %v3198 = vadd.f32 %v2790, %v3070
    %v3199 = vadd.f32 %v2791, %v3071
    %v3200 = vadd.f32 %v2792, %v3072
    %v3201 = vadd.f32 %v2793, %v3073
    %v3202 = vadd.f32 %v2794, %v3074
    %v3203 = vadd.f32 %v2795, %v3075
    %v3204 = vadd.f32 %v2796, %v3076
    %v3205 = vadd.f32 %v2797, %v3077
    %v3206 = vadd.f32 %v2798, %v3078
    %v3207 = vadd.f32 %v2799, %v3079
    %v3208 = vadd.f32 %v2800, %v3080
    %v3209 = vadd.f32 %v2801, %v3081
    %v3210 = vadd.f32 %v2802, %v3082
    %v3211 = vadd.f32 %v2803, %v3083
    %v3212 = vadd.f32 %v2804, %v3084
    %v3213 = vadd.f32 %v2805, %v3085
    %v3214 = vadd.f32 %v2806, %v3086
    %v3215 = vadd.f32 %v2807, %v3087
    %v3216 = vadd.f32 %v2808, %v3088
    %v3217 = vadd.f32 %v2809, %v3089
    %v3218 = vadd.f32 %v2810, %v3090
    %v3219 = vadd.f32 %v2811, %v3091
    %v3220 = vadd.f32 %v2812, %v3092
    %v3221 = vadd.f32 %v2813, %v3093
    %v3222 = vadd.f32 %v2814, %v3094
    %v3223 = vadd.f32 %v2815, %v3095
    %v3224 = vadd.f32 %v2816, %v3096
    %v3225 = vadd.f32 %v2817, %v3097
    %v3226 = vadd.f32 %v2818, %v3098
    %v3227 = vadd.f32 %v2819, %v3099
    %v3228 = vadd.f32 %v2820, %v3100
    %v3229 = vadd.f32 %v2821, %v3101
    %v3230 = vadd.f32 %v2822, %v3102
    %v3231 = vadd.f32 %v2823, %v3103
    %v3232 = vadd.f32 %v2824, %v3104
    %v3233 = vadd.f32 %v2825, %v3105
    %v3234 = vadd.f32 %v2826, %v3106
    %v3235 = vadd.f32 %v2827, %v3107
    %v3236 = vadd.f32 %v2828, %v3108
    %v3237 = vadd.f32 %v2829, %v3109
    %v3238 = vadd.f32 %v2830, %v3110
    %v3239 = vadd.f32 %v2831, %v3111
    %v3240 = vadd.f32 %v2832, %v3112
    %v3241 = vadd.f32 %v2833, %v3113
    %v3242 = vadd.f32 %v2834, %v3114
    %v3243 = vadd.f32 %v2835, %v3115
    %v3244 = vadd.f32 %v2836, %v3116
    %v3245 = vadd.f32 %v2837, %v3117
    %v3246 = vadd.f32 %v2838, %v3118
    %v3247 = vadd.f32 %v2839, %v3119
    %v3248 = vadd.f32 %v2840, %v3120
    %v3249 = vadd.f32 %v2841, %v3121
    %v3250 = vadd.f32 %v2842, %v3122
    %v3251 = vadd.f32 %v2843, %v3123
    %v3252 = vadd.f32 %v2844, %v3124
    %v3253 = vadd.f32 %v2845, %v3125
    %v3254 = vadd.f32 %v2846, %v3126
    %v3255 = vadd.f32 %v2847, %v3127
    %v3256 = vadd.f32 %v2848, %v3128
    %v3257 = vadd.f32 %v2849, %v3129
    %v3258 = vadd.f32 %v2850, %v3130
    %v3259 = vadd.f32 %v2851, %v3131
    %v3260 = vadd.f32 %v2852, %v3132
    %v3261 = vadd.f32 %v2853, %v3133
    %v3262 = vadd.f32 %v2854, %v3134
    %v3263 = vadd.f32 %v2855, %v3135
    %v3264 = vadd.f32 %v2856, %v3136
    %v3265 = vadd.f32 %v2857, %v3137
    %v3266 = vadd.f32 %v2858, %v3138
    %v3267 = vadd.f32 %v2859, %v3139
    %v3268 = vadd.f32 %v2860, %v3140
    %v3269 = vadd.f32 %v2861, %v3141
    %v3270 = vadd.f32 %v2862, %v3142
    %v3271 = vadd.f32 %v2863, %v3143
    %v3272 = vadd.f32 %v2864, %v3144
    %v3273 = vadd.f32 %v2865, %v3145
    %v3274 = vadd.f32 %v2866, %v3146
    %v3275 = vadd.f32 %v2867, %v3147
    %v3276 = vadd.f32 %v2868, %v3148
    %v3277 = vadd.f32 %v2869, %v3149
    %v3278 = vadd.f32 %v2870, %v3150
    %v3279 = vperm.slane %v1331, 5
    %v3280 = vperm.slane %v1332, 5
    %v3281 = vperm.slane %v1333, 5
    %v3282 = vperm.slane %v1334, 5
    %v3283 = vperm.slane %v1335, 5
    %v3284 = vperm.slane %v1336, 5
    %v3285 = vperm.slane %v1337, 5
    %v3286 = vperm.slane %v1338, 5
    %v3287 = vperm.slane %v1339, 5
    %v3288 = vperm.slane %v1340, 5
    %v3289 = vperm.slane %v1341, 5
    %v3290 = vperm.slane %v1342, 5
    %v3291 = vperm.slane %v1343, 5
    %v3292 = vperm.slane %v1344, 5
    %v3293 = vperm.slane %v1345, 5
    %v3294 = vperm.slane %v1346, 5
    %v3295 = vperm.slane %v1347, 5
    %v3296 = vperm.slane %v1348, 5
    %v3297 = vperm.slane %v1349, 5
    %v3298 = vperm.slane %v1350, 5
    %v3299 = vperm.slane %v1351, 5
    %v3300 = vperm.slane %v1352, 5
    %v3301 = vperm.slane %v1353, 5
    %v3302 = vperm.slane %v1354, 5
    %v3303 = vperm.slane %v1355, 5
    %v3304 = vperm.slane %v1356, 5
    %v3305 = vperm.slane %v1357, 5
    %v3306 = vperm.slane %v1358, 5
    %v3307 = vperm.slane %v1359, 5
    %v3308 = vperm.slane %v1360, 5
    %v3309 = vperm.slane %v1361, 5
    %v3310 = vperm.slane %v1362, 5
    %v3311 = vperm.slane %v268, 5
    %v3312 = vperm.slane %v269, 5
    %v3313 = vperm.slane %v270, 5
    %v3314 = vperm.slane %v271, 5
    %v3319 = vlaneseq
    %v3320 = vshrl.u32 %v3319, 7
    %3322 = vset.pattern.permute.xlu0 %v3320
    %3323 = vperm.xlu0 %3322, %v3311
    %v3324 = vpop.permute.xlu0 %3323
    %v3325 = vlaneseq
    %v3326 = vshrl.u32 %v3325, 7
    %v3327 = vadd.s32 %v3326, 8
    %3328 = vset.pattern.permute.xlu0 %v3327
    %3329 = vperm.xlu0 %3328, %v3311
    %v3330 = vpop.permute.xlu0 %3329
    %v3331 = vlaneseq
    %v3332 = vshrl.u32 %v3331, 7
    %v3333 = vadd.s32 %v3332, 16
    %3334 = vset.pattern.permute.xlu0 %v3333
    %3335 = vperm.xlu0 %3334, %v3311
    %v3336 = vpop.permute.xlu0 %3335
    %v3337 = vlaneseq
    %v3338 = vshrl.u32 %v3337, 7
    %v3339 = vadd.s32 %v3338, 24
    %3340 = vset.pattern.permute.xlu0 %v3339
    %3341 = vperm.xlu0 %3340, %v3311
    %v3342 = vpop.permute.xlu0 %3341
    %v3343 = vlaneseq
    %v3344 = vshrl.u32 %v3343, 7
    %3346 = vset.pattern.permute.xlu0 %v3344
    %3347 = vperm.xlu0 %3346, %v3312
    %v3348 = vpop.permute.xlu0 %3347
    %v3349 = vlaneseq
    %v3350 = vshrl.u32 %v3349, 7
    %v3351 = vadd.s32 %v3350, 8
    %3352 = vset.pattern.permute.xlu0 %v3351
    %3353 = vperm.xlu0 %3352, %v3312
    %v3354 = vpop.permute.xlu0 %3353
    %v3355 = vlaneseq
    %v3356 = vshrl.u32 %v3355, 7
    %v3357 = vadd.s32 %v3356, 16
    %3358 = vset.pattern.permute.xlu0 %v3357
    %3359 = vperm.xlu0 %3358, %v3312
    %v3360 = vpop.permute.xlu0 %3359
    %v3361 = vlaneseq
    %v3362 = vshrl.u32 %v3361, 7
    %v3363 = vadd.s32 %v3362, 24
    %3364 = vset.pattern.permute.xlu0 %v3363
    %3365 = vperm.xlu0 %3364, %v3312
    %v3366 = vpop.permute.xlu0 %3365
    %v3367 = vlaneseq
    %v3368 = vshrl.u32 %v3367, 7
    %3370 = vset.pattern.permute.xlu0 %v3368
    %3371 = vperm.xlu0 %3370, %v3313
    %v3372 = vpop.permute.xlu0 %3371
    %v3373 = vlaneseq
    %v3374 = vshrl.u32 %v3373, 7
    %v3375 = vadd.s32 %v3374, 8
    %3376 = vset.pattern.permute.xlu0 %v3375
    %3377 = vperm.xlu0 %3376, %v3313
    %v3378 = vpop.permute.xlu0 %3377
    %v3379 = vlaneseq
    %v3380 = vshrl.u32 %v3379, 7
    %v3381 = vadd.s32 %v3380, 16
    %3382 = vset.pattern.permute.xlu0 %v3381
    %3383 = vperm.xlu0 %3382, %v3313
    %v3384 = vpop.permute.xlu0 %3383
    %v3385 = vlaneseq
    %v3386 = vshrl.u32 %v3385, 7
    %v3387 = vadd.s32 %v3386, 24
    %3388 = vset.pattern.permute.xlu0 %v3387
    %3389 = vperm.xlu0 %3388, %v3313
    %v3390 = vpop.permute.xlu0 %3389
    %v3391 = vlaneseq
    %v3392 = vshrl.u32 %v3391, 7
    %3394 = vset.pattern.permute.xlu0 %v3392
    %3395 = vperm.xlu0 %3394, %v3314
    %v3396 = vpop.permute.xlu0 %3395
    %v3397 = vlaneseq
    %v3398 = vshrl.u32 %v3397, 7
    %v3399 = vadd.s32 %v3398, 8
    %3400 = vset.pattern.permute.xlu0 %v3399
    %3401 = vperm.xlu0 %3400, %v3314
    %v3402 = vpop.permute.xlu0 %3401
    %v3403 = vlaneseq
    %v3404 = vshrl.u32 %v3403, 7
    %v3405 = vadd.s32 %v3404, 16
    %3406 = vset.pattern.permute.xlu0 %v3405
    %3407 = vperm.xlu0 %3406, %v3314
    %v3408 = vpop.permute.xlu0 %3407
    %v3409 = vlaneseq
    %v3410 = vshrl.u32 %v3409, 7
    %v3411 = vadd.s32 %v3410, 24
    %3412 = vset.pattern.permute.xlu0 %v3411
    %3413 = vperm.xlu0 %3412, %v3314
    %v3414 = vpop.permute.xlu0 %3413
    %v3431 = vmul.f32 %v3279, %v3324
    %v3432 = vmul.f32 %v3279, %v3330
    %v3433 = vmul.f32 %v3279, %v3336
    %v3434 = vmul.f32 %v3279, %v3342
    %v3435 = vmul.f32 %v3280, %v3324
    %v3436 = vmul.f32 %v3280, %v3330
    %v3437 = vmul.f32 %v3280, %v3336
    %v3438 = vmul.f32 %v3280, %v3342
    %v3439 = vmul.f32 %v3281, %v3324
    %v3440 = vmul.f32 %v3281, %v3330
    %v3441 = vmul.f32 %v3281, %v3336
    %v3442 = vmul.f32 %v3281, %v3342
    %v3443 = vmul.f32 %v3282, %v3324
    %v3444 = vmul.f32 %v3282, %v3330
    %v3445 = vmul.f32 %v3282, %v3336
    %v3446 = vmul.f32 %v3282, %v3342
    %v3447 = vmul.f32 %v3283, %v3324
    %v3448 = vmul.f32 %v3283, %v3330
    %v3449 = vmul.f32 %v3283, %v3336
    %v3450 = vmul.f32 %v3283, %v3342
    %v3451 = vmul.f32 %v3284, %v3324
    %v3452 = vmul.f32 %v3284, %v3330
    %v3453 = vmul.f32 %v3284, %v3336
    %v3454 = vmul.f32 %v3284, %v3342
    %v3455 = vmul.f32 %v3285, %v3324
    %v3456 = vmul.f32 %v3285, %v3330
    %v3457 = vmul.f32 %v3285, %v3336
    %v3458 = vmul.f32 %v3285, %v3342
    %v3459 = vmul.f32 %v3286, %v3324
    %v3460 = vmul.f32 %v3286, %v3330
    %v3461 = vmul.f32 %v3286, %v3336
    %v3462 = vmul.f32 %v3286, %v3342
    %v3463 = vmul.f32 %v3287, %v3348
    %v3464 = vmul.f32 %v3287, %v3354
    %v3465 = vmul.f32 %v3287, %v3360
    %v3466 = vmul.f32 %v3287, %v3366
    %v3467 = vmul.f32 %v3288, %v3348
    %v3468 = vmul.f32 %v3288, %v3354
    %v3469 = vmul.f32 %v3288, %v3360
    %v3470 = vmul.f32 %v3288, %v3366
    %v3471 = vmul.f32 %v3289, %v3348
    %v3472 = vmul.f32 %v3289, %v3354
    %v3473 = vmul.f32 %v3289, %v3360
    %v3474 = vmul.f32 %v3289, %v3366
    %v3475 = vmul.f32 %v3290, %v3348
    %v3476 = vmul.f32 %v3290, %v3354
    %v3477 = vmul.f32 %v3290, %v3360
    %v3478 = vmul.f32 %v3290, %v3366
    %v3479 = vmul.f32 %v3291, %v3348
    %v3480 = vmul.f32 %v3291, %v3354
    %v3481 = vmul.f32 %v3291, %v3360
    %v3482 = vmul.f32 %v3291, %v3366
    %v3483 = vmul.f32 %v3292, %v3348
    %v3484 = vmul.f32 %v3292, %v3354
    %v3485 = vmul.f32 %v3292, %v3360
    %v3486 = vmul.f32 %v3292, %v3366
    %v3487 = vmul.f32 %v3293, %v3348
    %v3488 = vmul.f32 %v3293, %v3354
    %v3489 = vmul.f32 %v3293, %v3360
    %v3490 = vmul.f32 %v3293, %v3366
    %v3491 = vmul.f32 %v3294, %v3348
    %v3492 = vmul.f32 %v3294, %v3354
    %v3493 = vmul.f32 %v3294, %v3360
    %v3494 = vmul.f32 %v3294, %v3366
    %v3495 = vmul.f32 %v3295, %v3372
    %v3496 = vmul.f32 %v3295, %v3378
    %v3497 = vmul.f32 %v3295, %v3384
    %v3498 = vmul.f32 %v3295, %v3390
    %v3499 = vmul.f32 %v3296, %v3372
    %v3500 = vmul.f32 %v3296, %v3378
    %v3501 = vmul.f32 %v3296, %v3384
    %v3502 = vmul.f32 %v3296, %v3390
    %v3503 = vmul.f32 %v3297, %v3372
    %v3504 = vmul.f32 %v3297, %v3378
    %v3505 = vmul.f32 %v3297, %v3384
    %v3506 = vmul.f32 %v3297, %v3390
    %v3507 = vmul.f32 %v3298, %v3372
    %v3508 = vmul.f32 %v3298, %v3378
    %v3509 = vmul.f32 %v3298, %v3384
    %v3510 = vmul.f32 %v3298, %v3390
    %v3511 = vmul.f32 %v3299, %v3372
    %v3512 = vmul.f32 %v3299, %v3378
    %v3513 = vmul.f32 %v3299, %v3384
    %v3514 = vmul.f32 %v3299, %v3390
    %v3515 = vmul.f32 %v3300, %v3372
    %v3516 = vmul.f32 %v3300, %v3378
    %v3517 = vmul.f32 %v3300, %v3384
    %v3518 = vmul.f32 %v3300, %v3390
    %v3519 = vmul.f32 %v3301, %v3372
    %v3520 = vmul.f32 %v3301, %v3378
    %v3521 = vmul.f32 %v3301, %v3384
    %v3522 = vmul.f32 %v3301, %v3390
    %v3523 = vmul.f32 %v3302, %v3372
    %v3524 = vmul.f32 %v3302, %v3378
    %v3525 = vmul.f32 %v3302, %v3384
    %v3526 = vmul.f32 %v3302, %v3390
    %v3527 = vmul.f32 %v3303, %v3396
    %v3528 = vmul.f32 %v3303, %v3402
    %v3529 = vmul.f32 %v3303, %v3408
    %v3530 = vmul.f32 %v3303, %v3414
    %v3531 = vmul.f32 %v3304, %v3396
    %v3532 = vmul.f32 %v3304, %v3402
    %v3533 = vmul.f32 %v3304, %v3408
    %v3534 = vmul.f32 %v3304, %v3414
    %v3535 = vmul.f32 %v3305, %v3396
    %v3536 = vmul.f32 %v3305, %v3402
    %v3537 = vmul.f32 %v3305, %v3408
    %v3538 = vmul.f32 %v3305, %v3414
    %v3539 = vmul.f32 %v3306, %v3396
    %v3540 = vmul.f32 %v3306, %v3402
    %v3541 = vmul.f32 %v3306, %v3408
    %v3542 = vmul.f32 %v3306, %v3414
    %v3543 = vmul.f32 %v3307, %v3396
    %v3544 = vmul.f32 %v3307, %v3402
    %v3545 = vmul.f32 %v3307, %v3408
    %v3546 = vmul.f32 %v3307, %v3414
    %v3547 = vmul.f32 %v3308, %v3396
    %v3548 = vmul.f32 %v3308, %v3402
    %v3549 = vmul.f32 %v3308, %v3408
    %v3550 = vmul.f32 %v3308, %v3414
    %v3551 = vmul.f32 %v3309, %v3396
    %v3552 = vmul.f32 %v3309, %v3402
    %v3553 = vmul.f32 %v3309, %v3408
    %v3554 = vmul.f32 %v3309, %v3414
    %v3555 = vmul.f32 %v3310, %v3396
    %v3556 = vmul.f32 %v3310, %v3402
    %v3557 = vmul.f32 %v3310, %v3408
    %v3558 = vmul.f32 %v3310, %v3414
    %v3559 = vadd.f32 %v3151, %v3431
    %v3560 = vadd.f32 %v3152, %v3432
    %v3561 = vadd.f32 %v3153, %v3433
    %v3562 = vadd.f32 %v3154, %v3434
    %v3563 = vadd.f32 %v3155, %v3435
    %v3564 = vadd.f32 %v3156, %v3436
    %v3565 = vadd.f32 %v3157, %v3437
    %v3566 = vadd.f32 %v3158, %v3438
    %v3567 = vadd.f32 %v3159, %v3439
    %v3568 = vadd.f32 %v3160, %v3440
    %v3569 = vadd.f32 %v3161, %v3441
    %v3570 = vadd.f32 %v3162, %v3442
    %v3571 = vadd.f32 %v3163, %v3443
    %v3572 = vadd.f32 %v3164, %v3444
    %v3573 = vadd.f32 %v3165, %v3445
    %v3574 = vadd.f32 %v3166, %v3446
    %v3575 = vadd.f32 %v3167, %v3447
    %v3576 = vadd.f32 %v3168, %v3448
    %v3577 = vadd.f32 %v3169, %v3449
    %v3578 = vadd.f32 %v3170, %v3450
    %v3579 = vadd.f32 %v3171, %v3451
    %v3580 = vadd.f32 %v3172, %v3452
    %v3581 = vadd.f32 %v3173, %v3453
    %v3582 = vadd.f32 %v3174, %v3454
    %v3583 = vadd.f32 %v3175, %v3455
    %v3584 = vadd.f32 %v3176, %v3456
    %v3585 = vadd.f32 %v3177, %v3457
    %v3586 = vadd.f32 %v3178, %v3458
    %v3587 = vadd.f32 %v3179, %v3459
    %v3588 = vadd.f32 %v3180, %v3460
    %v3589 = vadd.f32 %v3181, %v3461
    %v3590 = vadd.f32 %v3182, %v3462
    %v3591 = vadd.f32 %v3183, %v3463
    %v3592 = vadd.f32 %v3184, %v3464
    %v3593 = vadd.f32 %v3185, %v3465
    %v3594 = vadd.f32 %v3186, %v3466
    %v3595 = vadd.f32 %v3187, %v3467
    %v3596 = vadd.f32 %v3188, %v3468
    %v3597 = vadd.f32 %v3189, %v3469
    %v3598 = vadd.f32 %v3190, %v3470
    %v3599 = vadd.f32 %v3191, %v3471
    %v3600 = vadd.f32 %v3192, %v3472
    %v3601 = vadd.f32 %v3193, %v3473
    %v3602 = vadd.f32 %v3194, %v3474
    %v3603 = vadd.f32 %v3195, %v3475
    %v3604 = vadd.f32 %v3196, %v3476
    %v3605 = vadd.f32 %v3197, %v3477
    %v3606 = vadd.f32 %v3198, %v3478
    %v3607 = vadd.f32 %v3199, %v3479
    %v3608 = vadd.f32 %v3200, %v3480
    %v3609 = vadd.f32 %v3201, %v3481
    %v3610 = vadd.f32 %v3202, %v3482
    %v3611 = vadd.f32 %v3203, %v3483
    %v3612 = vadd.f32 %v3204, %v3484
    %v3613 = vadd.f32 %v3205, %v3485
    %v3614 = vadd.f32 %v3206, %v3486
    %v3615 = vadd.f32 %v3207, %v3487
    %v3616 = vadd.f32 %v3208, %v3488
    %v3617 = vadd.f32 %v3209, %v3489
    %v3618 = vadd.f32 %v3210, %v3490
    %v3619 = vadd.f32 %v3211, %v3491
    %v3620 = vadd.f32 %v3212, %v3492
    %v3621 = vadd.f32 %v3213, %v3493
    %v3622 = vadd.f32 %v3214, %v3494
    %v3623 = vadd.f32 %v3215, %v3495
    %v3624 = vadd.f32 %v3216, %v3496
    %v3625 = vadd.f32 %v3217, %v3497
    %v3626 = vadd.f32 %v3218, %v3498
    %v3627 = vadd.f32 %v3219, %v3499
    %v3628 = vadd.f32 %v3220, %v3500
    %v3629 = vadd.f32 %v3221, %v3501
    %v3630 = vadd.f32 %v3222, %v3502
    %v3631 = vadd.f32 %v3223, %v3503
    %v3632 = vadd.f32 %v3224, %v3504
    %v3633 = vadd.f32 %v3225, %v3505
    %v3634 = vadd.f32 %v3226, %v3506
    %v3635 = vadd.f32 %v3227, %v3507
    %v3636 = vadd.f32 %v3228, %v3508
    %v3637 = vadd.f32 %v3229, %v3509
    %v3638 = vadd.f32 %v3230, %v3510
    %v3639 = vadd.f32 %v3231, %v3511
    %v3640 = vadd.f32 %v3232, %v3512
    %v3641 = vadd.f32 %v3233, %v3513
    %v3642 = vadd.f32 %v3234, %v3514
    %v3643 = vadd.f32 %v3235, %v3515
    %v3644 = vadd.f32 %v3236, %v3516
    %v3645 = vadd.f32 %v3237, %v3517
    %v3646 = vadd.f32 %v3238, %v3518
    %v3647 = vadd.f32 %v3239, %v3519
    %v3648 = vadd.f32 %v3240, %v3520
    %v3649 = vadd.f32 %v3241, %v3521
    %v3650 = vadd.f32 %v3242, %v3522
    %v3651 = vadd.f32 %v3243, %v3523
    %v3652 = vadd.f32 %v3244, %v3524
    %v3653 = vadd.f32 %v3245, %v3525
    %v3654 = vadd.f32 %v3246, %v3526
    %v3655 = vadd.f32 %v3247, %v3527
    %v3656 = vadd.f32 %v3248, %v3528
    %v3657 = vadd.f32 %v3249, %v3529
    %v3658 = vadd.f32 %v3250, %v3530
    %v3659 = vadd.f32 %v3251, %v3531
    %v3660 = vadd.f32 %v3252, %v3532
    %v3661 = vadd.f32 %v3253, %v3533
    %v3662 = vadd.f32 %v3254, %v3534
    %v3663 = vadd.f32 %v3255, %v3535
    %v3664 = vadd.f32 %v3256, %v3536
    %v3665 = vadd.f32 %v3257, %v3537
    %v3666 = vadd.f32 %v3258, %v3538
    %v3667 = vadd.f32 %v3259, %v3539
    %v3668 = vadd.f32 %v3260, %v3540
    %v3669 = vadd.f32 %v3261, %v3541
    %v3670 = vadd.f32 %v3262, %v3542
    %v3671 = vadd.f32 %v3263, %v3543
    %v3672 = vadd.f32 %v3264, %v3544
    %v3673 = vadd.f32 %v3265, %v3545
    %v3674 = vadd.f32 %v3266, %v3546
    %v3675 = vadd.f32 %v3267, %v3547
    %v3676 = vadd.f32 %v3268, %v3548
    %v3677 = vadd.f32 %v3269, %v3549
    %v3678 = vadd.f32 %v3270, %v3550
    %v3679 = vadd.f32 %v3271, %v3551
    %v3680 = vadd.f32 %v3272, %v3552
    %v3681 = vadd.f32 %v3273, %v3553
    %v3682 = vadd.f32 %v3274, %v3554
    %v3683 = vadd.f32 %v3275, %v3555
    %v3684 = vadd.f32 %v3276, %v3556
    %v3685 = vadd.f32 %v3277, %v3557
    %v3686 = vadd.f32 %v3278, %v3558
    %v3687 = vperm.slane %v1331, 6
    %v3688 = vperm.slane %v1332, 6
    %v3689 = vperm.slane %v1333, 6
    %v3690 = vperm.slane %v1334, 6
    %v3691 = vperm.slane %v1335, 6
    %v3692 = vperm.slane %v1336, 6
    %v3693 = vperm.slane %v1337, 6
    %v3694 = vperm.slane %v1338, 6
    %v3695 = vperm.slane %v1339, 6
    %v3696 = vperm.slane %v1340, 6
    %v3697 = vperm.slane %v1341, 6
    %v3698 = vperm.slane %v1342, 6
    %v3699 = vperm.slane %v1343, 6
    %v3700 = vperm.slane %v1344, 6
    %v3701 = vperm.slane %v1345, 6
    %v3702 = vperm.slane %v1346, 6
    %v3703 = vperm.slane %v1347, 6
    %v3704 = vperm.slane %v1348, 6
    %v3705 = vperm.slane %v1349, 6
    %v3706 = vperm.slane %v1350, 6
    %v3707 = vperm.slane %v1351, 6
    %v3708 = vperm.slane %v1352, 6
    %v3709 = vperm.slane %v1353, 6
    %v3710 = vperm.slane %v1354, 6
    %v3711 = vperm.slane %v1355, 6
    %v3712 = vperm.slane %v1356, 6
    %v3713 = vperm.slane %v1357, 6
    %v3714 = vperm.slane %v1358, 6
    %v3715 = vperm.slane %v1359, 6
    %v3716 = vperm.slane %v1360, 6
    %v3717 = vperm.slane %v1361, 6
    %v3718 = vperm.slane %v1362, 6
    %v3719 = vperm.slane %v268, 6
    %v3720 = vperm.slane %v269, 6
    %v3721 = vperm.slane %v270, 6
    %v3722 = vperm.slane %v271, 6
    %v3727 = vlaneseq
    %v3728 = vshrl.u32 %v3727, 7
    %3730 = vset.pattern.permute.xlu0 %v3728
    %3731 = vperm.xlu0 %3730, %v3719
    %v3732 = vpop.permute.xlu0 %3731
    %v3733 = vlaneseq
    %v3734 = vshrl.u32 %v3733, 7
    %v3735 = vadd.s32 %v3734, 8
    %3736 = vset.pattern.permute.xlu0 %v3735
    %3737 = vperm.xlu0 %3736, %v3719
    %v3738 = vpop.permute.xlu0 %3737
    %v3739 = vlaneseq
    %v3740 = vshrl.u32 %v3739, 7
    %v3741 = vadd.s32 %v3740, 16
    %3742 = vset.pattern.permute.xlu0 %v3741
    %3743 = vperm.xlu0 %3742, %v3719
    %v3744 = vpop.permute.xlu0 %3743
    %v3745 = vlaneseq
    %v3746 = vshrl.u32 %v3745, 7
    %v3747 = vadd.s32 %v3746, 24
    %3748 = vset.pattern.permute.xlu0 %v3747
    %3749 = vperm.xlu0 %3748, %v3719
    %v3750 = vpop.permute.xlu0 %3749
    %v3751 = vlaneseq
    %v3752 = vshrl.u32 %v3751, 7
    %3754 = vset.pattern.permute.xlu0 %v3752
    %3755 = vperm.xlu0 %3754, %v3720
    %v3756 = vpop.permute.xlu0 %3755
    %v3757 = vlaneseq
    %v3758 = vshrl.u32 %v3757, 7
    %v3759 = vadd.s32 %v3758, 8
    %3760 = vset.pattern.permute.xlu0 %v3759
    %3761 = vperm.xlu0 %3760, %v3720
    %v3762 = vpop.permute.xlu0 %3761
    %v3763 = vlaneseq
    %v3764 = vshrl.u32 %v3763, 7
    %v3765 = vadd.s32 %v3764, 16
    %3766 = vset.pattern.permute.xlu0 %v3765
    %3767 = vperm.xlu0 %3766, %v3720
    %v3768 = vpop.permute.xlu0 %3767
    %v3769 = vlaneseq
    %v3770 = vshrl.u32 %v3769, 7
    %v3771 = vadd.s32 %v3770, 24
    %3772 = vset.pattern.permute.xlu0 %v3771
    %3773 = vperm.xlu0 %3772, %v3720
    %v3774 = vpop.permute.xlu0 %3773
    %v3775 = vlaneseq
    %v3776 = vshrl.u32 %v3775, 7
    %3778 = vset.pattern.permute.xlu0 %v3776
    %3779 = vperm.xlu0 %3778, %v3721
    %v3780 = vpop.permute.xlu0 %3779
    %v3781 = vlaneseq
    %v3782 = vshrl.u32 %v3781, 7
    %v3783 = vadd.s32 %v3782, 8
    %3784 = vset.pattern.permute.xlu0 %v3783
    %3785 = vperm.xlu0 %3784, %v3721
    %v3786 = vpop.permute.xlu0 %3785
    %v3787 = vlaneseq
    %v3788 = vshrl.u32 %v3787, 7
    %v3789 = vadd.s32 %v3788, 16
    %3790 = vset.pattern.permute.xlu0 %v3789
    %3791 = vperm.xlu0 %3790, %v3721
    %v3792 = vpop.permute.xlu0 %3791
    %v3793 = vlaneseq
    %v3794 = vshrl.u32 %v3793, 7
    %v3795 = vadd.s32 %v3794, 24
    %3796 = vset.pattern.permute.xlu0 %v3795
    %3797 = vperm.xlu0 %3796, %v3721
    %v3798 = vpop.permute.xlu0 %3797
    %v3799 = vlaneseq
    %v3800 = vshrl.u32 %v3799, 7
    %3802 = vset.pattern.permute.xlu0 %v3800
    %3803 = vperm.xlu0 %3802, %v3722
    %v3804 = vpop.permute.xlu0 %3803
    %v3805 = vlaneseq
    %v3806 = vshrl.u32 %v3805, 7
    %v3807 = vadd.s32 %v3806, 8
    %3808 = vset.pattern.permute.xlu0 %v3807
    %3809 = vperm.xlu0 %3808, %v3722
    %v3810 = vpop.permute.xlu0 %3809
    %v3811 = vlaneseq
    %v3812 = vshrl.u32 %v3811, 7
    %v3813 = vadd.s32 %v3812, 16
    %3814 = vset.pattern.permute.xlu0 %v3813
    %3815 = vperm.xlu0 %3814, %v3722
    %v3816 = vpop.permute.xlu0 %3815
    %v3817 = vlaneseq
    %v3818 = vshrl.u32 %v3817, 7
    %v3819 = vadd.s32 %v3818, 24
    %3820 = vset.pattern.permute.xlu0 %v3819
    %3821 = vperm.xlu0 %3820, %v3722
    %v3822 = vpop.permute.xlu0 %3821
    %v3839 = vmul.f32 %v3687, %v3732
    %v3840 = vmul.f32 %v3687, %v3738
    %v3841 = vmul.f32 %v3687, %v3744
    %v3842 = vmul.f32 %v3687, %v3750
    %v3843 = vmul.f32 %v3688, %v3732
    %v3844 = vmul.f32 %v3688, %v3738
    %v3845 = vmul.f32 %v3688, %v3744
    %v3846 = vmul.f32 %v3688, %v3750
    %v3847 = vmul.f32 %v3689, %v3732
    %v3848 = vmul.f32 %v3689, %v3738
    %v3849 = vmul.f32 %v3689, %v3744
    %v3850 = vmul.f32 %v3689, %v3750
    %v3851 = vmul.f32 %v3690, %v3732
    %v3852 = vmul.f32 %v3690, %v3738
    %v3853 = vmul.f32 %v3690, %v3744
    %v3854 = vmul.f32 %v3690, %v3750
    %v3855 = vmul.f32 %v3691, %v3732
    %v3856 = vmul.f32 %v3691, %v3738
    %v3857 = vmul.f32 %v3691, %v3744
    %v3858 = vmul.f32 %v3691, %v3750
    %v3859 = vmul.f32 %v3692, %v3732
    %v3860 = vmul.f32 %v3692, %v3738
    %v3861 = vmul.f32 %v3692, %v3744
    %v3862 = vmul.f32 %v3692, %v3750
    %v3863 = vmul.f32 %v3693, %v3732
    %v3864 = vmul.f32 %v3693, %v3738
    %v3865 = vmul.f32 %v3693, %v3744
    %v3866 = vmul.f32 %v3693, %v3750
    %v3867 = vmul.f32 %v3694, %v3732
    %v3868 = vmul.f32 %v3694, %v3738
    %v3869 = vmul.f32 %v3694, %v3744
    %v3870 = vmul.f32 %v3694, %v3750
    %v3871 = vmul.f32 %v3695, %v3756
    %v3872 = vmul.f32 %v3695, %v3762
    %v3873 = vmul.f32 %v3695, %v3768
    %v3874 = vmul.f32 %v3695, %v3774
    %v3875 = vmul.f32 %v3696, %v3756
    %v3876 = vmul.f32 %v3696, %v3762
    %v3877 = vmul.f32 %v3696, %v3768
    %v3878 = vmul.f32 %v3696, %v3774
    %v3879 = vmul.f32 %v3697, %v3756
    %v3880 = vmul.f32 %v3697, %v3762
    %v3881 = vmul.f32 %v3697, %v3768
    %v3882 = vmul.f32 %v3697, %v3774
    %v3883 = vmul.f32 %v3698, %v3756
    %v3884 = vmul.f32 %v3698, %v3762
    %v3885 = vmul.f32 %v3698, %v3768
    %v3886 = vmul.f32 %v3698, %v3774
    %v3887 = vmul.f32 %v3699, %v3756
    %v3888 = vmul.f32 %v3699, %v3762
    %v3889 = vmul.f32 %v3699, %v3768
    %v3890 = vmul.f32 %v3699, %v3774
    %v3891 = vmul.f32 %v3700, %v3756
    %v3892 = vmul.f32 %v3700, %v3762
    %v3893 = vmul.f32 %v3700, %v3768
    %v3894 = vmul.f32 %v3700, %v3774
    %v3895 = vmul.f32 %v3701, %v3756
    %v3896 = vmul.f32 %v3701, %v3762
    %v3897 = vmul.f32 %v3701, %v3768
    %v3898 = vmul.f32 %v3701, %v3774
    %v3899 = vmul.f32 %v3702, %v3756
    %v3900 = vmul.f32 %v3702, %v3762
    %v3901 = vmul.f32 %v3702, %v3768
    %v3902 = vmul.f32 %v3702, %v3774
    %v3903 = vmul.f32 %v3703, %v3780
    %v3904 = vmul.f32 %v3703, %v3786
    %v3905 = vmul.f32 %v3703, %v3792
    %v3906 = vmul.f32 %v3703, %v3798
    %v3907 = vmul.f32 %v3704, %v3780
    %v3908 = vmul.f32 %v3704, %v3786
    %v3909 = vmul.f32 %v3704, %v3792
    %v3910 = vmul.f32 %v3704, %v3798
    %v3911 = vmul.f32 %v3705, %v3780
    %v3912 = vmul.f32 %v3705, %v3786
    %v3913 = vmul.f32 %v3705, %v3792
    %v3914 = vmul.f32 %v3705, %v3798
    %v3915 = vmul.f32 %v3706, %v3780
    %v3916 = vmul.f32 %v3706, %v3786
    %v3917 = vmul.f32 %v3706, %v3792
    %v3918 = vmul.f32 %v3706, %v3798
    %v3919 = vmul.f32 %v3707, %v3780
    %v3920 = vmul.f32 %v3707, %v3786
    %v3921 = vmul.f32 %v3707, %v3792
    %v3922 = vmul.f32 %v3707, %v3798
    %v3923 = vmul.f32 %v3708, %v3780
    %v3924 = vmul.f32 %v3708, %v3786
    %v3925 = vmul.f32 %v3708, %v3792
    %v3926 = vmul.f32 %v3708, %v3798
    %v3927 = vmul.f32 %v3709, %v3780
    %v3928 = vmul.f32 %v3709, %v3786
    %v3929 = vmul.f32 %v3709, %v3792
    %v3930 = vmul.f32 %v3709, %v3798
    %v3931 = vmul.f32 %v3710, %v3780
    %v3932 = vmul.f32 %v3710, %v3786
    %v3933 = vmul.f32 %v3710, %v3792
    %v3934 = vmul.f32 %v3710, %v3798
    %v3935 = vmul.f32 %v3711, %v3804
    %v3936 = vmul.f32 %v3711, %v3810
    %v3937 = vmul.f32 %v3711, %v3816
    %v3938 = vmul.f32 %v3711, %v3822
    %v3939 = vmul.f32 %v3712, %v3804
    %v3940 = vmul.f32 %v3712, %v3810
    %v3941 = vmul.f32 %v3712, %v3816
    %v3942 = vmul.f32 %v3712, %v3822
    %v3943 = vmul.f32 %v3713, %v3804
    %v3944 = vmul.f32 %v3713, %v3810
    %v3945 = vmul.f32 %v3713, %v3816
    %v3946 = vmul.f32 %v3713, %v3822
    %v3947 = vmul.f32 %v3714, %v3804
    %v3948 = vmul.f32 %v3714, %v3810
    %v3949 = vmul.f32 %v3714, %v3816
    %v3950 = vmul.f32 %v3714, %v3822
    %v3951 = vmul.f32 %v3715, %v3804
    %v3952 = vmul.f32 %v3715, %v3810
    %v3953 = vmul.f32 %v3715, %v3816
    %v3954 = vmul.f32 %v3715, %v3822
    %v3955 = vmul.f32 %v3716, %v3804
    %v3956 = vmul.f32 %v3716, %v3810
    %v3957 = vmul.f32 %v3716, %v3816
    %v3958 = vmul.f32 %v3716, %v3822
    %v3959 = vmul.f32 %v3717, %v3804
    %v3960 = vmul.f32 %v3717, %v3810
    %v3961 = vmul.f32 %v3717, %v3816
    %v3962 = vmul.f32 %v3717, %v3822
    %v3963 = vmul.f32 %v3718, %v3804
    %v3964 = vmul.f32 %v3718, %v3810
    %v3965 = vmul.f32 %v3718, %v3816
    %v3966 = vmul.f32 %v3718, %v3822
    %v3967 = vadd.f32 %v3559, %v3839
    %v3968 = vadd.f32 %v3560, %v3840
    %v3969 = vadd.f32 %v3561, %v3841
    %v3970 = vadd.f32 %v3562, %v3842
    %v3971 = vadd.f32 %v3563, %v3843
    %v3972 = vadd.f32 %v3564, %v3844
    %v3973 = vadd.f32 %v3565, %v3845
    %v3974 = vadd.f32 %v3566, %v3846
    %v3975 = vadd.f32 %v3567, %v3847
    %v3976 = vadd.f32 %v3568, %v3848
    %v3977 = vadd.f32 %v3569, %v3849
    %v3978 = vadd.f32 %v3570, %v3850
    %v3979 = vadd.f32 %v3571, %v3851
    %v3980 = vadd.f32 %v3572, %v3852
    %v3981 = vadd.f32 %v3573, %v3853
    %v3982 = vadd.f32 %v3574, %v3854
    %v3983 = vadd.f32 %v3575, %v3855
    %v3984 = vadd.f32 %v3576, %v3856
    %v3985 = vadd.f32 %v3577, %v3857
    %v3986 = vadd.f32 %v3578, %v3858
    %v3987 = vadd.f32 %v3579, %v3859
    %v3988 = vadd.f32 %v3580, %v3860
    %v3989 = vadd.f32 %v3581, %v3861
    %v3990 = vadd.f32 %v3582, %v3862
    %v3991 = vadd.f32 %v3583, %v3863
    %v3992 = vadd.f32 %v3584, %v3864
    %v3993 = vadd.f32 %v3585, %v3865
    %v3994 = vadd.f32 %v3586, %v3866
    %v3995 = vadd.f32 %v3587, %v3867
    %v3996 = vadd.f32 %v3588, %v3868
    %v3997 = vadd.f32 %v3589, %v3869
    %v3998 = vadd.f32 %v3590, %v3870
    %v3999 = vadd.f32 %v3591, %v3871
    %v4000 = vadd.f32 %v3592, %v3872
    %v4001 = vadd.f32 %v3593, %v3873
    %v4002 = vadd.f32 %v3594, %v3874
    %v4003 = vadd.f32 %v3595, %v3875
    %v4004 = vadd.f32 %v3596, %v3876
    %v4005 = vadd.f32 %v3597, %v3877
    %v4006 = vadd.f32 %v3598, %v3878
    %v4007 = vadd.f32 %v3599, %v3879
    %v4008 = vadd.f32 %v3600, %v3880
    %v4009 = vadd.f32 %v3601, %v3881
    %v4010 = vadd.f32 %v3602, %v3882
    %v4011 = vadd.f32 %v3603, %v3883
    %v4012 = vadd.f32 %v3604, %v3884
    %v4013 = vadd.f32 %v3605, %v3885
    %v4014 = vadd.f32 %v3606, %v3886
    %v4015 = vadd.f32 %v3607, %v3887
    %v4016 = vadd.f32 %v3608, %v3888
    %v4017 = vadd.f32 %v3609, %v3889
    %v4018 = vadd.f32 %v3610, %v3890
    %v4019 = vadd.f32 %v3611, %v3891
    %v4020 = vadd.f32 %v3612, %v3892
    %v4021 = vadd.f32 %v3613, %v3893
    %v4022 = vadd.f32 %v3614, %v3894
    %v4023 = vadd.f32 %v3615, %v3895
    %v4024 = vadd.f32 %v3616, %v3896
    %v4025 = vadd.f32 %v3617, %v3897
    %v4026 = vadd.f32 %v3618, %v3898
    %v4027 = vadd.f32 %v3619, %v3899
    %v4028 = vadd.f32 %v3620, %v3900
    %v4029 = vadd.f32 %v3621, %v3901
    %v4030 = vadd.f32 %v3622, %v3902
    %v4031 = vadd.f32 %v3623, %v3903
    %v4032 = vadd.f32 %v3624, %v3904
    %v4033 = vadd.f32 %v3625, %v3905
    %v4034 = vadd.f32 %v3626, %v3906
    %v4035 = vadd.f32 %v3627, %v3907
    %v4036 = vadd.f32 %v3628, %v3908
    %v4037 = vadd.f32 %v3629, %v3909
    %v4038 = vadd.f32 %v3630, %v3910
    %v4039 = vadd.f32 %v3631, %v3911
    %v4040 = vadd.f32 %v3632, %v3912
    %v4041 = vadd.f32 %v3633, %v3913
    %v4042 = vadd.f32 %v3634, %v3914
    %v4043 = vadd.f32 %v3635, %v3915
    %v4044 = vadd.f32 %v3636, %v3916
    %v4045 = vadd.f32 %v3637, %v3917
    %v4046 = vadd.f32 %v3638, %v3918
    %v4047 = vadd.f32 %v3639, %v3919
    %v4048 = vadd.f32 %v3640, %v3920
    %v4049 = vadd.f32 %v3641, %v3921
    %v4050 = vadd.f32 %v3642, %v3922
    %v4051 = vadd.f32 %v3643, %v3923
    %v4052 = vadd.f32 %v3644, %v3924
    %v4053 = vadd.f32 %v3645, %v3925
    %v4054 = vadd.f32 %v3646, %v3926
    %v4055 = vadd.f32 %v3647, %v3927
    %v4056 = vadd.f32 %v3648, %v3928
    %v4057 = vadd.f32 %v3649, %v3929
    %v4058 = vadd.f32 %v3650, %v3930
    %v4059 = vadd.f32 %v3651, %v3931
    %v4060 = vadd.f32 %v3652, %v3932
    %v4061 = vadd.f32 %v3653, %v3933
    %v4062 = vadd.f32 %v3654, %v3934
    %v4063 = vadd.f32 %v3655, %v3935
    %v4064 = vadd.f32 %v3656, %v3936
    %v4065 = vadd.f32 %v3657, %v3937
    %v4066 = vadd.f32 %v3658, %v3938
    %v4067 = vadd.f32 %v3659, %v3939
    %v4068 = vadd.f32 %v3660, %v3940
    %v4069 = vadd.f32 %v3661, %v3941
    %v4070 = vadd.f32 %v3662, %v3942
    %v4071 = vadd.f32 %v3663, %v3943
    %v4072 = vadd.f32 %v3664, %v3944
    %v4073 = vadd.f32 %v3665, %v3945
    %v4074 = vadd.f32 %v3666, %v3946
    %v4075 = vadd.f32 %v3667, %v3947
    %v4076 = vadd.f32 %v3668, %v3948
    %v4077 = vadd.f32 %v3669, %v3949
    %v4078 = vadd.f32 %v3670, %v3950
    %v4079 = vadd.f32 %v3671, %v3951
    %v4080 = vadd.f32 %v3672, %v3952
    %v4081 = vadd.f32 %v3673, %v3953
    %v4082 = vadd.f32 %v3674, %v3954
    %v4083 = vadd.f32 %v3675, %v3955
    %v4084 = vadd.f32 %v3676, %v3956
    %v4085 = vadd.f32 %v3677, %v3957
    %v4086 = vadd.f32 %v3678, %v3958
    %v4087 = vadd.f32 %v3679, %v3959
    %v4088 = vadd.f32 %v3680, %v3960
    %v4089 = vadd.f32 %v3681, %v3961
    %v4090 = vadd.f32 %v3682, %v3962
    %v4091 = vadd.f32 %v3683, %v3963
    %v4092 = vadd.f32 %v3684, %v3964
    %v4093 = vadd.f32 %v3685, %v3965
    %v4094 = vadd.f32 %v3686, %v3966
    %v4095 = vperm.slane %v1331, 7
    %v4096 = vperm.slane %v1332, 7
    %v4097 = vperm.slane %v1333, 7
    %v4098 = vperm.slane %v1334, 7
    %v4099 = vperm.slane %v1335, 7
    %v4100 = vperm.slane %v1336, 7
    %v4101 = vperm.slane %v1337, 7
    %v4102 = vperm.slane %v1338, 7
    %v4103 = vperm.slane %v1339, 7
    %v4104 = vperm.slane %v1340, 7
    %v4105 = vperm.slane %v1341, 7
    %v4106 = vperm.slane %v1342, 7
    %v4107 = vperm.slane %v1343, 7
    %v4108 = vperm.slane %v1344, 7
    %v4109 = vperm.slane %v1345, 7
    %v4110 = vperm.slane %v1346, 7
    %v4111 = vperm.slane %v1347, 7
    %v4112 = vperm.slane %v1348, 7
    %v4113 = vperm.slane %v1349, 7
    %v4114 = vperm.slane %v1350, 7
    %v4115 = vperm.slane %v1351, 7
    %v4116 = vperm.slane %v1352, 7
    %v4117 = vperm.slane %v1353, 7
    %v4118 = vperm.slane %v1354, 7
    %v4119 = vperm.slane %v1355, 7
    %v4120 = vperm.slane %v1356, 7
    %v4121 = vperm.slane %v1357, 7
    %v4122 = vperm.slane %v1358, 7
    %v4123 = vperm.slane %v1359, 7
    %v4124 = vperm.slane %v1360, 7
    %v4125 = vperm.slane %v1361, 7
    %v4126 = vperm.slane %v1362, 7
    %v4127 = vperm.slane %v268, 7
    %v4128 = vperm.slane %v269, 7
    %v4129 = vperm.slane %v270, 7
    %v4130 = vperm.slane %v271, 7
    %v4135 = vlaneseq
    %v4136 = vshrl.u32 %v4135, 7
    %4138 = vset.pattern.permute.xlu0 %v4136
    %4139 = vperm.xlu0 %4138, %v4127
    %v4140 = vpop.permute.xlu0 %4139
    %v4141 = vlaneseq
    %v4142 = vshrl.u32 %v4141, 7
    %v4143 = vadd.s32 %v4142, 8
    %4144 = vset.pattern.permute.xlu0 %v4143
    %4145 = vperm.xlu0 %4144, %v4127
    %v4146 = vpop.permute.xlu0 %4145
    %v4147 = vlaneseq
    %v4148 = vshrl.u32 %v4147, 7
    %v4149 = vadd.s32 %v4148, 16
    %4150 = vset.pattern.permute.xlu0 %v4149
    %4151 = vperm.xlu0 %4150, %v4127
    %v4152 = vpop.permute.xlu0 %4151
    %v4153 = vlaneseq
    %v4154 = vshrl.u32 %v4153, 7
    %v4155 = vadd.s32 %v4154, 24
    %4156 = vset.pattern.permute.xlu0 %v4155
    %4157 = vperm.xlu0 %4156, %v4127
    %v4158 = vpop.permute.xlu0 %4157
    %v4159 = vlaneseq
    %v4160 = vshrl.u32 %v4159, 7
    %4162 = vset.pattern.permute.xlu0 %v4160
    %4163 = vperm.xlu0 %4162, %v4128
    %v4164 = vpop.permute.xlu0 %4163
    %v4165 = vlaneseq
    %v4166 = vshrl.u32 %v4165, 7
    %v4167 = vadd.s32 %v4166, 8
    %4168 = vset.pattern.permute.xlu0 %v4167
    %4169 = vperm.xlu0 %4168, %v4128
    %v4170 = vpop.permute.xlu0 %4169
    %v4171 = vlaneseq
    %v4172 = vshrl.u32 %v4171, 7
    %v4173 = vadd.s32 %v4172, 16
    %4174 = vset.pattern.permute.xlu0 %v4173
    %4175 = vperm.xlu0 %4174, %v4128
    %v4176 = vpop.permute.xlu0 %4175
    %v4177 = vlaneseq
    %v4178 = vshrl.u32 %v4177, 7
    %v4179 = vadd.s32 %v4178, 24
    %4180 = vset.pattern.permute.xlu0 %v4179
    %4181 = vperm.xlu0 %4180, %v4128
    %v4182 = vpop.permute.xlu0 %4181
    %v4183 = vlaneseq
    %v4184 = vshrl.u32 %v4183, 7
    %4186 = vset.pattern.permute.xlu0 %v4184
    %4187 = vperm.xlu0 %4186, %v4129
    %v4188 = vpop.permute.xlu0 %4187
    %v4189 = vlaneseq
    %v4190 = vshrl.u32 %v4189, 7
    %v4191 = vadd.s32 %v4190, 8
    %4192 = vset.pattern.permute.xlu0 %v4191
    %4193 = vperm.xlu0 %4192, %v4129
    %v4194 = vpop.permute.xlu0 %4193
    %v4195 = vlaneseq
    %v4196 = vshrl.u32 %v4195, 7
    %v4197 = vadd.s32 %v4196, 16
    %4198 = vset.pattern.permute.xlu0 %v4197
    %4199 = vperm.xlu0 %4198, %v4129
    %v4200 = vpop.permute.xlu0 %4199
    %v4201 = vlaneseq
    %v4202 = vshrl.u32 %v4201, 7
    %v4203 = vadd.s32 %v4202, 24
    %4204 = vset.pattern.permute.xlu0 %v4203
    %4205 = vperm.xlu0 %4204, %v4129
    %v4206 = vpop.permute.xlu0 %4205
    %v4207 = vlaneseq
    %v4208 = vshrl.u32 %v4207, 7
    %4210 = vset.pattern.permute.xlu0 %v4208
    %4211 = vperm.xlu0 %4210, %v4130
    %v4212 = vpop.permute.xlu0 %4211
    %v4213 = vlaneseq
    %v4214 = vshrl.u32 %v4213, 7
    %v4215 = vadd.s32 %v4214, 8
    %4216 = vset.pattern.permute.xlu0 %v4215
    %4217 = vperm.xlu0 %4216, %v4130
    %v4218 = vpop.permute.xlu0 %4217
    %v4219 = vlaneseq
    %v4220 = vshrl.u32 %v4219, 7
    %v4221 = vadd.s32 %v4220, 16
    %4222 = vset.pattern.permute.xlu0 %v4221
    %4223 = vperm.xlu0 %4222, %v4130
    %v4224 = vpop.permute.xlu0 %4223
    %v4225 = vlaneseq
    %v4226 = vshrl.u32 %v4225, 7
    %v4227 = vadd.s32 %v4226, 24
    %4228 = vset.pattern.permute.xlu0 %v4227
    %4229 = vperm.xlu0 %4228, %v4130
    %v4230 = vpop.permute.xlu0 %4229
    %v4247 = vmul.f32 %v4095, %v4140
    %v4248 = vmul.f32 %v4095, %v4146
    %v4249 = vmul.f32 %v4095, %v4152
    %v4250 = vmul.f32 %v4095, %v4158
    %v4251 = vmul.f32 %v4096, %v4140
    %v4252 = vmul.f32 %v4096, %v4146
    %v4253 = vmul.f32 %v4096, %v4152
    %v4254 = vmul.f32 %v4096, %v4158
    %v4255 = vmul.f32 %v4097, %v4140
    %v4256 = vmul.f32 %v4097, %v4146
    %v4257 = vmul.f32 %v4097, %v4152
    %v4258 = vmul.f32 %v4097, %v4158
    %v4259 = vmul.f32 %v4098, %v4140
    %v4260 = vmul.f32 %v4098, %v4146
    %v4261 = vmul.f32 %v4098, %v4152
    %v4262 = vmul.f32 %v4098, %v4158
    %v4263 = vmul.f32 %v4099, %v4140
    %v4264 = vmul.f32 %v4099, %v4146
    %v4265 = vmul.f32 %v4099, %v4152
    %v4266 = vmul.f32 %v4099, %v4158
    %v4267 = vmul.f32 %v4100, %v4140
    %v4268 = vmul.f32 %v4100, %v4146
    %v4269 = vmul.f32 %v4100, %v4152
    %v4270 = vmul.f32 %v4100, %v4158
    %v4271 = vmul.f32 %v4101, %v4140
    %v4272 = vmul.f32 %v4101, %v4146
    %v4273 = vmul.f32 %v4101, %v4152
    %v4274 = vmul.f32 %v4101, %v4158
    %v4275 = vmul.f32 %v4102, %v4140
    %v4276 = vmul.f32 %v4102, %v4146
    %v4277 = vmul.f32 %v4102, %v4152
    %v4278 = vmul.f32 %v4102, %v4158
    %v4279 = vmul.f32 %v4103, %v4164
    %v4280 = vmul.f32 %v4103, %v4170
    %v4281 = vmul.f32 %v4103, %v4176
    %v4282 = vmul.f32 %v4103, %v4182
    %v4283 = vmul.f32 %v4104, %v4164
    %v4284 = vmul.f32 %v4104, %v4170
    %v4285 = vmul.f32 %v4104, %v4176
    %v4286 = vmul.f32 %v4104, %v4182
    %v4287 = vmul.f32 %v4105, %v4164
    %v4288 = vmul.f32 %v4105, %v4170
    %v4289 = vmul.f32 %v4105, %v4176
    %v4290 = vmul.f32 %v4105, %v4182
    %v4291 = vmul.f32 %v4106, %v4164
    %v4292 = vmul.f32 %v4106, %v4170
    %v4293 = vmul.f32 %v4106, %v4176
    %v4294 = vmul.f32 %v4106, %v4182
    %v4295 = vmul.f32 %v4107, %v4164
    %v4296 = vmul.f32 %v4107, %v4170
    %v4297 = vmul.f32 %v4107, %v4176
    %v4298 = vmul.f32 %v4107, %v4182
    %v4299 = vmul.f32 %v4108, %v4164
    %v4300 = vmul.f32 %v4108, %v4170
    %v4301 = vmul.f32 %v4108, %v4176
    %v4302 = vmul.f32 %v4108, %v4182
    %v4303 = vmul.f32 %v4109, %v4164
    %v4304 = vmul.f32 %v4109, %v4170
    %v4305 = vmul.f32 %v4109, %v4176
    %v4306 = vmul.f32 %v4109, %v4182
    %v4307 = vmul.f32 %v4110, %v4164
    %v4308 = vmul.f32 %v4110, %v4170
    %v4309 = vmul.f32 %v4110, %v4176
    %v4310 = vmul.f32 %v4110, %v4182
    %v4311 = vmul.f32 %v4111, %v4188
    %v4312 = vmul.f32 %v4111, %v4194
    %v4313 = vmul.f32 %v4111, %v4200
    %v4314 = vmul.f32 %v4111, %v4206
    %v4315 = vmul.f32 %v4112, %v4188
    %v4316 = vmul.f32 %v4112, %v4194
    %v4317 = vmul.f32 %v4112, %v4200
    %v4318 = vmul.f32 %v4112, %v4206
    %v4319 = vmul.f32 %v4113, %v4188
    %v4320 = vmul.f32 %v4113, %v4194
    %v4321 = vmul.f32 %v4113, %v4200
    %v4322 = vmul.f32 %v4113, %v4206
    %v4323 = vmul.f32 %v4114, %v4188
    %v4324 = vmul.f32 %v4114, %v4194
    %v4325 = vmul.f32 %v4114, %v4200
    %v4326 = vmul.f32 %v4114, %v4206
    %v4327 = vmul.f32 %v4115, %v4188
    %v4328 = vmul.f32 %v4115, %v4194
    %v4329 = vmul.f32 %v4115, %v4200
    %v4330 = vmul.f32 %v4115, %v4206
    %v4331 = vmul.f32 %v4116, %v4188
    %v4332 = vmul.f32 %v4116, %v4194
    %v4333 = vmul.f32 %v4116, %v4200
    %v4334 = vmul.f32 %v4116, %v4206
    %v4335 = vmul.f32 %v4117, %v4188
    %v4336 = vmul.f32 %v4117, %v4194
    %v4337 = vmul.f32 %v4117, %v4200
    %v4338 = vmul.f32 %v4117, %v4206
    %v4339 = vmul.f32 %v4118, %v4188
    %v4340 = vmul.f32 %v4118, %v4194
    %v4341 = vmul.f32 %v4118, %v4200
    %v4342 = vmul.f32 %v4118, %v4206
    %v4343 = vmul.f32 %v4119, %v4212
    %v4344 = vmul.f32 %v4119, %v4218
    %v4345 = vmul.f32 %v4119, %v4224
    %v4346 = vmul.f32 %v4119, %v4230
    %v4347 = vmul.f32 %v4120, %v4212
    %v4348 = vmul.f32 %v4120, %v4218
    %v4349 = vmul.f32 %v4120, %v4224
    %v4350 = vmul.f32 %v4120, %v4230
    %v4351 = vmul.f32 %v4121, %v4212
    %v4352 = vmul.f32 %v4121, %v4218
    %v4353 = vmul.f32 %v4121, %v4224
    %v4354 = vmul.f32 %v4121, %v4230
    %v4355 = vmul.f32 %v4122, %v4212
    %v4356 = vmul.f32 %v4122, %v4218
    %v4357 = vmul.f32 %v4122, %v4224
    %v4358 = vmul.f32 %v4122, %v4230
    %v4359 = vmul.f32 %v4123, %v4212
    %v4360 = vmul.f32 %v4123, %v4218
    %v4361 = vmul.f32 %v4123, %v4224
    %v4362 = vmul.f32 %v4123, %v4230
    %v4363 = vmul.f32 %v4124, %v4212
    %v4364 = vmul.f32 %v4124, %v4218
    %v4365 = vmul.f32 %v4124, %v4224
    %v4366 = vmul.f32 %v4124, %v4230
    %v4367 = vmul.f32 %v4125, %v4212
    %v4368 = vmul.f32 %v4125, %v4218
    %v4369 = vmul.f32 %v4125, %v4224
    %v4370 = vmul.f32 %v4125, %v4230
    %v4371 = vmul.f32 %v4126, %v4212
    %v4372 = vmul.f32 %v4126, %v4218
    %v4373 = vmul.f32 %v4126, %v4224
    %v4374 = vmul.f32 %v4126, %v4230
    %v4375 = vadd.f32 %v3967, %v4247
    %v4376 = vadd.f32 %v3968, %v4248
    %v4377 = vadd.f32 %v3969, %v4249
    %v4378 = vadd.f32 %v3970, %v4250
    %v4379 = vadd.f32 %v3971, %v4251
    %v4380 = vadd.f32 %v3972, %v4252
    %v4381 = vadd.f32 %v3973, %v4253
    %v4382 = vadd.f32 %v3974, %v4254
    %v4383 = vadd.f32 %v3975, %v4255
    %v4384 = vadd.f32 %v3976, %v4256
    %v4385 = vadd.f32 %v3977, %v4257
    %v4386 = vadd.f32 %v3978, %v4258
    %v4387 = vadd.f32 %v3979, %v4259
    %v4388 = vadd.f32 %v3980, %v4260
    %v4389 = vadd.f32 %v3981, %v4261
    %v4390 = vadd.f32 %v3982, %v4262
    %v4391 = vadd.f32 %v3983, %v4263
    %v4392 = vadd.f32 %v3984, %v4264
    %v4393 = vadd.f32 %v3985, %v4265
    %v4394 = vadd.f32 %v3986, %v4266
    %v4395 = vadd.f32 %v3987, %v4267
    %v4396 = vadd.f32 %v3988, %v4268
    %v4397 = vadd.f32 %v3989, %v4269
    %v4398 = vadd.f32 %v3990, %v4270
    %v4399 = vadd.f32 %v3991, %v4271
    %v4400 = vadd.f32 %v3992, %v4272
    %v4401 = vadd.f32 %v3993, %v4273
    %v4402 = vadd.f32 %v3994, %v4274
    %v4403 = vadd.f32 %v3995, %v4275
    %v4404 = vadd.f32 %v3996, %v4276
    %v4405 = vadd.f32 %v3997, %v4277
    %v4406 = vadd.f32 %v3998, %v4278
    %v4407 = vadd.f32 %v3999, %v4279
    %v4408 = vadd.f32 %v4000, %v4280
    %v4409 = vadd.f32 %v4001, %v4281
    %v4410 = vadd.f32 %v4002, %v4282
    %v4411 = vadd.f32 %v4003, %v4283
    %v4412 = vadd.f32 %v4004, %v4284
    %v4413 = vadd.f32 %v4005, %v4285
    %v4414 = vadd.f32 %v4006, %v4286
    %v4415 = vadd.f32 %v4007, %v4287
    %v4416 = vadd.f32 %v4008, %v4288
    %v4417 = vadd.f32 %v4009, %v4289
    %v4418 = vadd.f32 %v4010, %v4290
    %v4419 = vadd.f32 %v4011, %v4291
    %v4420 = vadd.f32 %v4012, %v4292
    %v4421 = vadd.f32 %v4013, %v4293
    %v4422 = vadd.f32 %v4014, %v4294
    %v4423 = vadd.f32 %v4015, %v4295
    %v4424 = vadd.f32 %v4016, %v4296
    %v4425 = vadd.f32 %v4017, %v4297
    %v4426 = vadd.f32 %v4018, %v4298
    %v4427 = vadd.f32 %v4019, %v4299
    %v4428 = vadd.f32 %v4020, %v4300
    %v4429 = vadd.f32 %v4021, %v4301
    %v4430 = vadd.f32 %v4022, %v4302
    %v4431 = vadd.f32 %v4023, %v4303
    %v4432 = vadd.f32 %v4024, %v4304
    %v4433 = vadd.f32 %v4025, %v4305
    %v4434 = vadd.f32 %v4026, %v4306
    %v4435 = vadd.f32 %v4027, %v4307
    %v4436 = vadd.f32 %v4028, %v4308
    %v4437 = vadd.f32 %v4029, %v4309
    %v4438 = vadd.f32 %v4030, %v4310
    %v4439 = vadd.f32 %v4031, %v4311
    %v4440 = vadd.f32 %v4032, %v4312
    %v4441 = vadd.f32 %v4033, %v4313
    %v4442 = vadd.f32 %v4034, %v4314
    %v4443 = vadd.f32 %v4035, %v4315
    %v4444 = vadd.f32 %v4036, %v4316
    %v4445 = vadd.f32 %v4037, %v4317
    %v4446 = vadd.f32 %v4038, %v4318
    %v4447 = vadd.f32 %v4039, %v4319
    %v4448 = vadd.f32 %v4040, %v4320
    %v4449 = vadd.f32 %v4041, %v4321
    %v4450 = vadd.f32 %v4042, %v4322
    %v4451 = vadd.f32 %v4043, %v4323
    %v4452 = vadd.f32 %v4044, %v4324
    %v4453 = vadd.f32 %v4045, %v4325
    %v4454 = vadd.f32 %v4046, %v4326
    %v4455 = vadd.f32 %v4047, %v4327
    %v4456 = vadd.f32 %v4048, %v4328
    %v4457 = vadd.f32 %v4049, %v4329
    %v4458 = vadd.f32 %v4050, %v4330
    %v4459 = vadd.f32 %v4051, %v4331
    %v4460 = vadd.f32 %v4052, %v4332
    %v4461 = vadd.f32 %v4053, %v4333
    %v4462 = vadd.f32 %v4054, %v4334
    %v4463 = vadd.f32 %v4055, %v4335
    %v4464 = vadd.f32 %v4056, %v4336
    %v4465 = vadd.f32 %v4057, %v4337
    %v4466 = vadd.f32 %v4058, %v4338
    %v4467 = vadd.f32 %v4059, %v4339
    %v4468 = vadd.f32 %v4060, %v4340
    %v4469 = vadd.f32 %v4061, %v4341
    %v4470 = vadd.f32 %v4062, %v4342
    %v4471 = vadd.f32 %v4063, %v4343
    %v4472 = vadd.f32 %v4064, %v4344
    %v4473 = vadd.f32 %v4065, %v4345
    %v4474 = vadd.f32 %v4066, %v4346
    %v4475 = vadd.f32 %v4067, %v4347
    %v4476 = vadd.f32 %v4068, %v4348
    %v4477 = vadd.f32 %v4069, %v4349
    %v4478 = vadd.f32 %v4070, %v4350
    %v4479 = vadd.f32 %v4071, %v4351
    %v4480 = vadd.f32 %v4072, %v4352
    %v4481 = vadd.f32 %v4073, %v4353
    %v4482 = vadd.f32 %v4074, %v4354
    %v4483 = vadd.f32 %v4075, %v4355
    %v4484 = vadd.f32 %v4076, %v4356
    %v4485 = vadd.f32 %v4077, %v4357
    %v4486 = vadd.f32 %v4078, %v4358
    %v4487 = vadd.f32 %v4079, %v4359
    %v4488 = vadd.f32 %v4080, %v4360
    %v4489 = vadd.f32 %v4081, %v4361
    %v4490 = vadd.f32 %v4082, %v4362
    %v4491 = vadd.f32 %v4083, %v4363
    %v4492 = vadd.f32 %v4084, %v4364
    %v4493 = vadd.f32 %v4085, %v4365
    %v4494 = vadd.f32 %v4086, %v4366
    %v4495 = vadd.f32 %v4087, %v4367
    %v4496 = vadd.f32 %v4088, %v4368
    %v4497 = vadd.f32 %v4089, %v4369
    %v4498 = vadd.f32 %v4090, %v4370
    %v4499 = vadd.f32 %v4091, %v4371
    %v4500 = vadd.f32 %v4092, %v4372
    %v4501 = vadd.f32 %v4093, %v4373
    %v4502 = vadd.f32 %v4094, %v4374
    %v4503 = vmul.f32 %v1363, %v256
    %v4504 = vmul.f32 %v1364, %v257
    %v4505 = vmul.f32 %v1365, %v258
    %v4506 = vmul.f32 %v1366, %v259
    %4635 = vset.pattern.permute.xlu0 0
    %4636 = vperm.xlu0 %4635, %v4375
    %v4637 = vpop.permute.xlu0 %4636
    %4638 = vset.pattern.permute.xlu0 0
    %4639 = vperm.xlu0 %4638, %v4376
    %v4640 = vpop.permute.xlu0 %4639
    %4641 = vset.pattern.permute.xlu0 0
    %4642 = vperm.xlu0 %4641, %v4377
    %v4643 = vpop.permute.xlu0 %4642
    %4644 = vset.pattern.permute.xlu0 0
    %4645 = vperm.xlu0 %4644, %v4378
    %v4646 = vpop.permute.xlu0 %4645
    %4647 = vset.pattern.permute.xlu0 0
    %4648 = vperm.xlu0 %4647, %v4379
    %v4649 = vpop.permute.xlu0 %4648
    %4650 = vset.pattern.permute.xlu0 0
    %4651 = vperm.xlu0 %4650, %v4380
    %v4652 = vpop.permute.xlu0 %4651
    %4653 = vset.pattern.permute.xlu0 0
    %4654 = vperm.xlu0 %4653, %v4381
    %v4655 = vpop.permute.xlu0 %4654
    %4656 = vset.pattern.permute.xlu0 0
    %4657 = vperm.xlu0 %4656, %v4382
    %v4658 = vpop.permute.xlu0 %4657
    %4659 = vset.pattern.permute.xlu0 0
    %4660 = vperm.xlu0 %4659, %v4383
    %v4661 = vpop.permute.xlu0 %4660
    %4662 = vset.pattern.permute.xlu0 0
    %4663 = vperm.xlu0 %4662, %v4384
    %v4664 = vpop.permute.xlu0 %4663
    %4665 = vset.pattern.permute.xlu0 0
    %4666 = vperm.xlu0 %4665, %v4385
    %v4667 = vpop.permute.xlu0 %4666
    %4668 = vset.pattern.permute.xlu0 0
    %4669 = vperm.xlu0 %4668, %v4386
    %v4670 = vpop.permute.xlu0 %4669
    %4671 = vset.pattern.permute.xlu0 0
    %4672 = vperm.xlu0 %4671, %v4387
    %v4673 = vpop.permute.xlu0 %4672
    %4674 = vset.pattern.permute.xlu0 0
    %4675 = vperm.xlu0 %4674, %v4388
    %v4676 = vpop.permute.xlu0 %4675
    %4677 = vset.pattern.permute.xlu0 0
    %4678 = vperm.xlu0 %4677, %v4389
    %v4679 = vpop.permute.xlu0 %4678
    %4680 = vset.pattern.permute.xlu0 0
    %4681 = vperm.xlu0 %4680, %v4390
    %v4682 = vpop.permute.xlu0 %4681
    %4683 = vset.pattern.permute.xlu0 0
    %4684 = vperm.xlu0 %4683, %v4391
    %v4685 = vpop.permute.xlu0 %4684
    %4686 = vset.pattern.permute.xlu0 0
    %4687 = vperm.xlu0 %4686, %v4392
    %v4688 = vpop.permute.xlu0 %4687
    %4689 = vset.pattern.permute.xlu0 0
    %4690 = vperm.xlu0 %4689, %v4393
    %v4691 = vpop.permute.xlu0 %4690
    %4692 = vset.pattern.permute.xlu0 0
    %4693 = vperm.xlu0 %4692, %v4394
    %v4694 = vpop.permute.xlu0 %4693
    %4695 = vset.pattern.permute.xlu0 0
    %4696 = vperm.xlu0 %4695, %v4395
    %v4697 = vpop.permute.xlu0 %4696
    %4698 = vset.pattern.permute.xlu0 0
    %4699 = vperm.xlu0 %4698, %v4396
    %v4700 = vpop.permute.xlu0 %4699
    %4701 = vset.pattern.permute.xlu0 0
    %4702 = vperm.xlu0 %4701, %v4397
    %v4703 = vpop.permute.xlu0 %4702
    %4704 = vset.pattern.permute.xlu0 0
    %4705 = vperm.xlu0 %4704, %v4398
    %v4706 = vpop.permute.xlu0 %4705
    %4707 = vset.pattern.permute.xlu0 0
    %4708 = vperm.xlu0 %4707, %v4399
    %v4709 = vpop.permute.xlu0 %4708
    %4710 = vset.pattern.permute.xlu0 0
    %4711 = vperm.xlu0 %4710, %v4400
    %v4712 = vpop.permute.xlu0 %4711
    %4713 = vset.pattern.permute.xlu0 0
    %4714 = vperm.xlu0 %4713, %v4401
    %v4715 = vpop.permute.xlu0 %4714
    %4716 = vset.pattern.permute.xlu0 0
    %4717 = vperm.xlu0 %4716, %v4402
    %v4718 = vpop.permute.xlu0 %4717
    %4719 = vset.pattern.permute.xlu0 0
    %4720 = vperm.xlu0 %4719, %v4403
    %v4721 = vpop.permute.xlu0 %4720
    %4722 = vset.pattern.permute.xlu0 0
    %4723 = vperm.xlu0 %4722, %v4404
    %v4724 = vpop.permute.xlu0 %4723
    %4725 = vset.pattern.permute.xlu0 0
    %4726 = vperm.xlu0 %4725, %v4405
    %v4727 = vpop.permute.xlu0 %4726
    %4728 = vset.pattern.permute.xlu0 0
    %4729 = vperm.xlu0 %4728, %v4406
    %v4730 = vpop.permute.xlu0 %4729
    %4731 = vset.pattern.permute.xlu0 0
    %4732 = vperm.xlu0 %4731, %v4407
    %v4733 = vpop.permute.xlu0 %4732
    %4734 = vset.pattern.permute.xlu0 0
    %4735 = vperm.xlu0 %4734, %v4408
    %v4736 = vpop.permute.xlu0 %4735
    %4737 = vset.pattern.permute.xlu0 0
    %4738 = vperm.xlu0 %4737, %v4409
    %v4739 = vpop.permute.xlu0 %4738
    %4740 = vset.pattern.permute.xlu0 0
    %4741 = vperm.xlu0 %4740, %v4410
    %v4742 = vpop.permute.xlu0 %4741
    %4743 = vset.pattern.permute.xlu0 0
    %4744 = vperm.xlu0 %4743, %v4411
    %v4745 = vpop.permute.xlu0 %4744
    %4746 = vset.pattern.permute.xlu0 0
    %4747 = vperm.xlu0 %4746, %v4412
    %v4748 = vpop.permute.xlu0 %4747
    %4749 = vset.pattern.permute.xlu0 0
    %4750 = vperm.xlu0 %4749, %v4413
    %v4751 = vpop.permute.xlu0 %4750
    %4752 = vset.pattern.permute.xlu0 0
    %4753 = vperm.xlu0 %4752, %v4414
    %v4754 = vpop.permute.xlu0 %4753
    %4755 = vset.pattern.permute.xlu0 0
    %4756 = vperm.xlu0 %4755, %v4415
    %v4757 = vpop.permute.xlu0 %4756
    %4758 = vset.pattern.permute.xlu0 0
    %4759 = vperm.xlu0 %4758, %v4416
    %v4760 = vpop.permute.xlu0 %4759
    %4761 = vset.pattern.permute.xlu0 0
    %4762 = vperm.xlu0 %4761, %v4417
    %v4763 = vpop.permute.xlu0 %4762
    %4764 = vset.pattern.permute.xlu0 0
    %4765 = vperm.xlu0 %4764, %v4418
    %v4766 = vpop.permute.xlu0 %4765
    %4767 = vset.pattern.permute.xlu0 0
    %4768 = vperm.xlu0 %4767, %v4419
    %v4769 = vpop.permute.xlu0 %4768
    %4770 = vset.pattern.permute.xlu0 0
    %4771 = vperm.xlu0 %4770, %v4420
    %v4772 = vpop.permute.xlu0 %4771
    %4773 = vset.pattern.permute.xlu0 0
    %4774 = vperm.xlu0 %4773, %v4421
    %v4775 = vpop.permute.xlu0 %4774
    %4776 = vset.pattern.permute.xlu0 0
    %4777 = vperm.xlu0 %4776, %v4422
    %v4778 = vpop.permute.xlu0 %4777
    %4779 = vset.pattern.permute.xlu0 0
    %4780 = vperm.xlu0 %4779, %v4423
    %v4781 = vpop.permute.xlu0 %4780
    %4782 = vset.pattern.permute.xlu0 0
    %4783 = vperm.xlu0 %4782, %v4424
    %v4784 = vpop.permute.xlu0 %4783
    %4785 = vset.pattern.permute.xlu0 0
    %4786 = vperm.xlu0 %4785, %v4425
    %v4787 = vpop.permute.xlu0 %4786
    %4788 = vset.pattern.permute.xlu0 0
    %4789 = vperm.xlu0 %4788, %v4426
    %v4790 = vpop.permute.xlu0 %4789
    %4791 = vset.pattern.permute.xlu0 0
    %4792 = vperm.xlu0 %4791, %v4427
    %v4793 = vpop.permute.xlu0 %4792
    %4794 = vset.pattern.permute.xlu0 0
    %4795 = vperm.xlu0 %4794, %v4428
    %v4796 = vpop.permute.xlu0 %4795
    %4797 = vset.pattern.permute.xlu0 0
    %4798 = vperm.xlu0 %4797, %v4429
    %v4799 = vpop.permute.xlu0 %4798
    %4800 = vset.pattern.permute.xlu0 0
    %4801 = vperm.xlu0 %4800, %v4430
    %v4802 = vpop.permute.xlu0 %4801
    %4803 = vset.pattern.permute.xlu0 0
    %4804 = vperm.xlu0 %4803, %v4431
    %v4805 = vpop.permute.xlu0 %4804
    %4806 = vset.pattern.permute.xlu0 0
    %4807 = vperm.xlu0 %4806, %v4432
    %v4808 = vpop.permute.xlu0 %4807
    %4809 = vset.pattern.permute.xlu0 0
    %4810 = vperm.xlu0 %4809, %v4433
    %v4811 = vpop.permute.xlu0 %4810
    %4812 = vset.pattern.permute.xlu0 0
    %4813 = vperm.xlu0 %4812, %v4434
    %v4814 = vpop.permute.xlu0 %4813
    %4815 = vset.pattern.permute.xlu0 0
    %4816 = vperm.xlu0 %4815, %v4435
    %v4817 = vpop.permute.xlu0 %4816
    %4818 = vset.pattern.permute.xlu0 0
    %4819 = vperm.xlu0 %4818, %v4436
    %v4820 = vpop.permute.xlu0 %4819
    %4821 = vset.pattern.permute.xlu0 0
    %4822 = vperm.xlu0 %4821, %v4437
    %v4823 = vpop.permute.xlu0 %4822
    %4824 = vset.pattern.permute.xlu0 0
    %4825 = vperm.xlu0 %4824, %v4438
    %v4826 = vpop.permute.xlu0 %4825
    %4827 = vset.pattern.permute.xlu0 0
    %4828 = vperm.xlu0 %4827, %v4439
    %v4829 = vpop.permute.xlu0 %4828
    %4830 = vset.pattern.permute.xlu0 0
    %4831 = vperm.xlu0 %4830, %v4440
    %v4832 = vpop.permute.xlu0 %4831
    %4833 = vset.pattern.permute.xlu0 0
    %4834 = vperm.xlu0 %4833, %v4441
    %v4835 = vpop.permute.xlu0 %4834
    %4836 = vset.pattern.permute.xlu0 0
    %4837 = vperm.xlu0 %4836, %v4442
    %v4838 = vpop.permute.xlu0 %4837
    %4839 = vset.pattern.permute.xlu0 0
    %4840 = vperm.xlu0 %4839, %v4443
    %v4841 = vpop.permute.xlu0 %4840
    %4842 = vset.pattern.permute.xlu0 0
    %4843 = vperm.xlu0 %4842, %v4444
    %v4844 = vpop.permute.xlu0 %4843
    %4845 = vset.pattern.permute.xlu0 0
    %4846 = vperm.xlu0 %4845, %v4445
    %v4847 = vpop.permute.xlu0 %4846
    %4848 = vset.pattern.permute.xlu0 0
    %4849 = vperm.xlu0 %4848, %v4446
    %v4850 = vpop.permute.xlu0 %4849
    %4851 = vset.pattern.permute.xlu0 0
    %4852 = vperm.xlu0 %4851, %v4447
    %v4853 = vpop.permute.xlu0 %4852
    %4854 = vset.pattern.permute.xlu0 0
    %4855 = vperm.xlu0 %4854, %v4448
    %v4856 = vpop.permute.xlu0 %4855
    %4857 = vset.pattern.permute.xlu0 0
    %4858 = vperm.xlu0 %4857, %v4449
    %v4859 = vpop.permute.xlu0 %4858
    %4860 = vset.pattern.permute.xlu0 0
    %4861 = vperm.xlu0 %4860, %v4450
    %v4862 = vpop.permute.xlu0 %4861
    %4863 = vset.pattern.permute.xlu0 0
    %4864 = vperm.xlu0 %4863, %v4451
    %v4865 = vpop.permute.xlu0 %4864
    %4866 = vset.pattern.permute.xlu0 0
    %4867 = vperm.xlu0 %4866, %v4452
    %v4868 = vpop.permute.xlu0 %4867
    %4869 = vset.pattern.permute.xlu0 0
    %4870 = vperm.xlu0 %4869, %v4453
    %v4871 = vpop.permute.xlu0 %4870
    %4872 = vset.pattern.permute.xlu0 0
    %4873 = vperm.xlu0 %4872, %v4454
    %v4874 = vpop.permute.xlu0 %4873
    %4875 = vset.pattern.permute.xlu0 0
    %4876 = vperm.xlu0 %4875, %v4455
    %v4877 = vpop.permute.xlu0 %4876
    %4878 = vset.pattern.permute.xlu0 0
    %4879 = vperm.xlu0 %4878, %v4456
    %v4880 = vpop.permute.xlu0 %4879
    %4881 = vset.pattern.permute.xlu0 0
    %4882 = vperm.xlu0 %4881, %v4457
    %v4883 = vpop.permute.xlu0 %4882
    %4884 = vset.pattern.permute.xlu0 0
    %4885 = vperm.xlu0 %4884, %v4458
    %v4886 = vpop.permute.xlu0 %4885
    %4887 = vset.pattern.permute.xlu0 0
    %4888 = vperm.xlu0 %4887, %v4459
    %v4889 = vpop.permute.xlu0 %4888
    %4890 = vset.pattern.permute.xlu0 0
    %4891 = vperm.xlu0 %4890, %v4460
    %v4892 = vpop.permute.xlu0 %4891
    %4893 = vset.pattern.permute.xlu0 0
    %4894 = vperm.xlu0 %4893, %v4461
    %v4895 = vpop.permute.xlu0 %4894
    %4896 = vset.pattern.permute.xlu0 0
    %4897 = vperm.xlu0 %4896, %v4462
    %v4898 = vpop.permute.xlu0 %4897
    %4899 = vset.pattern.permute.xlu0 0
    %4900 = vperm.xlu0 %4899, %v4463
    %v4901 = vpop.permute.xlu0 %4900
    %4902 = vset.pattern.permute.xlu0 0
    %4903 = vperm.xlu0 %4902, %v4464
    %v4904 = vpop.permute.xlu0 %4903
    %4905 = vset.pattern.permute.xlu0 0
    %4906 = vperm.xlu0 %4905, %v4465
    %v4907 = vpop.permute.xlu0 %4906
    %4908 = vset.pattern.permute.xlu0 0
    %4909 = vperm.xlu0 %4908, %v4466
    %v4910 = vpop.permute.xlu0 %4909
    %4911 = vset.pattern.permute.xlu0 0
    %4912 = vperm.xlu0 %4911, %v4467
    %v4913 = vpop.permute.xlu0 %4912
    %4914 = vset.pattern.permute.xlu0 0
    %4915 = vperm.xlu0 %4914, %v4468
    %v4916 = vpop.permute.xlu0 %4915
    %4917 = vset.pattern.permute.xlu0 0
    %4918 = vperm.xlu0 %4917, %v4469
    %v4919 = vpop.permute.xlu0 %4918
    %4920 = vset.pattern.permute.xlu0 0
    %4921 = vperm.xlu0 %4920, %v4470
    %v4922 = vpop.permute.xlu0 %4921
    %4923 = vset.pattern.permute.xlu0 0
    %4924 = vperm.xlu0 %4923, %v4471
    %v4925 = vpop.permute.xlu0 %4924
    %4926 = vset.pattern.permute.xlu0 0
    %4927 = vperm.xlu0 %4926, %v4472
    %v4928 = vpop.permute.xlu0 %4927
    %4929 = vset.pattern.permute.xlu0 0
    %4930 = vperm.xlu0 %4929, %v4473
    %v4931 = vpop.permute.xlu0 %4930
    %4932 = vset.pattern.permute.xlu0 0
    %4933 = vperm.xlu0 %4932, %v4474
    %v4934 = vpop.permute.xlu0 %4933
    %4935 = vset.pattern.permute.xlu0 0
    %4936 = vperm.xlu0 %4935, %v4475
    %v4937 = vpop.permute.xlu0 %4936
    %4938 = vset.pattern.permute.xlu0 0
    %4939 = vperm.xlu0 %4938, %v4476
    %v4940 = vpop.permute.xlu0 %4939
    %4941 = vset.pattern.permute.xlu0 0
    %4942 = vperm.xlu0 %4941, %v4477
    %v4943 = vpop.permute.xlu0 %4942
    %4944 = vset.pattern.permute.xlu0 0
    %4945 = vperm.xlu0 %4944, %v4478
    %v4946 = vpop.permute.xlu0 %4945
    %4947 = vset.pattern.permute.xlu0 0
    %4948 = vperm.xlu0 %4947, %v4479
    %v4949 = vpop.permute.xlu0 %4948
    %4950 = vset.pattern.permute.xlu0 0
    %4951 = vperm.xlu0 %4950, %v4480
    %v4952 = vpop.permute.xlu0 %4951
    %4953 = vset.pattern.permute.xlu0 0
    %4954 = vperm.xlu0 %4953, %v4481
    %v4955 = vpop.permute.xlu0 %4954
    %4956 = vset.pattern.permute.xlu0 0
    %4957 = vperm.xlu0 %4956, %v4482
    %v4958 = vpop.permute.xlu0 %4957
    %4959 = vset.pattern.permute.xlu0 0
    %4960 = vperm.xlu0 %4959, %v4483
    %v4961 = vpop.permute.xlu0 %4960
    %4962 = vset.pattern.permute.xlu0 0
    %4963 = vperm.xlu0 %4962, %v4484
    %v4964 = vpop.permute.xlu0 %4963
    %4965 = vset.pattern.permute.xlu0 0
    %4966 = vperm.xlu0 %4965, %v4485
    %v4967 = vpop.permute.xlu0 %4966
    %4968 = vset.pattern.permute.xlu0 0
    %4969 = vperm.xlu0 %4968, %v4486
    %v4970 = vpop.permute.xlu0 %4969
    %4971 = vset.pattern.permute.xlu0 0
    %4972 = vperm.xlu0 %4971, %v4487
    %v4973 = vpop.permute.xlu0 %4972
    %4974 = vset.pattern.permute.xlu0 0
    %4975 = vperm.xlu0 %4974, %v4488
    %v4976 = vpop.permute.xlu0 %4975
    %4977 = vset.pattern.permute.xlu0 0
    %4978 = vperm.xlu0 %4977, %v4489
    %v4979 = vpop.permute.xlu0 %4978
    %4980 = vset.pattern.permute.xlu0 0
    %4981 = vperm.xlu0 %4980, %v4490
    %v4982 = vpop.permute.xlu0 %4981
    %4983 = vset.pattern.permute.xlu0 0
    %4984 = vperm.xlu0 %4983, %v4491
    %v4985 = vpop.permute.xlu0 %4984
    %4986 = vset.pattern.permute.xlu0 0
    %4987 = vperm.xlu0 %4986, %v4492
    %v4988 = vpop.permute.xlu0 %4987
    %4989 = vset.pattern.permute.xlu0 0
    %4990 = vperm.xlu0 %4989, %v4493
    %v4991 = vpop.permute.xlu0 %4990
    %4992 = vset.pattern.permute.xlu0 0
    %4993 = vperm.xlu0 %4992, %v4494
    %v4994 = vpop.permute.xlu0 %4993
    %4995 = vset.pattern.permute.xlu0 0
    %4996 = vperm.xlu0 %4995, %v4495
    %v4997 = vpop.permute.xlu0 %4996
    %4998 = vset.pattern.permute.xlu0 0
    %4999 = vperm.xlu0 %4998, %v4496
    %v5000 = vpop.permute.xlu0 %4999
    %5001 = vset.pattern.permute.xlu0 0
    %5002 = vperm.xlu0 %5001, %v4497
    %v5003 = vpop.permute.xlu0 %5002
    %5004 = vset.pattern.permute.xlu0 0
    %5005 = vperm.xlu0 %5004, %v4498
    %v5006 = vpop.permute.xlu0 %5005
    %5007 = vset.pattern.permute.xlu0 0
    %5008 = vperm.xlu0 %5007, %v4499
    %v5009 = vpop.permute.xlu0 %5008
    %5010 = vset.pattern.permute.xlu0 0
    %5011 = vperm.xlu0 %5010, %v4500
    %v5012 = vpop.permute.xlu0 %5011
    %5013 = vset.pattern.permute.xlu0 0
    %5014 = vperm.xlu0 %5013, %v4501
    %v5015 = vpop.permute.xlu0 %5014
    %5016 = vset.pattern.permute.xlu0 0
    %5017 = vperm.xlu0 %5016, %v4502
    %v5018 = vpop.permute.xlu0 %5017
    %v5019 = vperm.slane %v4637, %v730
    %v5020 = vadd.s32 %v730, 4294967288
    %v5021 = vperm.slane %v4640, %v5020
    %vm5022 = vcmask 130112
    %v5023 = vsel %vm5022, %v5021, %v5019
    %v5024 = vadd.s32 %v730, 4294967280
    %v5025 = vperm.slane %v4643, %v5024
    %vm5026 = vcmask 195712
    %v5027 = vsel %vm5026, %v5025, %v5023
    %v5028 = vadd.s32 %v730, 4294967272
    %v5029 = vperm.slane %v4646, %v5028
    %vm5030 = vcmask 261312
    %v5031 = vsel %vm5030, %v5029, %v5027
    %v5032 = vperm.slane %v4649, %v730
    %v5033 = vperm.slane %v4652, %v5020
    %v5034 = vsel %vm5022, %v5033, %v5032
    %v5035 = vperm.slane %v4655, %v5024
    %v5036 = vsel %vm5026, %v5035, %v5034
    %v5037 = vperm.slane %v4658, %v5028
    %v5038 = vsel %vm5030, %v5037, %v5036
    %v5039 = vperm.slane %v4661, %v730
    %v5040 = vperm.slane %v4664, %v5020
    %v5041 = vsel %vm5022, %v5040, %v5039
    %v5042 = vperm.slane %v4667, %v5024
    %v5043 = vsel %vm5026, %v5042, %v5041
    %v5044 = vperm.slane %v4670, %v5028
    %v5045 = vsel %vm5030, %v5044, %v5043
    %v5046 = vperm.slane %v4673, %v730
    %v5047 = vperm.slane %v4676, %v5020
    %v5048 = vsel %vm5022, %v5047, %v5046
    %v5049 = vperm.slane %v4679, %v5024
    %v5050 = vsel %vm5026, %v5049, %v5048
    %v5051 = vperm.slane %v4682, %v5028
    %v5052 = vsel %vm5030, %v5051, %v5050
    %v5053 = vperm.slane %v4685, %v730
    %v5054 = vperm.slane %v4688, %v5020
    %v5055 = vsel %vm5022, %v5054, %v5053
    %v5056 = vperm.slane %v4691, %v5024
    %v5057 = vsel %vm5026, %v5056, %v5055
    %v5058 = vperm.slane %v4694, %v5028
    %v5059 = vsel %vm5030, %v5058, %v5057
    %v5060 = vperm.slane %v4697, %v730
    %v5061 = vperm.slane %v4700, %v5020
    %v5062 = vsel %vm5022, %v5061, %v5060
    %v5063 = vperm.slane %v4703, %v5024
    %v5064 = vsel %vm5026, %v5063, %v5062
    %v5065 = vperm.slane %v4706, %v5028
    %v5066 = vsel %vm5030, %v5065, %v5064
    %v5067 = vperm.slane %v4709, %v730
    %v5068 = vperm.slane %v4712, %v5020
    %v5069 = vsel %vm5022, %v5068, %v5067
    %v5070 = vperm.slane %v4715, %v5024
    %v5071 = vsel %vm5026, %v5070, %v5069
    %v5072 = vperm.slane %v4718, %v5028
    %v5073 = vsel %vm5030, %v5072, %v5071
    %v5074 = vperm.slane %v4721, %v730
    %v5075 = vperm.slane %v4724, %v5020
    %v5076 = vsel %vm5022, %v5075, %v5074
    %v5077 = vperm.slane %v4727, %v5024
    %v5078 = vsel %vm5026, %v5077, %v5076
    %v5079 = vperm.slane %v4730, %v5028
    %v5080 = vsel %vm5030, %v5079, %v5078
    %v5081 = vperm.slane %v4733, %v730
    %v5082 = vperm.slane %v4736, %v5020
    %v5083 = vsel %vm5022, %v5082, %v5081
    %v5084 = vperm.slane %v4739, %v5024
    %v5085 = vsel %vm5026, %v5084, %v5083
    %v5086 = vperm.slane %v4742, %v5028
    %v5087 = vsel %vm5030, %v5086, %v5085
    %v5088 = vperm.slane %v4745, %v730
    %v5089 = vperm.slane %v4748, %v5020
    %v5090 = vsel %vm5022, %v5089, %v5088
    %v5091 = vperm.slane %v4751, %v5024
    %v5092 = vsel %vm5026, %v5091, %v5090
    %v5093 = vperm.slane %v4754, %v5028
    %v5094 = vsel %vm5030, %v5093, %v5092
    %v5095 = vperm.slane %v4757, %v730
    %v5096 = vperm.slane %v4760, %v5020
    %v5097 = vsel %vm5022, %v5096, %v5095
    %v5098 = vperm.slane %v4763, %v5024
    %v5099 = vsel %vm5026, %v5098, %v5097
    %v5100 = vperm.slane %v4766, %v5028
    %v5101 = vsel %vm5030, %v5100, %v5099
    %v5102 = vperm.slane %v4769, %v730
    %v5103 = vperm.slane %v4772, %v5020
    %v5104 = vsel %vm5022, %v5103, %v5102
    %v5105 = vperm.slane %v4775, %v5024
    %v5106 = vsel %vm5026, %v5105, %v5104
    %v5107 = vperm.slane %v4778, %v5028
    %v5108 = vsel %vm5030, %v5107, %v5106
    %v5109 = vperm.slane %v4781, %v730
    %v5110 = vperm.slane %v4784, %v5020
    %v5111 = vsel %vm5022, %v5110, %v5109
    %v5112 = vperm.slane %v4787, %v5024
    %v5113 = vsel %vm5026, %v5112, %v5111
    %v5114 = vperm.slane %v4790, %v5028
    %v5115 = vsel %vm5030, %v5114, %v5113
    %v5116 = vperm.slane %v4793, %v730
    %v5117 = vperm.slane %v4796, %v5020
    %v5118 = vsel %vm5022, %v5117, %v5116
    %v5119 = vperm.slane %v4799, %v5024
    %v5120 = vsel %vm5026, %v5119, %v5118
    %v5121 = vperm.slane %v4802, %v5028
    %v5122 = vsel %vm5030, %v5121, %v5120
    %v5123 = vperm.slane %v4805, %v730
    %v5124 = vperm.slane %v4808, %v5020
    %v5125 = vsel %vm5022, %v5124, %v5123
    %v5126 = vperm.slane %v4811, %v5024
    %v5127 = vsel %vm5026, %v5126, %v5125
    %v5128 = vperm.slane %v4814, %v5028
    %v5129 = vsel %vm5030, %v5128, %v5127
    %v5130 = vperm.slane %v4817, %v730
    %v5131 = vperm.slane %v4820, %v5020
    %v5132 = vsel %vm5022, %v5131, %v5130
    %v5133 = vperm.slane %v4823, %v5024
    %v5134 = vsel %vm5026, %v5133, %v5132
    %v5135 = vperm.slane %v4826, %v5028
    %v5136 = vsel %vm5030, %v5135, %v5134
    %v5137 = vperm.slane %v4829, %v730
    %v5138 = vperm.slane %v4832, %v5020
    %v5139 = vsel %vm5022, %v5138, %v5137
    %v5140 = vperm.slane %v4835, %v5024
    %v5141 = vsel %vm5026, %v5140, %v5139
    %v5142 = vperm.slane %v4838, %v5028
    %v5143 = vsel %vm5030, %v5142, %v5141
    %v5144 = vperm.slane %v4841, %v730
    %v5145 = vperm.slane %v4844, %v5020
    %v5146 = vsel %vm5022, %v5145, %v5144
    %v5147 = vperm.slane %v4847, %v5024
    %v5148 = vsel %vm5026, %v5147, %v5146
    %v5149 = vperm.slane %v4850, %v5028
    %v5150 = vsel %vm5030, %v5149, %v5148
    %v5151 = vperm.slane %v4853, %v730
    %v5152 = vperm.slane %v4856, %v5020
    %v5153 = vsel %vm5022, %v5152, %v5151
    %v5154 = vperm.slane %v4859, %v5024
    %v5155 = vsel %vm5026, %v5154, %v5153
    %v5156 = vperm.slane %v4862, %v5028
    %v5157 = vsel %vm5030, %v5156, %v5155
    %v5158 = vperm.slane %v4865, %v730
    %v5159 = vperm.slane %v4868, %v5020
    %v5160 = vsel %vm5022, %v5159, %v5158
    %v5161 = vperm.slane %v4871, %v5024
    %v5162 = vsel %vm5026, %v5161, %v5160
    %v5163 = vperm.slane %v4874, %v5028
    %v5164 = vsel %vm5030, %v5163, %v5162
    %v5165 = vperm.slane %v4877, %v730
    %v5166 = vperm.slane %v4880, %v5020
    %v5167 = vsel %vm5022, %v5166, %v5165
    %v5168 = vperm.slane %v4883, %v5024
    %v5169 = vsel %vm5026, %v5168, %v5167
    %v5170 = vperm.slane %v4886, %v5028
    %v5171 = vsel %vm5030, %v5170, %v5169
    %v5172 = vperm.slane %v4889, %v730
    %v5173 = vperm.slane %v4892, %v5020
    %v5174 = vsel %vm5022, %v5173, %v5172
    %v5175 = vperm.slane %v4895, %v5024
    %v5176 = vsel %vm5026, %v5175, %v5174
    %v5177 = vperm.slane %v4898, %v5028
    %v5178 = vsel %vm5030, %v5177, %v5176
    %v5179 = vperm.slane %v4901, %v730
    %v5180 = vperm.slane %v4904, %v5020
    %v5181 = vsel %vm5022, %v5180, %v5179
    %v5182 = vperm.slane %v4907, %v5024
    %v5183 = vsel %vm5026, %v5182, %v5181
    %v5184 = vperm.slane %v4910, %v5028
    %v5185 = vsel %vm5030, %v5184, %v5183
    %v5186 = vperm.slane %v4913, %v730
    %v5187 = vperm.slane %v4916, %v5020
    %v5188 = vsel %vm5022, %v5187, %v5186
    %v5189 = vperm.slane %v4919, %v5024
    %v5190 = vsel %vm5026, %v5189, %v5188
    %v5191 = vperm.slane %v4922, %v5028
    %v5192 = vsel %vm5030, %v5191, %v5190
    %v5193 = vperm.slane %v4925, %v730
    %v5194 = vperm.slane %v4928, %v5020
    %v5195 = vsel %vm5022, %v5194, %v5193
    %v5196 = vperm.slane %v4931, %v5024
    %v5197 = vsel %vm5026, %v5196, %v5195
    %v5198 = vperm.slane %v4934, %v5028
    %v5199 = vsel %vm5030, %v5198, %v5197
    %v5200 = vperm.slane %v4937, %v730
    %v5201 = vperm.slane %v4940, %v5020
    %v5202 = vsel %vm5022, %v5201, %v5200
    %v5203 = vperm.slane %v4943, %v5024
    %v5204 = vsel %vm5026, %v5203, %v5202
    %v5205 = vperm.slane %v4946, %v5028
    %v5206 = vsel %vm5030, %v5205, %v5204
    %v5207 = vperm.slane %v4949, %v730
    %v5208 = vperm.slane %v4952, %v5020
    %v5209 = vsel %vm5022, %v5208, %v5207
    %v5210 = vperm.slane %v4955, %v5024
    %v5211 = vsel %vm5026, %v5210, %v5209
    %v5212 = vperm.slane %v4958, %v5028
    %v5213 = vsel %vm5030, %v5212, %v5211
    %v5214 = vperm.slane %v4961, %v730
    %v5215 = vperm.slane %v4964, %v5020
    %v5216 = vsel %vm5022, %v5215, %v5214
    %v5217 = vperm.slane %v4967, %v5024
    %v5218 = vsel %vm5026, %v5217, %v5216
    %v5219 = vperm.slane %v4970, %v5028
    %v5220 = vsel %vm5030, %v5219, %v5218
    %v5221 = vperm.slane %v4973, %v730
    %v5222 = vperm.slane %v4976, %v5020
    %v5223 = vsel %vm5022, %v5222, %v5221
    %v5224 = vperm.slane %v4979, %v5024
    %v5225 = vsel %vm5026, %v5224, %v5223
    %v5226 = vperm.slane %v4982, %v5028
    %v5227 = vsel %vm5030, %v5226, %v5225
    %v5228 = vperm.slane %v4985, %v730
    %v5229 = vperm.slane %v4988, %v5020
    %v5230 = vsel %vm5022, %v5229, %v5228
    %v5231 = vperm.slane %v4991, %v5024
    %v5232 = vsel %vm5026, %v5231, %v5230
    %v5233 = vperm.slane %v4994, %v5028
    %v5234 = vsel %vm5030, %v5233, %v5232
    %v5235 = vperm.slane %v4997, %v730
    %v5236 = vperm.slane %v5000, %v5020
    %v5237 = vsel %vm5022, %v5236, %v5235
    %v5238 = vperm.slane %v5003, %v5024
    %v5239 = vsel %vm5026, %v5238, %v5237
    %v5240 = vperm.slane %v5006, %v5028
    %v5241 = vsel %vm5030, %v5240, %v5239
    %v5242 = vperm.slane %v5009, %v730
    %v5243 = vperm.slane %v5012, %v5020
    %v5244 = vsel %vm5022, %v5243, %v5242
    %v5245 = vperm.slane %v5015, %v5024
    %v5246 = vsel %vm5026, %v5245, %v5244
    %v5247 = vperm.slane %v5018, %v5028
    %v5248 = vsel %vm5030, %v5247, %v5246
    %v5249 = vsel %vm763, %v5038, %v5031
    %v5250 = vsel %vm765, %v5045, %v5249
    %v5251 = vsel %vm767, %v5052, %v5250
    %v5252 = vsel %vm769, %v5059, %v5251
    %v5253 = vsel %vm771, %v5066, %v5252
    %v5254 = vsel %vm773, %v5073, %v5253
    %v5255 = vsel %vm775, %v5080, %v5254
    %v5256 = vsel %vm763, %v5094, %v5087
    %v5257 = vsel %vm765, %v5101, %v5256
    %v5258 = vsel %vm767, %v5108, %v5257
    %v5259 = vsel %vm769, %v5115, %v5258
    %v5260 = vsel %vm771, %v5122, %v5259
    %v5261 = vsel %vm773, %v5129, %v5260
    %v5262 = vsel %vm775, %v5136, %v5261
    %v5263 = vsel %vm763, %v5150, %v5143
    %v5264 = vsel %vm765, %v5157, %v5263
    %v5265 = vsel %vm767, %v5164, %v5264
    %v5266 = vsel %vm769, %v5171, %v5265
    %v5267 = vsel %vm771, %v5178, %v5266
    %v5268 = vsel %vm773, %v5185, %v5267
    %v5269 = vsel %vm775, %v5192, %v5268
    %v5270 = vsel %vm763, %v5206, %v5199
    %v5271 = vsel %vm765, %v5213, %v5270
    %v5272 = vsel %vm767, %v5220, %v5271
    %v5273 = vsel %vm769, %v5227, %v5272
    %v5274 = vsel %vm771, %v5234, %v5273
    %v5275 = vsel %vm773, %v5241, %v5274
    %v5276 = vsel %vm775, %v5248, %v5275
    %v5281 = vadd.f32 %v4503, %v5255
    %v5282 = vadd.f32 %v4504, %v5262
    %v5283 = vadd.f32 %v4505, %v5269
    %v5284 = vadd.f32 %v4506, %v5276
    %v5286 = vsel %vm272, %v5281, 0
    %v5289 = vsel %vm272, %v5282, 0
    %v5292 = vsel %vm272, %v5283, 0
    %v5295 = vsel %vm272, %v5284, 0
    %5297 = vmatpush.msra.mxu0 0.0
    %5298 = vmatpush.msra.mxu0 0.0
    %5299 = vmatpush.msra.mxu0 0.0
    %5300 = vmatpush.msra.mxu0 0.0
    %5301 = vmatpush.msra.mxu0 0.0
    %5302 = vmatpush.msra.mxu0 0.0
    %5303 = vmatpush.msra.mxu0 0.0
    %5304 = vmatpush.msra.mxu0 0.0
    %5305 = vmatpush.msra.mxu0 0.0
    %5306 = vmatpush.msra.mxu0 0.0
    %5307 = vmatpush.msra.mxu0 0.0
    %5308 = vmatpush.msra.mxu0 0.0
    %5309 = vmatpush.msra.mxu0 %v267
    %5310 = vmatpush.msra.mxu0 %v265
    %5311 = vmatpush.msra.mxu0 %v263
    %5312 = vmatpush.msra.mxu0 %v261
    %5313 = vmatmul.f32.gmra.mxu0 %v5286
    %v5314 = vpop.f32.mrf.mxu0
    %v5315 = vadd.f32 %v120, %v5314
    %5316 = vmatmul.f32.gmra.mxu0 %v5289
    %v5317 = vpop.f32.mrf.mxu0
    %v5318 = vadd.f32 %v123, %v5317
    %5319 = vmatmul.f32.gmra.mxu0 %v5292
    %v5320 = vpop.f32.mrf.mxu0
    %v5321 = vadd.f32 %v126, %v5320
    %5322 = vmatmul.f32.gmra.mxu0 %v5295
    %v5323 = vpop.f32.mrf.mxu0
    %v5324 = vadd.f32 %v129, %v5323
    %5325 = vdwg.mxu0
    %v5327 = vperm.slane %v315, 0
    %v5328 = vperm.slane %v315, 1
    %5329 = vrot.lane.b32.xlu0 %v5327, 64
    %v5330 = vpop.permute.xlu0 %5329
    %5331 = vrot.lane.b32.xlu0 %v5328, 64
    %v5332 = vpop.permute.xlu0 %5331
    %v5333 = vsel %vm511, %v5330, %v5332
    %v5335 = vadd.f32 %v5315, %v5333
    %v5336 = vadd.f32 %v5318, %v5333
    %v5337 = vadd.f32 %v5321, %v5333
    %v5338 = vadd.f32 %v5324, %v5333
    %v5339 = vsub.f32 1.0, %v1363
    %v5340 = vsub.f32 1.0, %v1364
    %v5341 = vsub.f32 1.0, %v1365
    %v5342 = vsub.f32 1.0, %v1366
    %v5347 = vperm.slane %v5339, 0
    %v5348 = vperm.slane %v5339, 1
    %v5349 = vperm.slane %v5339, 2
    %v5350 = vperm.slane %v5339, 3
    %v5351 = vperm.slane %v5339, 4
    %v5352 = vperm.slane %v5339, 5
    %v5353 = vperm.slane %v5339, 6
    %v5354 = vperm.slane %v5339, 7
    %v5355 = vperm.slane %v5340, 0
    %v5356 = vperm.slane %v5340, 1
    %v5357 = vperm.slane %v5340, 2
    %v5358 = vperm.slane %v5340, 3
    %v5359 = vperm.slane %v5340, 4
    %v5360 = vperm.slane %v5340, 5
    %v5361 = vperm.slane %v5340, 6
    %v5362 = vperm.slane %v5340, 7
    %v5363 = vperm.slane %v5341, 0
    %v5364 = vperm.slane %v5341, 1
    %v5365 = vperm.slane %v5341, 2
    %v5366 = vperm.slane %v5341, 3
    %v5367 = vperm.slane %v5341, 4
    %v5368 = vperm.slane %v5341, 5
    %v5369 = vperm.slane %v5341, 6
    %v5370 = vperm.slane %v5341, 7
    %v5371 = vperm.slane %v5342, 0
    %v5372 = vperm.slane %v5342, 1
    %v5373 = vperm.slane %v5342, 2
    %v5374 = vperm.slane %v5342, 3
    %v5375 = vperm.slane %v5342, 4
    %v5376 = vperm.slane %v5342, 5
    %v5377 = vperm.slane %v5342, 6
    %v5378 = vperm.slane %v5342, 7
    %v5411 = vmul.f32 %v1331, %v5347
    %v5412 = vmul.f32 %v1332, %v5348
    %v5413 = vmul.f32 %v1333, %v5349
    %v5414 = vmul.f32 %v1334, %v5350
    %v5415 = vmul.f32 %v1335, %v5351
    %v5416 = vmul.f32 %v1336, %v5352
    %v5417 = vmul.f32 %v1337, %v5353
    %v5418 = vmul.f32 %v1338, %v5354
    %v5419 = vmul.f32 %v1339, %v5355
    %v5420 = vmul.f32 %v1340, %v5356
    %v5421 = vmul.f32 %v1341, %v5357
    %v5422 = vmul.f32 %v1342, %v5358
    %v5423 = vmul.f32 %v1343, %v5359
    %v5424 = vmul.f32 %v1344, %v5360
    %v5425 = vmul.f32 %v1345, %v5361
    %v5426 = vmul.f32 %v1346, %v5362
    %v5427 = vmul.f32 %v1347, %v5363
    %v5428 = vmul.f32 %v1348, %v5364
    %v5429 = vmul.f32 %v1349, %v5365
    %v5430 = vmul.f32 %v1350, %v5366
    %v5431 = vmul.f32 %v1351, %v5367
    %v5432 = vmul.f32 %v1352, %v5368
    %v5433 = vmul.f32 %v1353, %v5369
    %v5434 = vmul.f32 %v1354, %v5370
    %v5435 = vmul.f32 %v1355, %v5371
    %v5436 = vmul.f32 %v1356, %v5372
    %v5437 = vmul.f32 %v1357, %v5373
    %v5438 = vmul.f32 %v1358, %v5374
    %v5439 = vmul.f32 %v1359, %v5375
    %v5440 = vmul.f32 %v1360, %v5376
    %v5441 = vmul.f32 %v1361, %v5377
    %v5442 = vmul.f32 %v1362, %v5378
    %5475 = vset.pattern.permute.xlu0 0
    %5476 = vperm.xlu0 %5475, %v5411
    %v5477 = vpop.permute.xlu0 %5476
    %5478 = vset.pattern.permute.xlu0 0
    %5479 = vperm.xlu0 %5478, %v5412
    %v5480 = vpop.permute.xlu0 %5479
    %5481 = vset.pattern.permute.xlu0 0
    %5482 = vperm.xlu0 %5481, %v5413
    %v5483 = vpop.permute.xlu0 %5482
    %5484 = vset.pattern.permute.xlu0 0
    %5485 = vperm.xlu0 %5484, %v5414
    %v5486 = vpop.permute.xlu0 %5485
    %5487 = vset.pattern.permute.xlu0 0
    %5488 = vperm.xlu0 %5487, %v5415
    %v5489 = vpop.permute.xlu0 %5488
    %5490 = vset.pattern.permute.xlu0 0
    %5491 = vperm.xlu0 %5490, %v5416
    %v5492 = vpop.permute.xlu0 %5491
    %5493 = vset.pattern.permute.xlu0 0
    %5494 = vperm.xlu0 %5493, %v5417
    %v5495 = vpop.permute.xlu0 %5494
    %5496 = vset.pattern.permute.xlu0 0
    %5497 = vperm.xlu0 %5496, %v5418
    %v5498 = vpop.permute.xlu0 %5497
    %5499 = vset.pattern.permute.xlu0 0
    %5500 = vperm.xlu0 %5499, %v5419
    %v5501 = vpop.permute.xlu0 %5500
    %5502 = vset.pattern.permute.xlu0 0
    %5503 = vperm.xlu0 %5502, %v5420
    %v5504 = vpop.permute.xlu0 %5503
    %5505 = vset.pattern.permute.xlu0 0
    %5506 = vperm.xlu0 %5505, %v5421
    %v5507 = vpop.permute.xlu0 %5506
    %5508 = vset.pattern.permute.xlu0 0
    %5509 = vperm.xlu0 %5508, %v5422
    %v5510 = vpop.permute.xlu0 %5509
    %5511 = vset.pattern.permute.xlu0 0
    %5512 = vperm.xlu0 %5511, %v5423
    %v5513 = vpop.permute.xlu0 %5512
    %5514 = vset.pattern.permute.xlu0 0
    %5515 = vperm.xlu0 %5514, %v5424
    %v5516 = vpop.permute.xlu0 %5515
    %5517 = vset.pattern.permute.xlu0 0
    %5518 = vperm.xlu0 %5517, %v5425
    %v5519 = vpop.permute.xlu0 %5518
    %5520 = vset.pattern.permute.xlu0 0
    %5521 = vperm.xlu0 %5520, %v5426
    %v5522 = vpop.permute.xlu0 %5521
    %5523 = vset.pattern.permute.xlu0 0
    %5524 = vperm.xlu0 %5523, %v5427
    %v5525 = vpop.permute.xlu0 %5524
    %5526 = vset.pattern.permute.xlu0 0
    %5527 = vperm.xlu0 %5526, %v5428
    %v5528 = vpop.permute.xlu0 %5527
    %5529 = vset.pattern.permute.xlu0 0
    %5530 = vperm.xlu0 %5529, %v5429
    %v5531 = vpop.permute.xlu0 %5530
    %5532 = vset.pattern.permute.xlu0 0
    %5533 = vperm.xlu0 %5532, %v5430
    %v5534 = vpop.permute.xlu0 %5533
    %5535 = vset.pattern.permute.xlu0 0
    %5536 = vperm.xlu0 %5535, %v5431
    %v5537 = vpop.permute.xlu0 %5536
    %5538 = vset.pattern.permute.xlu0 0
    %5539 = vperm.xlu0 %5538, %v5432
    %v5540 = vpop.permute.xlu0 %5539
    %5541 = vset.pattern.permute.xlu0 0
    %5542 = vperm.xlu0 %5541, %v5433
    %v5543 = vpop.permute.xlu0 %5542
    %5544 = vset.pattern.permute.xlu0 0
    %5545 = vperm.xlu0 %5544, %v5434
    %v5546 = vpop.permute.xlu0 %5545
    %5547 = vset.pattern.permute.xlu0 0
    %5548 = vperm.xlu0 %5547, %v5435
    %v5549 = vpop.permute.xlu0 %5548
    %5550 = vset.pattern.permute.xlu0 0
    %5551 = vperm.xlu0 %5550, %v5436
    %v5552 = vpop.permute.xlu0 %5551
    %5553 = vset.pattern.permute.xlu0 0
    %5554 = vperm.xlu0 %5553, %v5437
    %v5555 = vpop.permute.xlu0 %5554
    %5556 = vset.pattern.permute.xlu0 0
    %5557 = vperm.xlu0 %5556, %v5438
    %v5558 = vpop.permute.xlu0 %5557
    %5559 = vset.pattern.permute.xlu0 0
    %5560 = vperm.xlu0 %5559, %v5439
    %v5561 = vpop.permute.xlu0 %5560
    %5562 = vset.pattern.permute.xlu0 0
    %5563 = vperm.xlu0 %5562, %v5440
    %v5564 = vpop.permute.xlu0 %5563
    %5565 = vset.pattern.permute.xlu0 0
    %5566 = vperm.xlu0 %5565, %v5441
    %v5567 = vpop.permute.xlu0 %5566
    %5568 = vset.pattern.permute.xlu0 0
    %5569 = vperm.xlu0 %5568, %v5442
    %v5570 = vpop.permute.xlu0 %5569
    %v5571 = vperm.slane %v5477, %v730
    %v5572 = vperm.slane %v5480, %v730
    %v5573 = vperm.slane %v5483, %v730
    %v5574 = vperm.slane %v5486, %v730
    %v5575 = vperm.slane %v5489, %v730
    %v5576 = vperm.slane %v5492, %v730
    %v5577 = vperm.slane %v5495, %v730
    %v5578 = vperm.slane %v5498, %v730
    %v5579 = vperm.slane %v5501, %v730
    %v5580 = vperm.slane %v5504, %v730
    %v5581 = vperm.slane %v5507, %v730
    %v5582 = vperm.slane %v5510, %v730
    %v5583 = vperm.slane %v5513, %v730
    %v5584 = vperm.slane %v5516, %v730
    %v5585 = vperm.slane %v5519, %v730
    %v5586 = vperm.slane %v5522, %v730
    %v5587 = vperm.slane %v5525, %v730
    %v5588 = vperm.slane %v5528, %v730
    %v5589 = vperm.slane %v5531, %v730
    %v5590 = vperm.slane %v5534, %v730
    %v5591 = vperm.slane %v5537, %v730
    %v5592 = vperm.slane %v5540, %v730
    %v5593 = vperm.slane %v5543, %v730
    %v5594 = vperm.slane %v5546, %v730
    %v5595 = vperm.slane %v5549, %v730
    %v5596 = vperm.slane %v5552, %v730
    %v5597 = vperm.slane %v5555, %v730
    %v5598 = vperm.slane %v5558, %v730
    %v5599 = vperm.slane %v5561, %v730
    %v5600 = vperm.slane %v5564, %v730
    %v5601 = vperm.slane %v5567, %v730
    %v5602 = vperm.slane %v5570, %v730
    %v5603 = vsel %vm763, %v5572, %v5571
    %v5604 = vsel %vm765, %v5573, %v5603
    %v5605 = vsel %vm767, %v5574, %v5604
    %v5606 = vsel %vm769, %v5575, %v5605
    %v5607 = vsel %vm771, %v5576, %v5606
    %v5608 = vsel %vm773, %v5577, %v5607
    %v5609 = vsel %vm775, %v5578, %v5608
    %v5610 = vsel %vm763, %v5580, %v5579
    %v5611 = vsel %vm765, %v5581, %v5610
    %v5612 = vsel %vm767, %v5582, %v5611
    %v5613 = vsel %vm769, %v5583, %v5612
    %v5614 = vsel %vm771, %v5584, %v5613
    %v5615 = vsel %vm773, %v5585, %v5614
    %v5616 = vsel %vm775, %v5586, %v5615
    %v5617 = vsel %vm763, %v5588, %v5587
    %v5618 = vsel %vm765, %v5589, %v5617
    %v5619 = vsel %vm767, %v5590, %v5618
    %v5620 = vsel %vm769, %v5591, %v5619
    %v5621 = vsel %vm771, %v5592, %v5620
    %v5622 = vsel %vm773, %v5593, %v5621
    %v5623 = vsel %vm775, %v5594, %v5622
    %v5624 = vsel %vm763, %v5596, %v5595
    %v5625 = vsel %vm765, %v5597, %v5624
    %v5626 = vsel %vm767, %v5598, %v5625
    %v5627 = vsel %vm769, %v5599, %v5626
    %v5628 = vsel %vm771, %v5600, %v5627
    %v5629 = vsel %vm773, %v5601, %v5628
    %v5630 = vsel %vm775, %v5602, %v5629
    %v5635 = vsel %vm802, %v5609, %v1363
    %v5636 = vsel %vm802, %v5616, %v1364
    %v5637 = vsel %vm802, %v5623, %v1365
    %v5638 = vsel %vm802, %v5630, %v1366
    %vm5639 = vcmask 72704
    %v5640 = vsel %vm5639, %v5635, 0.0
    %v5641 = vsel %vm5639, %v5636, 0.0
    %v5642 = vsel %vm5639, %v5637, 0.0
    %v5643 = vsel %vm5639, %v5638, 0.0
    %5644 = vst [vmem:[#allocation2] sm:$0xff] %v5335
    %5645 = vst [vmem:[#allocation2 + $0x8] sm:$0xff] %v5640
    %5646 = vst [vmem:[#allocation2 + $0x10] sm:$0xff] %v5336
    %5647 = vst [vmem:[#allocation2 + $0x18] sm:$0xff] %v5641
    %5648 = vst [vmem:[#allocation2 + $0x20] sm:$0xff] %v5337
    %5649 = vst [vmem:[#allocation2 + $0x28] sm:$0xff] %v5642
    %5650 = vst [vmem:[#allocation2 + $0x30] sm:$0xff] %v5338
    %5651 = vst [vmem:[#allocation2 + $0x38] sm:$0xff] %v5643
    // Predicated region
    $region22: #{tpu_custom_call.1} parent=1 // pred_check
      _
    $region23: #{tpu_custom_call.1} parent=1 // pred_check_branch
      %5653 = sbr.rel (0) target = $region25
    $region24: #{tpu_custom_call.1} parent=1 // pred_region
      %5655 = vsyncadd [#allocation3], 0
      %s5656 = sshll.u32 [#allocation2], 4
      %s5657 = int_to_ptr.vmem [resolvable:$true] %s5656
      %s5658 = sshll.u32 %s5, 4
      %s5659 = int_to_ptr.hbm [resolvable:$true] %s5658
      %5664 = dma.vmem_to_hbm [thread:$0]  %s5657, 1024, %s5659, [#allocation3], 256, 256, 16
    $region25: #{tpu_custom_call.1} parent=1 // pred_fallthru
      _
    // Predicated region
    $region26: #{tpu_custom_call.1} parent=1 // pred_check
      _
    $region27: #{tpu_custom_call.1} parent=1 // pred_check_branch
      %5666 = sbr.rel (0) target = $region29
    $region28: #{tpu_custom_call.1} parent=1 // pred_region
      %5668 = dma.done [#allocation3], 1024
    $region29: #{tpu_custom_call.1} parent=1 // pred_fallthru
      _
    %5669 = vsyncpa [#allocation3], 1

</llo_original>
